<compile_context>
chip_gen: v6e
topology: v6e:2x2x1
jax: 0.10.0
libtpu: 0.0.40
codegen_flags: <defaults>
</compile_context>

<pallas_src>
import random
from functools import partial

import jax
import jax.numpy as jnp
from jax import lax
from jax.experimental import pallas as pl
from jax.experimental.pallas import tpu as pltpu


# ---------------------------------------------------------------------------
# LSTM cell math (values in, values out; runs inside the fused kernel)
# ---------------------------------------------------------------------------
def _lstm_step(xh_bf16, c_prev, w_val, b_val, hid):
    """One LSTM cell step. xh_bf16 = concat([x, h_prev]) in bf16,
    w_val = stacked [W_ih; W_hh] -> (in+H, 4H) bf16, b_val = (B, 4H) f32."""
    gates = jnp.dot(xh_bf16, w_val, preferred_element_type=jnp.float32) + b_val
    if_gates = jax.nn.sigmoid(gates[:, 0:2 * hid])          # fused i,f sigmoid
    i = if_gates[:, 0:hid]
    f = if_gates[:, hid:2 * hid]
    g = jnp.tanh(gates[:, 2 * hid:3 * hid])
    o = jax.nn.sigmoid(gates[:, 3 * hid:4 * hid])
    c_new = f * c_prev + i * g
    h_new = o * jnp.tanh(c_new)
    return h_new, c_new


# ---------------------------------------------------------------------------
# Fused encoder+decoder kernel (single invocation, fully unrolled time loops)
# ---------------------------------------------------------------------------
def _make_seq2seq_kernel(*, n_layers, hid, input_dim, output_dim, vocab_pad,
                         b_pad, src_len, trg_len):
    def kernel(*refs):
        src_ref = refs[0]                       # (B_pad, src_len) int32 VMEM
        trg_ref = refs[1]                       # (B_pad, trg_len) int32 VMEM
        tf_ref = refs[2]                        # (trg_len,) int32 SMEM
        enc_emb_ref = refs[3]                   # (input_dim, emb) bf16
        enc_wb = refs[4:4 + 2 * n_layers]       # per layer: W (in+H,4H), b (1,4H)
        dec_emb_ref = refs[4 + 2 * n_layers]    # (output_dim, emb) bf16
        dec_wb = refs[5 + 2 * n_layers:5 + 4 * n_layers]
        fcw_ref = refs[5 + 4 * n_layers]        # (H, vocab_pad) bf16
        fcb_ref = refs[6 + 4 * n_layers]        # (1, vocab_pad) f32
        out_ref = refs[7 + 4 * n_layers]        # (trg_len, B_pad, vocab_pad) f32

        # Hoisted loads / broadcasts: once per kernel call, reused every step.
        enc_w = [enc_wb[2 * l][...] for l in range(n_layers)]
        enc_b = [jnp.broadcast_to(enc_wb[2 * l + 1][...], (b_pad, 4 * hid))
                 for l in range(n_layers)]
        dec_w = [dec_wb[2 * l][...] for l in range(n_layers)]
        dec_b = [jnp.broadcast_to(dec_wb[2 * l + 1][...], (b_pad, 4 * hid))
                 for l in range(n_layers)]
        enc_emb = enc_emb_ref[...]
        dec_emb = dec_emb_ref[...]
        fc_w = fcw_ref[...]
        fc_b = jnp.broadcast_to(fcb_ref[...], (b_pad, vocab_pad))

        # outputs[0] == 0 (PyTorch reference)
        out_ref[0] = jnp.zeros((b_pad, vocab_pad), jnp.float32)

        # ---------------- Encoder (state lives in vregs) ----------------
        h = [jnp.zeros((b_pad, hid), jnp.float32) for _ in range(n_layers)]
        c = [jnp.zeros((b_pad, hid), jnp.float32) for _ in range(n_layers)]
        src_iota = lax.broadcasted_iota(jnp.int32, (b_pad, input_dim), 1)
        for t in range(src_len):
            tok = src_ref[:, t:t + 1]                          # (B,1) int32
            one_hot = (src_iota == tok).astype(jnp.bfloat16)   # (B,V_in)
            x = jnp.dot(one_hot, enc_emb, preferred_element_type=jnp.float32)
            for l in range(n_layers):
                xh = jnp.concatenate([x, h[l]], axis=-1).astype(jnp.bfloat16)
                h[l], c[l] = _lstm_step(xh, c[l], enc_w[l], enc_b[l], hid)
                x = h[l]

        # ---------------- Decoder (teacher forcing in-kernel) ----------------
        vocab_iota = lax.broadcasted_iota(jnp.int32, (b_pad, output_dim), 1)
        col_iota = lax.broadcasted_iota(jnp.int32, (b_pad, vocab_pad), 1)
        tok = trg_ref[:, 0:1]                                  # input for t=1
        for t in range(1, trg_len):
            one_hot = (vocab_iota == tok).astype(jnp.bfloat16)
            x = jnp.dot(one_hot, dec_emb, preferred_element_type=jnp.float32)
            for l in range(n_layers):
                xh = jnp.concatenate([x, h[l]], axis=-1).astype(jnp.bfloat16)
                h[l], c[l] = _lstm_step(xh, c[l], dec_w[l], dec_b[l], hid)
                x = h[l]

            logits = (jnp.dot(x.astype(jnp.bfloat16), fc_w,
                              preferred_element_type=jnp.float32) + fc_b)
            out_ref[t] = logits                                # lane-dense store

            # First-occurrence argmax over real vocab columns only.
            masked = jnp.where(col_iota < output_dim, logits, -1e30)
            m = jnp.max(masked, axis=-1, keepdims=True)
            top1 = jnp.min(jnp.where(masked == m, col_iota, vocab_pad),
                           axis=-1, keepdims=True)             # (B,1) int32

            teacher_force = tf_ref[t] != 0
            tok = jnp.where(teacher_force, trg_ref[:, t:t + 1],
                            top1).astype(jnp.int32)

    return kernel


# ---------------------------------------------------------------------------
# Jitted forward: one pallas_call, then a slice back to logical shapes.
# ---------------------------------------------------------------------------
@partial(jax.jit, static_argnames=("batch",))
def _forward_jit(src_pad, trg_pad, tf_mask, enc_params, dec_params, *, batch):
    enc_emb, enc_layers = enc_params
    dec_emb, dec_layers, fc_w, fc_b = dec_params
    src_len, b_pad = src_pad.shape
    trg_len, _ = trg_pad.shape
    n_layers = len(enc_layers)
    hid = enc_layers[0][0].shape[1] // 4
    input_dim = enc_emb.shape[0]
    output_dim = dec_emb.shape[0]
    vocab_pad = fc_w.shape[1]

    src_t = jnp.transpose(src_pad)                 # (B_pad, src_len)
    trg_t = jnp.transpose(trg_pad)                 # (B_pad, trg_len)

    operands = [src_t, trg_t, tf_mask, enc_emb]
    for (w, b) in enc_layers:
        operands.extend([w, b])
    operands.append(dec_emb)
    for (w, b) in dec_layers:
        operands.extend([w, b])
    operands.extend([fc_w, fc_b])

    vmem_spec = pl.BlockSpec(memory_space=pltpu.MemorySpace.VMEM)
    smem_spec = pl.BlockSpec(memory_space=pltpu.MemorySpace.SMEM)
    in_specs = [vmem_spec, vmem_spec, smem_spec] + \
               [vmem_spec] * (len(operands) - 3)

    out = pl.pallas_call(
        _make_seq2seq_kernel(n_layers=n_layers, hid=hid, input_dim=input_dim,
                             output_dim=output_dim, vocab_pad=vocab_pad,
                             b_pad=b_pad, src_len=src_len, trg_len=trg_len),
        out_shape=jax.ShapeDtypeStruct((trg_len, b_pad, vocab_pad), jnp.float32),
        in_specs=in_specs,
        out_specs=vmem_spec,
    )(*operands)

    return out[:, :batch, :output_dim]             # (trg_len, B, vocab)


def seq2seq_forward(src, trg, enc_params, dec_params,
                    teacher_forcing_ratio=0.5, tf_seed=0):
    src_len, batch = src.shape
    trg_len, _ = trg.shape

    # Teacher-forcing decisions precomputed host-side (deterministic stand-in
    # for torch's per-step `random.random() < ratio`); index t in [1, trg_len).
    rng = random.Random(tf_seed)
    tf_host = [0] + [1 if rng.random() < teacher_forcing_ratio else 0
                     for _ in range(trg_len - 1)]
    tf_mask = jnp.array(tf_host, dtype=jnp.int32)

    # Pad batch to the f32 sublane count (8).
    b_pad = max(8, ((batch + 7) // 8) * 8)
    src_pad = jnp.pad(src, ((0, 0), (0, b_pad - batch)))
    trg_pad = jnp.pad(trg, ((0, 0), (0, b_pad - batch)))

    return _forward_jit(src_pad, trg_pad, tf_mask, enc_params, dec_params,
                        batch=batch)


# ---------------------------------------------------------------------------
# Parameter construction (deterministic, synthetic)
# ---------------------------------------------------------------------------
def init_lstm_layer(key, in_dim, hid_dim):
    k1, k2, k3 = jax.random.split(key, 3)
    s = 1.0 / (hid_dim ** 0.5)
    wih = jax.random.uniform(k1, (in_dim, 4 * hid_dim), jnp.float32, -s, s)
    whh = jax.random.uniform(k2, (hid_dim, 4 * hid_dim), jnp.float32, -s, s)
    b = jax.random.uniform(k3, (1, 4 * hid_dim), jnp.float32, -s, s)
    w = jnp.concatenate([wih, whh], axis=0).astype(jnp.bfloat16)  # [W_ih; W_hh]
    return w, b


def init_encoder(key, input_dim, emb_dim, hid_dim, n_layers):
    keys = jax.random.split(key, n_layers + 1)
    emb = (jax.random.normal(keys[0], (input_dim, emb_dim), jnp.float32)
           * 0.1).astype(jnp.bfloat16)
    layers = []
    in_dim = emb_dim
    for l in range(n_layers):
        layers.append(init_lstm_layer(keys[l + 1], in_dim, hid_dim))
        in_dim = hid_dim
    return emb, layers


def init_decoder(key, output_dim, emb_dim, hid_dim, n_layers, vocab_pad=128):
    keys = jax.random.split(key, n_layers + 3)
    emb = (jax.random.normal(keys[0], (output_dim, emb_dim), jnp.float32)
           * 0.1).astype(jnp.bfloat16)
    layers = []
    in_dim = emb_dim
    for l in range(n_layers):
        layers.append(init_lstm_layer(keys[l + 1], in_dim, hid_dim))
        in_dim = hid_dim
    s = 1.0 / (hid_dim ** 0.5)
    vocab_pad = max(vocab_pad, ((output_dim + 127) // 128) * 128)
    fc_w = jax.random.uniform(keys[-2], (hid_dim, output_dim), jnp.float32, -s, s)
    fc_b = jax.random.uniform(keys[-1], (1, output_dim), jnp.float32, -s, s)
    # Lane-dense padded FC; pad columns are ZERO (kernel masks them for argmax).
    fc_w = jnp.pad(fc_w, ((0, 0), (0, vocab_pad - output_dim))).astype(jnp.bfloat16)
    fc_b = jnp.pad(fc_b, ((0, 0), (0, vocab_pad - output_dim)))
    return emb, layers, fc_w, fc_b


# ---------------------------------------------------------------------------
if __name__ == "__main__":
    INPUT_DIM = 16
    OUTPUT_DIM = 16
    EMB_DIM = 32
    HID_DIM = 32
    N_LAYERS = 2
    SRC_LEN = 8
    TRG_LEN = 8
    BATCH = 2

    key = jax.random.PRNGKey(0)
    k_enc, k_dec, k_src, k_trg = jax.random.split(key, 4)

    enc_params = init_encoder(k_enc, INPUT_DIM, EMB_DIM, HID_DIM, N_LAYERS)
    dec_params = init_decoder(k_dec, OUTPUT_DIM, EMB_DIM, HID_DIM, N_LAYERS)

    src = jax.random.randint(k_src, (SRC_LEN, BATCH), 0, INPUT_DIM, jnp.int32)
    trg = jax.random.randint(k_trg, (TRG_LEN, BATCH), 0, OUTPUT_DIM, jnp.int32)

    outputs = seq2seq_forward(src, trg, enc_params, dec_params,
                              teacher_forcing_ratio=0.5, tf_seed=0)
    outputs = jax.block_until_ready(outputs)
    assert outputs.shape == (TRG_LEN, BATCH, OUTPUT_DIM)
    assert bool(jnp.all(outputs[0] == 0.0))
    assert bool(jnp.all(jnp.isfinite(outputs)))
    print("KERNEL_OK")
</pallas_src>

<mosaic_0001>
module attributes {stable_mosaic.version = 11 : i64} {
  func.func @kernel(%arg0: memref<8x8xi32, #tpu.memory_space<vmem>>, %arg1: memref<8x8xi32, #tpu.memory_space<vmem>>, %arg2: memref<8xi32, #tpu.memory_space<smem>>, %arg3: memref<16x32xbf16, #tpu.memory_space<vmem>>, %arg4: memref<64x128xbf16, #tpu.memory_space<vmem>>, %arg5: memref<1x128xf32, #tpu.memory_space<vmem>>, %arg6: memref<64x128xbf16, #tpu.memory_space<vmem>>, %arg7: memref<1x128xf32, #tpu.memory_space<vmem>>, %arg8: memref<16x32xbf16, #tpu.memory_space<vmem>>, %arg9: memref<64x128xbf16, #tpu.memory_space<vmem>>, %arg10: memref<1x128xf32, #tpu.memory_space<vmem>>, %arg11: memref<64x128xbf16, #tpu.memory_space<vmem>>, %arg12: memref<1x128xf32, #tpu.memory_space<vmem>>, %arg13: memref<32x128xbf16, #tpu.memory_space<vmem>>, %arg14: memref<1x128xf32, #tpu.memory_space<vmem>>, %arg15: memref<8x8x128xf32, #tpu.memory_space<vmem>>) attributes {dimension_semantics = [], scalar_prefetch = 0 : i64, scratch_operands = 0 : i64, tpu.core_type = #tpu.core_type<tc>} {
    %c0 = arith.constant 0 : index
    %c0_0 = arith.constant 0 : index
    %0 = vector.load %arg4[%c0, %c0_0] : memref<64x128xbf16, #tpu.memory_space<vmem>>, vector<64x128xbf16>
    %c0_1 = arith.constant 0 : index
    %c0_2 = arith.constant 0 : index
    %1 = vector.load %arg6[%c0_1, %c0_2] : memref<64x128xbf16, #tpu.memory_space<vmem>>, vector<64x128xbf16>
    %c0_3 = arith.constant 0 : index
    %c0_4 = arith.constant 0 : index
    %2 = vector.load %arg5[%c0_3, %c0_4] : memref<1x128xf32, #tpu.memory_space<vmem>>, vector<1x128xf32>
    %3 = vector.shape_cast %2 : vector<1x128xf32> to vector<1x128xf32>
    %4 = vector.broadcast %3 : vector<1x128xf32> to vector<8x128xf32>
    %c0_5 = arith.constant 0 : index
    %c0_6 = arith.constant 0 : index
    %5 = vector.load %arg7[%c0_5, %c0_6] : memref<1x128xf32, #tpu.memory_space<vmem>>, vector<1x128xf32>
    %6 = vector.shape_cast %5 : vector<1x128xf32> to vector<1x128xf32>
    %7 = vector.broadcast %6 : vector<1x128xf32> to vector<8x128xf32>
    %c0_7 = arith.constant 0 : index
    %c0_8 = arith.constant 0 : index
    %8 = vector.load %arg9[%c0_7, %c0_8] : memref<64x128xbf16, #tpu.memory_space<vmem>>, vector<64x128xbf16>
    %c0_9 = arith.constant 0 : index
    %c0_10 = arith.constant 0 : index
    %9 = vector.load %arg11[%c0_9, %c0_10] : memref<64x128xbf16, #tpu.memory_space<vmem>>, vector<64x128xbf16>
    %c0_11 = arith.constant 0 : index
    %c0_12 = arith.constant 0 : index
    %10 = vector.load %arg10[%c0_11, %c0_12] : memref<1x128xf32, #tpu.memory_space<vmem>>, vector<1x128xf32>
    %11 = vector.shape_cast %10 : vector<1x128xf32> to vector<1x128xf32>
    %12 = vector.broadcast %11 : vector<1x128xf32> to vector<8x128xf32>
    %c0_13 = arith.constant 0 : index
    %c0_14 = arith.constant 0 : index
    %13 = vector.load %arg12[%c0_13, %c0_14] : memref<1x128xf32, #tpu.memory_space<vmem>>, vector<1x128xf32>
    %14 = vector.shape_cast %13 : vector<1x128xf32> to vector<1x128xf32>
    %15 = vector.broadcast %14 : vector<1x128xf32> to vector<8x128xf32>
    %c0_15 = arith.constant 0 : index
    %c0_16 = arith.constant 0 : index
    %16 = vector.load %arg3[%c0_15, %c0_16] : memref<16x32xbf16, #tpu.memory_space<vmem>>, vector<16x32xbf16>
    %c0_17 = arith.constant 0 : index
    %c0_18 = arith.constant 0 : index
    %17 = vector.load %arg8[%c0_17, %c0_18] : memref<16x32xbf16, #tpu.memory_space<vmem>>, vector<16x32xbf16>
    %c0_19 = arith.constant 0 : index
    %c0_20 = arith.constant 0 : index
    %18 = vector.load %arg13[%c0_19, %c0_20] : memref<32x128xbf16, #tpu.memory_space<vmem>>, vector<32x128xbf16>
    %c0_21 = arith.constant 0 : index
    %c0_22 = arith.constant 0 : index
    %19 = vector.load %arg14[%c0_21, %c0_22] : memref<1x128xf32, #tpu.memory_space<vmem>>, vector<1x128xf32>
    %20 = vector.shape_cast %19 : vector<1x128xf32> to vector<1x128xf32>
    %21 = vector.broadcast %20 : vector<1x128xf32> to vector<8x128xf32>
    %cst = arith.constant 0.000000e+00 : f32
    %22 = vector.broadcast %cst : f32 to vector<8x128xf32>
    %c0_23 = arith.constant 0 : index
    %c0_24 = arith.constant 0 : index
    %c0_25 = arith.constant 0 : index
    %23 = vector.load %arg15[%c0_23, %c0_24, %c0_25] : memref<8x8x128xf32, #tpu.memory_space<vmem>>, vector<1x8x128xf32>
    %24 = vector.shape_cast %23 : vector<1x8x128xf32> to vector<8x128xf32>
    %25 = vector.shape_cast %22 : vector<8x128xf32> to vector<1x8x128xf32>
    tpu.vector_store %arg15[%c0_23, %c0_24, %c0_25], %25 {strides = array<i32>} : memref<8x8x128xf32, #tpu.memory_space<vmem>>, vector<1x8x128xf32>,
    %cst_26 = arith.constant 0.000000e+00 : f32
    %26 = vector.broadcast %cst_26 : f32 to vector<8x32xf32>
    %cst_27 = arith.constant 0.000000e+00 : f32
    %27 = vector.broadcast %cst_27 : f32 to vector<8x32xf32>
    %cst_28 = arith.constant 0.000000e+00 : f32
    %28 = vector.broadcast %cst_28 : f32 to vector<8x32xf32>
    %cst_29 = arith.constant 0.000000e+00 : f32
    %29 = vector.broadcast %cst_29 : f32 to vector<8x32xf32>
    %30 = tpu.iota {dimensions = array<i32: 1>} : vector<8x16xi32>
    %c0_30 = arith.constant 0 : index
    %c0_31 = arith.constant 0 : index
    %31 = vector.load %arg0[%c0_30, %c0_31] : memref<8x8xi32, #tpu.memory_space<vmem>>, vector<8x1xi32>
    %32 = vector.broadcast %31 : vector<8x1xi32> to vector<8x16xi32>
    %33 = arith.cmpi eq, %30, %32 : vector<8x16xi32>
    %34 = arith.extui %33 : vector<8x16xi1> to vector<8x16xi32>
    %35 = arith.sitofp %34 : vector<8x16xi32> to vector<8x16xf32>
    %36 = arith.truncf %35 : vector<8x16xf32> to vector<8x16xbf16>
    %cst_32 = arith.constant dense<0.000000e+00> : vector<8x32xf32>
    %37 = tpu.matmul %36, %16, %cst_32 {dimension_numbers = #tpu.dot_dimension_numbers<[1], [0], [0], [1], [0, 0, 1, 1], [], []>} : vector<8x16xbf16>, vector<16x32xbf16>, vector<8x32xf32> -> vector<8x32xf32>
    %38 = tpu.concatenate %37, %26 in 1 : vector<8x32xf32>, vector<8x32xf32> -> vector<8x64xf32>
    %39 = arith.truncf %38 : vector<8x64xf32> to vector<8x64xbf16>
    %cst_33 = arith.constant dense<0.000000e+00> : vector<8x128xf32>
    %40 = tpu.matmul %39, %0, %cst_33 {dimension_numbers = #tpu.dot_dimension_numbers<[1], [0], [0], [1], [0, 0, 1, 1], [], []>} : vector<8x64xbf16>, vector<64x128xbf16>, vector<8x128xf32> -> vector<8x128xf32>
    %41 = arith.addf %40, %4 : vector<8x128xf32>
    %42 = vector.extract_strided_slice %41 {offsets = [0, 0], sizes = [8, 64], strides = [1, 1]} : vector<8x128xf32> to vector<8x64xf32>
    %43 = arith.negf %42 : vector<8x64xf32>
    %44 = math.exp %43 : vector<8x64xf32>
    %cst_34 = arith.constant 1.000000e+00 : f32
    %45 = vector.broadcast %cst_34 : f32 to vector<8x64xf32>
    %46 = arith.addf %45, %44 : vector<8x64xf32>
    %47 = arith.divf %45, %46 : vector<8x64xf32>
    %48 = vector.extract_strided_slice %47 {offsets = [0, 0], sizes = [8, 32], strides = [1, 1]} : vector<8x64xf32> to vector<8x32xf32>
    %49 = vector.extract_strided_slice %47 {offsets = [0, 32], sizes = [8, 32], strides = [1, 1]} : vector<8x64xf32> to vector<8x32xf32>
    %50 = vector.extract_strided_slice %41 {offsets = [0, 64], sizes = [8, 32], strides = [1, 1]} : vector<8x128xf32> to vector<8x32xf32>
    %51 = math.tanh %50 : vector<8x32xf32>
    %52 = vector.extract_strided_slice %41 {offsets = [0, 96], sizes = [8, 32], strides = [1, 1]} : vector<8x128xf32> to vector<8x32xf32>
    %53 = arith.negf %52 : vector<8x32xf32>
    %54 = math.exp %53 : vector<8x32xf32>
    %cst_35 = arith.constant 1.000000e+00 : f32
    %55 = vector.broadcast %cst_35 : f32 to vector<8x32xf32>
    %56 = arith.addf %55, %54 : vector<8x32xf32>
    %57 = arith.divf %55, %56 : vector<8x32xf32>
    %58 = arith.mulf %49, %28 : vector<8x32xf32>
    %59 = arith.mulf %48, %51 : vector<8x32xf32>
    %60 = arith.addf %58, %59 : vector<8x32xf32>
    %61 = math.tanh %60 : vector<8x32xf32>
    %62 = arith.mulf %57, %61 : vector<8x32xf32>
    %63 = tpu.concatenate %62, %27 in 1 : vector<8x32xf32>, vector<8x32xf32> -> vector<8x64xf32>
    %64 = arith.truncf %63 : vector<8x64xf32> to vector<8x64xbf16>
    %cst_36 = arith.constant dense<0.000000e+00> : vector<8x128xf32>
    %65 = tpu.matmul %64, %1, %cst_36 {dimension_numbers = #tpu.dot_dimension_numbers<[1], [0], [0], [1], [0, 0, 1, 1], [], []>} : vector<8x64xbf16>, vector<64x128xbf16>, vector<8x128xf32> -> vector<8x128xf32>
    %66 = arith.addf %65, %7 : vector<8x128xf32>
    %67 = vector.extract_strided_slice %66 {offsets = [0, 0], sizes = [8, 64], strides = [1, 1]} : vector<8x128xf32> to vector<8x64xf32>
    %68 = arith.negf %67 : vector<8x64xf32>
    %69 = math.exp %68 : vector<8x64xf32>
    %cst_37 = arith.constant 1.000000e+00 : f32
    %70 = vector.broadcast %cst_37 : f32 to vector<8x64xf32>
    %71 = arith.addf %70, %69 : vector<8x64xf32>
    %72 = arith.divf %70, %71 : vector<8x64xf32>
    %73 = vector.extract_strided_slice %72 {offsets = [0, 0], sizes = [8, 32], strides = [1, 1]} : vector<8x64xf32> to vector<8x32xf32>
    %74 = vector.extract_strided_slice %72 {offsets = [0, 32], sizes = [8, 32], strides = [1, 1]} : vector<8x64xf32> to vector<8x32xf32>
    %75 = vector.extract_strided_slice %66 {offsets = [0, 64], sizes = [8, 32], strides = [1, 1]} : vector<8x128xf32> to vector<8x32xf32>
    %76 = math.tanh %75 : vector<8x32xf32>
    %77 = vector.extract_strided_slice %66 {offsets = [0, 96], sizes = [8, 32], strides = [1, 1]} : vector<8x128xf32> to vector<8x32xf32>
    %78 = arith.negf %77 : vector<8x32xf32>
    %79 = math.exp %78 : vector<8x32xf32>
    %cst_38 = arith.constant 1.000000e+00 : f32
    %80 = vector.broadcast %cst_38 : f32 to vector<8x32xf32>
    %81 = arith.addf %80, %79 : vector<8x32xf32>
    %82 = arith.divf %80, %81 : vector<8x32xf32>
    %83 = arith.mulf %74, %29 : vector<8x32xf32>
    %84 = arith.mulf %73, %76 : vector<8x32xf32>
    %85 = arith.addf %83, %84 : vector<8x32xf32>
    %86 = math.tanh %85 : vector<8x32xf32>
    %87 = arith.mulf %82, %86 : vector<8x32xf32>
    %c0_39 = arith.constant 0 : index
    %c1 = arith.constant 1 : index
    %88 = vector.load %arg0[%c0_39, %c1] : memref<8x8xi32, #tpu.memory_space<vmem>>, vector<8x1xi32>
    %89 = vector.broadcast %88 : vector<8x1xi32> to vector<8x16xi32>
    %90 = arith.cmpi eq, %30, %89 : vector<8x16xi32>
    %91 = arith.extui %90 : vector<8x16xi1> to vector<8x16xi32>
    %92 = arith.sitofp %91 : vector<8x16xi32> to vector<8x16xf32>
    %93 = arith.truncf %92 : vector<8x16xf32> to vector<8x16xbf16>
    %cst_40 = arith.constant dense<0.000000e+00> : vector<8x32xf32>
    %94 = tpu.matmul %93, %16, %cst_40 {dimension_numbers = #tpu.dot_dimension_numbers<[1], [0], [0], [1], [0, 0, 1, 1], [], []>} : vector<8x16xbf16>, vector<16x32xbf16>, vector<8x32xf32> -> vector<8x32xf32>
    %95 = tpu.concatenate %94, %62 in 1 : vector<8x32xf32>, vector<8x32xf32> -> vector<8x64xf32>
    %96 = arith.truncf %95 : vector<8x64xf32> to vector<8x64xbf16>
    %cst_41 = arith.constant dense<0.000000e+00> : vector<8x128xf32>
    %97 = tpu.matmul %96, %0, %cst_41 {dimension_numbers = #tpu.dot_dimension_numbers<[1], [0], [0], [1], [0, 0, 1, 1], [], []>} : vector<8x64xbf16>, vector<64x128xbf16>, vector<8x128xf32> -> vector<8x128xf32>
    %98 = arith.addf %97, %4 : vector<8x128xf32>
    %99 = vector.extract_strided_slice %98 {offsets = [0, 0], sizes = [8, 64], strides = [1, 1]} : vector<8x128xf32> to vector<8x64xf32>
    %100 = arith.negf %99 : vector<8x64xf32>
    %101 = math.exp %100 : vector<8x64xf32>
    %cst_42 = arith.constant 1.000000e+00 : f32
    %102 = vector.broadcast %cst_42 : f32 to vector<8x64xf32>
    %103 = arith.addf %102, %101 : vector<8x64xf32>
    %104 = arith.divf %102, %103 : vector<8x64xf32>
    %105 = vector.extract_strided_slice %104 {offsets = [0, 0], sizes = [8, 32], strides = [1, 1]} : vector<8x64xf32> to vector<8x32xf32>
    %106 = vector.extract_strided_slice %104 {offsets = [0, 32], sizes = [8, 32], strides = [1, 1]} : vector<8x64xf32> to vector<8x32xf32>
    %107 = vector.extract_strided_slice %98 {offsets = [0, 64], sizes = [8, 32], strides = [1, 1]} : vector<8x128xf32> to vector<8x32xf32>
    %108 = math.tanh %107 : vector<8x32xf32>
    %109 = vector.extract_strided_slice %98 {offsets = [0, 96], sizes = [8, 32], strides = [1, 1]} : vector<8x128xf32> to vector<8x32xf32>
    %110 = arith.negf %109 : vector<8x32xf32>
    %111 = math.exp %110 : vector<8x32xf32>
    %cst_43 = arith.constant 1.000000e+00 : f32
    %112 = vector.broadcast %cst_43 : f32 to vector<8x32xf32>
    %113 = arith.addf %112, %111 : vector<8x32xf32>
    %114 = arith.divf %112, %113 : vector<8x32xf32>
    %115 = arith.mulf %106, %60 : vector<8x32xf32>
    %116 = arith.mulf %105, %108 : vector<8x32xf32>
    %117 = arith.addf %115, %116 : vector<8x32xf32>
    %118 = math.tanh %117 : vector<8x32xf32>
    %119 = arith.mulf %114, %118 : vector<8x32xf32>
    %120 = tpu.concatenate %119, %87 in 1 : vector<8x32xf32>, vector<8x32xf32> -> vector<8x64xf32>
    %121 = arith.truncf %120 : vector<8x64xf32> to vector<8x64xbf16>
    %cst_44 = arith.constant dense<0.000000e+00> : vector<8x128xf32>
    %122 = tpu.matmul %121, %1, %cst_44 {dimension_numbers = #tpu.dot_dimension_numbers<[1], [0], [0], [1], [0, 0, 1, 1], [], []>} : vector<8x64xbf16>, vector<64x128xbf16>, vector<8x128xf32> -> vector<8x128xf32>
    %123 = arith.addf %122, %7 : vector<8x128xf32>
    %124 = vector.extract_strided_slice %123 {offsets = [0, 0], sizes = [8, 64], strides = [1, 1]} : vector<8x128xf32> to vector<8x64xf32>
    %125 = arith.negf %124 : vector<8x64xf32>
    %126 = math.exp %125 : vector<8x64xf32>
    %cst_45 = arith.constant 1.000000e+00 : f32
    %127 = vector.broadcast %cst_45 : f32 to vector<8x64xf32>
    %128 = arith.addf %127, %126 : vector<8x64xf32>
    %129 = arith.divf %127, %128 : vector<8x64xf32>
    %130 = vector.extract_strided_slice %129 {offsets = [0, 0], sizes = [8, 32], strides = [1, 1]} : vector<8x64xf32> to vector<8x32xf32>
    %131 = vector.extract_strided_slice %129 {offsets = [0, 32], sizes = [8, 32], strides = [1, 1]} : vector<8x64xf32> to vector<8x32xf32>
    %132 = vector.extract_strided_slice %123 {offsets = [0, 64], sizes = [8, 32], strides = [1, 1]} : vector<8x128xf32> to vector<8x32xf32>
    %133 = math.tanh %132 : vector<8x32xf32>
    %134 = vector.extract_strided_slice %123 {offsets = [0, 96], sizes = [8, 32], strides = [1, 1]} : vector<8x128xf32> to vector<8x32xf32>
    %135 = arith.negf %134 : vector<8x32xf32>
    %136 = math.exp %135 : vector<8x32xf32>
    %cst_46 = arith.constant 1.000000e+00 : f32
    %137 = vector.broadcast %cst_46 : f32 to vector<8x32xf32>
    %138 = arith.addf %137, %136 : vector<8x32xf32>
    %139 = arith.divf %137, %138 : vector<8x32xf32>
    %140 = arith.mulf %131, %85 : vector<8x32xf32>
    %141 = arith.mulf %130, %133 : vector<8x32xf32>
    %142 = arith.addf %140, %141 : vector<8x32xf32>
    %143 = math.tanh %142 : vector<8x32xf32>
    %144 = arith.mulf %139, %143 : vector<8x32xf32>
    %c0_47 = arith.constant 0 : index
    %c2 = arith.constant 2 : index
    %145 = vector.load %arg0[%c0_47, %c2] : memref<8x8xi32, #tpu.memory_space<vmem>>, vector<8x1xi32>
    %146 = vector.broadcast %145 : vector<8x1xi32> to vector<8x16xi32>
    %147 = arith.cmpi eq, %30, %146 : vector<8x16xi32>
    %148 = arith.extui %147 : vector<8x16xi1> to vector<8x16xi32>
    %149 = arith.sitofp %148 : vector<8x16xi32> to vector<8x16xf32>
    %150 = arith.truncf %149 : vector<8x16xf32> to vector<8x16xbf16>
    %cst_48 = arith.constant dense<0.000000e+00> : vector<8x32xf32>
    %151 = tpu.matmul %150, %16, %cst_48 {dimension_numbers = #tpu.dot_dimension_numbers<[1], [0], [0], [1], [0, 0, 1, 1], [], []>} : vector<8x16xbf16>, vector<16x32xbf16>, vector<8x32xf32> -> vector<8x32xf32>
    %152 = tpu.concatenate %151, %119 in 1 : vector<8x32xf32>, vector<8x32xf32> -> vector<8x64xf32>
    %153 = arith.truncf %152 : vector<8x64xf32> to vector<8x64xbf16>
    %cst_49 = arith.constant dense<0.000000e+00> : vector<8x128xf32>
    %154 = tpu.matmul %153, %0, %cst_49 {dimension_numbers = #tpu.dot_dimension_numbers<[1], [0], [0], [1], [0, 0, 1, 1], [], []>} : vector<8x64xbf16>, vector<64x128xbf16>, vector<8x128xf32> -> vector<8x128xf32>
    %155 = arith.addf %154, %4 : vector<8x128xf32>
    %156 = vector.extract_strided_slice %155 {offsets = [0, 0], sizes = [8, 64], strides = [1, 1]} : vector<8x128xf32> to vector<8x64xf32>
    %157 = arith.negf %156 : vector<8x64xf32>
    %158 = math.exp %157 : vector<8x64xf32>
    %cst_50 = arith.constant 1.000000e+00 : f32
    %159 = vector.broadcast %cst_50 : f32 to vector<8x64xf32>
    %160 = arith.addf %159, %158 : vector<8x64xf32>
    %161 = arith.divf %159, %160 : vector<8x64xf32>
    %162 = vector.extract_strided_slice %161 {offsets = [0, 0], sizes = [8, 32], strides = [1, 1]} : vector<8x64xf32> to vector<8x32xf32>
    %163 = vector.extract_strided_slice %161 {offsets = [0, 32], sizes = [8, 32], strides = [1, 1]} : vector<8x64xf32> to vector<8x32xf32>
    %164 = vector.extract_strided_slice %155 {offsets = [0, 64], sizes = [8, 32], strides = [1, 1]} : vector<8x128xf32> to vector<8x32xf32>
    %165 = math.tanh %164 : vector<8x32xf32>
    %166 = vector.extract_strided_slice %155 {offsets = [0, 96], sizes = [8, 32], strides = [1, 1]} : vector<8x128xf32> to vector<8x32xf32>
    %167 = arith.negf %166 : vector<8x32xf32>
    %168 = math.exp %167 : vector<8x32xf32>
    %cst_51 = arith.constant 1.000000e+00 : f32
    %169 = vector.broadcast %cst_51 : f32 to vector<8x32xf32>
    %170 = arith.addf %169, %168 : vector<8x32xf32>
    %171 = arith.divf %169, %170 : vector<8x32xf32>
    %172 = arith.mulf %163, %117 : vector<8x32xf32>
    %173 = arith.mulf %162, %165 : vector<8x32xf32>
    %174 = arith.addf %172, %173 : vector<8x32xf32>
    %175 = math.tanh %174 : vector<8x32xf32>
    %176 = arith.mulf %171, %175 : vector<8x32xf32>
    %177 = tpu.concatenate %176, %144 in 1 : vector<8x32xf32>, vector<8x32xf32> -> vector<8x64xf32>
    %178 = arith.truncf %177 : vector<8x64xf32> to vector<8x64xbf16>
    %cst_52 = arith.constant dense<0.000000e+00> : vector<8x128xf32>
    %179 = tpu.matmul %178, %1, %cst_52 {dimension_numbers = #tpu.dot_dimension_numbers<[1], [0], [0], [1], [0, 0, 1, 1], [], []>} : vector<8x64xbf16>, vector<64x128xbf16>, vector<8x128xf32> -> vector<8x128xf32>
    %180 = arith.addf %179, %7 : vector<8x128xf32>
    %181 = vector.extract_strided_slice %180 {offsets = [0, 0], sizes = [8, 64], strides = [1, 1]} : vector<8x128xf32> to vector<8x64xf32>
    %182 = arith.negf %181 : vector<8x64xf32>
    %183 = math.exp %182 : vector<8x64xf32>
    %cst_53 = arith.constant 1.000000e+00 : f32
    %184 = vector.broadcast %cst_53 : f32 to vector<8x64xf32>
    %185 = arith.addf %184, %183 : vector<8x64xf32>
    %186 = arith.divf %184, %185 : vector<8x64xf32>
    %187 = vector.extract_strided_slice %186 {offsets = [0, 0], sizes = [8, 32], strides = [1, 1]} : vector<8x64xf32> to vector<8x32xf32>
    %188 = vector.extract_strided_slice %186 {offsets = [0, 32], sizes = [8, 32], strides = [1, 1]} : vector<8x64xf32> to vector<8x32xf32>
    %189 = vector.extract_strided_slice %180 {offsets = [0, 64], sizes = [8, 32], strides = [1, 1]} : vector<8x128xf32> to vector<8x32xf32>
    %190 = math.tanh %189 : vector<8x32xf32>
    %191 = vector.extract_strided_slice %180 {offsets = [0, 96], sizes = [8, 32], strides = [1, 1]} : vector<8x128xf32> to vector<8x32xf32>
    %192 = arith.negf %191 : vector<8x32xf32>
    %193 = math.exp %192 : vector<8x32xf32>
    %cst_54 = arith.constant 1.000000e+00 : f32
    %194 = vector.broadcast %cst_54 : f32 to vector<8x32xf32>
    %195 = arith.addf %194, %193 : vector<8x32xf32>
    %196 = arith.divf %194, %195 : vector<8x32xf32>
    %197 = arith.mulf %188, %142 : vector<8x32xf32>
    %198 = arith.mulf %187, %190 : vector<8x32xf32>
    %199 = arith.addf %197, %198 : vector<8x32xf32>
    %200 = math.tanh %199 : vector<8x32xf32>
    %201 = arith.mulf %196, %200 : vector<8x32xf32>
    %c0_55 = arith.constant 0 : index
    %c3 = arith.constant 3 : index
    %202 = vector.load %arg0[%c0_55, %c3] : memref<8x8xi32, #tpu.memory_space<vmem>>, vector<8x1xi32>
    %203 = vector.broadcast %202 : vector<8x1xi32> to vector<8x16xi32>
    %204 = arith.cmpi eq, %30, %203 : vector<8x16xi32>
    %205 = arith.extui %204 : vector<8x16xi1> to vector<8x16xi32>
    %206 = arith.sitofp %205 : vector<8x16xi32> to vector<8x16xf32>
    %207 = arith.truncf %206 : vector<8x16xf32> to vector<8x16xbf16>
    %cst_56 = arith.constant dense<0.000000e+00> : vector<8x32xf32>
    %208 = tpu.matmul %207, %16, %cst_56 {dimension_numbers = #tpu.dot_dimension_numbers<[1], [0], [0], [1], [0, 0, 1, 1], [], []>} : vector<8x16xbf16>, vector<16x32xbf16>, vector<8x32xf32> -> vector<8x32xf32>
    %209 = tpu.concatenate %208, %176 in 1 : vector<8x32xf32>, vector<8x32xf32> -> vector<8x64xf32>
    %210 = arith.truncf %209 : vector<8x64xf32> to vector<8x64xbf16>
    %cst_57 = arith.constant dense<0.000000e+00> : vector<8x128xf32>
    %211 = tpu.matmul %210, %0, %cst_57 {dimension_numbers = #tpu.dot_dimension_numbers<[1], [0], [0], [1], [0, 0, 1, 1], [], []>} : vector<8x64xbf16>, vector<64x128xbf16>, vector<8x128xf32> -> vector<8x128xf32>
    %212 = arith.addf %211, %4 : vector<8x128xf32>
    %213 = vector.extract_strided_slice %212 {offsets = [0, 0], sizes = [8, 64], strides = [1, 1]} : vector<8x128xf32> to vector<8x64xf32>
    %214 = arith.negf %213 : vector<8x64xf32>
    %215 = math.exp %214 : vector<8x64xf32>
    %cst_58 = arith.constant 1.000000e+00 : f32
    %216 = vector.broadcast %cst_58 : f32 to vector<8x64xf32>
    %217 = arith.addf %216, %215 : vector<8x64xf32>
    %218 = arith.divf %216, %217 : vector<8x64xf32>
    %219 = vector.extract_strided_slice %218 {offsets = [0, 0], sizes = [8, 32], strides = [1, 1]} : vector<8x64xf32> to vector<8x32xf32>
    %220 = vector.extract_strided_slice %218 {offsets = [0, 32], sizes = [8, 32], strides = [1, 1]} : vector<8x64xf32> to vector<8x32xf32>
    %221 = vector.extract_strided_slice %212 {offsets = [0, 64], sizes = [8, 32], strides = [1, 1]} : vector<8x128xf32> to vector<8x32xf32>
    %222 = math.tanh %221 : vector<8x32xf32>
    %223 = vector.extract_strided_slice %212 {offsets = [0, 96], sizes = [8, 32], strides = [1, 1]} : vector<8x128xf32> to vector<8x32xf32>
    %224 = arith.negf %223 : vector<8x32xf32>
    %225 = math.exp %224 : vector<8x32xf32>
    %cst_59 = arith.constant 1.000000e+00 : f32
    %226 = vector.broadcast %cst_59 : f32 to vector<8x32xf32>
    %227 = arith.addf %226, %225 : vector<8x32xf32>
    %228 = arith.divf %226, %227 : vector<8x32xf32>
    %229 = arith.mulf %220, %174 : vector<8x32xf32>
    %230 = arith.mulf %219, %222 : vector<8x32xf32>
    %231 = arith.addf %229, %230 : vector<8x32xf32>
    %232 = math.tanh %231 : vector<8x32xf32>
    %233 = arith.mulf %228, %232 : vector<8x32xf32>
    %234 = tpu.concatenate %233, %201 in 1 : vector<8x32xf32>, vector<8x32xf32> -> vector<8x64xf32>
    %235 = arith.truncf %234 : vector<8x64xf32> to vector<8x64xbf16>
    %cst_60 = arith.constant dense<0.000000e+00> : vector<8x128xf32>
    %236 = tpu.matmul %235, %1, %cst_60 {dimension_numbers = #tpu.dot_dimension_numbers<[1], [0], [0], [1], [0, 0, 1, 1], [], []>} : vector<8x64xbf16>, vector<64x128xbf16>, vector<8x128xf32> -> vector<8x128xf32>
    %237 = arith.addf %236, %7 : vector<8x128xf32>
    %238 = vector.extract_strided_slice %237 {offsets = [0, 0], sizes = [8, 64], strides = [1, 1]} : vector<8x128xf32> to vector<8x64xf32>
    %239 = arith.negf %238 : vector<8x64xf32>
    %240 = math.exp %239 : vector<8x64xf32>
    %cst_61 = arith.constant 1.000000e+00 : f32
    %241 = vector.broadcast %cst_61 : f32 to vector<8x64xf32>
    %242 = arith.addf %241, %240 : vector<8x64xf32>
    %243 = arith.divf %241, %242 : vector<8x64xf32>
    %244 = vector.extract_strided_slice %243 {offsets = [0, 0], sizes = [8, 32], strides = [1, 1]} : vector<8x64xf32> to vector<8x32xf32>
    %245 = vector.extract_strided_slice %243 {offsets = [0, 32], sizes = [8, 32], strides = [1, 1]} : vector<8x64xf32> to vector<8x32xf32>
    %246 = vector.extract_strided_slice %237 {offsets = [0, 64], sizes = [8, 32], strides = [1, 1]} : vector<8x128xf32> to vector<8x32xf32>
    %247 = math.tanh %246 : vector<8x32xf32>
    %248 = vector.extract_strided_slice %237 {offsets = [0, 96], sizes = [8, 32], strides = [1, 1]} : vector<8x128xf32> to vector<8x32xf32>
    %249 = arith.negf %248 : vector<8x32xf32>
    %250 = math.exp %249 : vector<8x32xf32>
    %cst_62 = arith.constant 1.000000e+00 : f32
    %251 = vector.broadcast %cst_62 : f32 to vector<8x32xf32>
    %252 = arith.addf %251, %250 : vector<8x32xf32>
    %253 = arith.divf %251, %252 : vector<8x32xf32>
    %254 = arith.mulf %245, %199 : vector<8x32xf32>
    %255 = arith.mulf %244, %247 : vector<8x32xf32>
    %256 = arith.addf %254, %255 : vector<8x32xf32>
    %257 = math.tanh %256 : vector<8x32xf32>
    %258 = arith.mulf %253, %257 : vector<8x32xf32>
    %c0_63 = arith.constant 0 : index
    %c4 = arith.constant 4 : index
    %259 = vector.load %arg0[%c0_63, %c4] : memref<8x8xi32, #tpu.memory_space<vmem>>, vector<8x1xi32>
    %260 = vector.broadcast %259 : vector<8x1xi32> to vector<8x16xi32>
    %261 = arith.cmpi eq, %30, %260 : vector<8x16xi32>
    %262 = arith.extui %261 : vector<8x16xi1> to vector<8x16xi32>
    %263 = arith.sitofp %262 : vector<8x16xi32> to vector<8x16xf32>
    %264 = arith.truncf %263 : vector<8x16xf32> to vector<8x16xbf16>
    %cst_64 = arith.constant dense<0.000000e+00> : vector<8x32xf32>
    %265 = tpu.matmul %264, %16, %cst_64 {dimension_numbers = #tpu.dot_dimension_numbers<[1], [0], [0], [1], [0, 0, 1, 1], [], []>} : vector<8x16xbf16>, vector<16x32xbf16>, vector<8x32xf32> -> vector<8x32xf32>
    %266 = tpu.concatenate %265, %233 in 1 : vector<8x32xf32>, vector<8x32xf32> -> vector<8x64xf32>
    %267 = arith.truncf %266 : vector<8x64xf32> to vector<8x64xbf16>
    %cst_65 = arith.constant dense<0.000000e+00> : vector<8x128xf32>
    %268 = tpu.matmul %267, %0, %cst_65 {dimension_numbers = #tpu.dot_dimension_numbers<[1], [0], [0], [1], [0, 0, 1, 1], [], []>} : vector<8x64xbf16>, vector<64x128xbf16>, vector<8x128xf32> -> vector<8x128xf32>
    %269 = arith.addf %268, %4 : vector<8x128xf32>
    %270 = vector.extract_strided_slice %269 {offsets = [0, 0], sizes = [8, 64], strides = [1, 1]} : vector<8x128xf32> to vector<8x64xf32>
    %271 = arith.negf %270 : vector<8x64xf32>
    %272 = math.exp %271 : vector<8x64xf32>
    %cst_66 = arith.constant 1.000000e+00 : f32
    %273 = vector.broadcast %cst_66 : f32 to vector<8x64xf32>
    %274 = arith.addf %273, %272 : vector<8x64xf32>
    %275 = arith.divf %273, %274 : vector<8x64xf32>
    %276 = vector.extract_strided_slice %275 {offsets = [0, 0], sizes = [8, 32], strides = [1, 1]} : vector<8x64xf32> to vector<8x32xf32>
    %277 = vector.extract_strided_slice %275 {offsets = [0, 32], sizes = [8, 32], strides = [1, 1]} : vector<8x64xf32> to vector<8x32xf32>
    %278 = vector.extract_strided_slice %269 {offsets = [0, 64], sizes = [8, 32], strides = [1, 1]} : vector<8x128xf32> to vector<8x32xf32>
    %279 = math.tanh %278 : vector<8x32xf32>
    %280 = vector.extract_strided_slice %269 {offsets = [0, 96], sizes = [8, 32], strides = [1, 1]} : vector<8x128xf32> to vector<8x32xf32>
    %281 = arith.negf %280 : vector<8x32xf32>
    %282 = math.exp %281 : vector<8x32xf32>
    %cst_67 = arith.constant 1.000000e+00 : f32
    %283 = vector.broadcast %cst_67 : f32 to vector<8x32xf32>
    %284 = arith.addf %283, %282 : vector<8x32xf32>
    %285 = arith.divf %283, %284 : vector<8x32xf32>
    %286 = arith.mulf %277, %231 : vector<8x32xf32>
    %287 = arith.mulf %276, %279 : vector<8x32xf32>
    %288 = arith.addf %286, %287 : vector<8x32xf32>
    %289 = math.tanh %288 : vector<8x32xf32>
    %290 = arith.mulf %285, %289 : vector<8x32xf32>
    %291 = tpu.concatenate %290, %258 in 1 : vector<8x32xf32>, vector<8x32xf32> -> vector<8x64xf32>
    %292 = arith.truncf %291 : vector<8x64xf32> to vector<8x64xbf16>
    %cst_68 = arith.constant dense<0.000000e+00> : vector<8x128xf32>
    %293 = tpu.matmul %292, %1, %cst_68 {dimension_numbers = #tpu.dot_dimension_numbers<[1], [0], [0], [1], [0, 0, 1, 1], [], []>} : vector<8x64xbf16>, vector<64x128xbf16>, vector<8x128xf32> -> vector<8x128xf32>
    %294 = arith.addf %293, %7 : vector<8x128xf32>
    %295 = vector.extract_strided_slice %294 {offsets = [0, 0], sizes = [8, 64], strides = [1, 1]} : vector<8x128xf32> to vector<8x64xf32>
    %296 = arith.negf %295 : vector<8x64xf32>
    %297 = math.exp %296 : vector<8x64xf32>
    %cst_69 = arith.constant 1.000000e+00 : f32
    %298 = vector.broadcast %cst_69 : f32 to vector<8x64xf32>
    %299 = arith.addf %298, %297 : vector<8x64xf32>
    %300 = arith.divf %298, %299 : vector<8x64xf32>
    %301 = vector.extract_strided_slice %300 {offsets = [0, 0], sizes = [8, 32], strides = [1, 1]} : vector<8x64xf32> to vector<8x32xf32>
    %302 = vector.extract_strided_slice %300 {offsets = [0, 32], sizes = [8, 32], strides = [1, 1]} : vector<8x64xf32> to vector<8x32xf32>
    %303 = vector.extract_strided_slice %294 {offsets = [0, 64], sizes = [8, 32], strides = [1, 1]} : vector<8x128xf32> to vector<8x32xf32>
    %304 = math.tanh %303 : vector<8x32xf32>
    %305 = vector.extract_strided_slice %294 {offsets = [0, 96], sizes = [8, 32], strides = [1, 1]} : vector<8x128xf32> to vector<8x32xf32>
    %306 = arith.negf %305 : vector<8x32xf32>
    %307 = math.exp %306 : vector<8x32xf32>
    %cst_70 = arith.constant 1.000000e+00 : f32
    %308 = vector.broadcast %cst_70 : f32 to vector<8x32xf32>
    %309 = arith.addf %308, %307 : vector<8x32xf32>
    %310 = arith.divf %308, %309 : vector<8x32xf32>
    %311 = arith.mulf %302, %256 : vector<8x32xf32>
    %312 = arith.mulf %301, %304 : vector<8x32xf32>
    %313 = arith.addf %311, %312 : vector<8x32xf32>
    %314 = math.tanh %313 : vector<8x32xf32>
    %315 = arith.mulf %310, %314 : vector<8x32xf32>
    %c0_71 = arith.constant 0 : index
    %c5 = arith.constant 5 : index
    %316 = vector.load %arg0[%c0_71, %c5] : memref<8x8xi32, #tpu.memory_space<vmem>>, vector<8x1xi32>
    %317 = vector.broadcast %316 : vector<8x1xi32> to vector<8x16xi32>
    %318 = arith.cmpi eq, %30, %317 : vector<8x16xi32>
    %319 = arith.extui %318 : vector<8x16xi1> to vector<8x16xi32>
    %320 = arith.sitofp %319 : vector<8x16xi32> to vector<8x16xf32>
    %321 = arith.truncf %320 : vector<8x16xf32> to vector<8x16xbf16>
    %cst_72 = arith.constant dense<0.000000e+00> : vector<8x32xf32>
    %322 = tpu.matmul %321, %16, %cst_72 {dimension_numbers = #tpu.dot_dimension_numbers<[1], [0], [0], [1], [0, 0, 1, 1], [], []>} : vector<8x16xbf16>, vector<16x32xbf16>, vector<8x32xf32> -> vector<8x32xf32>
    %323 = tpu.concatenate %322, %290 in 1 : vector<8x32xf32>, vector<8x32xf32> -> vector<8x64xf32>
    %324 = arith.truncf %323 : vector<8x64xf32> to vector<8x64xbf16>
    %cst_73 = arith.constant dense<0.000000e+00> : vector<8x128xf32>
    %325 = tpu.matmul %324, %0, %cst_73 {dimension_numbers = #tpu.dot_dimension_numbers<[1], [0], [0], [1], [0, 0, 1, 1], [], []>} : vector<8x64xbf16>, vector<64x128xbf16>, vector<8x128xf32> -> vector<8x128xf32>
    %326 = arith.addf %325, %4 : vector<8x128xf32>
    %327 = vector.extract_strided_slice %326 {offsets = [0, 0], sizes = [8, 64], strides = [1, 1]} : vector<8x128xf32> to vector<8x64xf32>
    %328 = arith.negf %327 : vector<8x64xf32>
    %329 = math.exp %328 : vector<8x64xf32>
    %cst_74 = arith.constant 1.000000e+00 : f32
    %330 = vector.broadcast %cst_74 : f32 to vector<8x64xf32>
    %331 = arith.addf %330, %329 : vector<8x64xf32>
    %332 = arith.divf %330, %331 : vector<8x64xf32>
    %333 = vector.extract_strided_slice %332 {offsets = [0, 0], sizes = [8, 32], strides = [1, 1]} : vector<8x64xf32> to vector<8x32xf32>
    %334 = vector.extract_strided_slice %332 {offsets = [0, 32], sizes = [8, 32], strides = [1, 1]} : vector<8x64xf32> to vector<8x32xf32>
    %335 = vector.extract_strided_slice %326 {offsets = [0, 64], sizes = [8, 32], strides = [1, 1]} : vector<8x128xf32> to vector<8x32xf32>
    %336 = math.tanh %335 : vector<8x32xf32>
    %337 = vector.extract_strided_slice %326 {offsets = [0, 96], sizes = [8, 32], strides = [1, 1]} : vector<8x128xf32> to vector<8x32xf32>
    %338 = arith.negf %337 : vector<8x32xf32>
    %339 = math.exp %338 : vector<8x32xf32>
    %cst_75 = arith.constant 1.000000e+00 : f32
    %340 = vector.broadcast %cst_75 : f32 to vector<8x32xf32>
    %341 = arith.addf %340, %339 : vector<8x32xf32>
    %342 = arith.divf %340, %341 : vector<8x32xf32>
    %343 = arith.mulf %334, %288 : vector<8x32xf32>
    %344 = arith.mulf %333, %336 : vector<8x32xf32>
    %345 = arith.addf %343, %344 : vector<8x32xf32>
    %346 = math.tanh %345 : vector<8x32xf32>
    %347 = arith.mulf %342, %346 : vector<8x32xf32>
    %348 = tpu.concatenate %347, %315 in 1 : vector<8x32xf32>, vector<8x32xf32> -> vector<8x64xf32>
    %349 = arith.truncf %348 : vector<8x64xf32> to vector<8x64xbf16>
    %cst_76 = arith.constant dense<0.000000e+00> : vector<8x128xf32>
    %350 = tpu.matmul %349, %1, %cst_76 {dimension_numbers = #tpu.dot_dimension_numbers<[1], [0], [0], [1], [0, 0, 1, 1], [], []>} : vector<8x64xbf16>, vector<64x128xbf16>, vector<8x128xf32> -> vector<8x128xf32>
    %351 = arith.addf %350, %7 : vector<8x128xf32>
    %352 = vector.extract_strided_slice %351 {offsets = [0, 0], sizes = [8, 64], strides = [1, 1]} : vector<8x128xf32> to vector<8x64xf32>
    %353 = arith.negf %352 : vector<8x64xf32>
    %354 = math.exp %353 : vector<8x64xf32>
    %cst_77 = arith.constant 1.000000e+00 : f32
    %355 = vector.broadcast %cst_77 : f32 to vector<8x64xf32>
    %356 = arith.addf %355, %354 : vector<8x64xf32>
    %357 = arith.divf %355, %356 : vector<8x64xf32>
    %358 = vector.extract_strided_slice %357 {offsets = [0, 0], sizes = [8, 32], strides = [1, 1]} : vector<8x64xf32> to vector<8x32xf32>
    %359 = vector.extract_strided_slice %357 {offsets = [0, 32], sizes = [8, 32], strides = [1, 1]} : vector<8x64xf32> to vector<8x32xf32>
    %360 = vector.extract_strided_slice %351 {offsets = [0, 64], sizes = [8, 32], strides = [1, 1]} : vector<8x128xf32> to vector<8x32xf32>
    %361 = math.tanh %360 : vector<8x32xf32>
    %362 = vector.extract_strided_slice %351 {offsets = [0, 96], sizes = [8, 32], strides = [1, 1]} : vector<8x128xf32> to vector<8x32xf32>
    %363 = arith.negf %362 : vector<8x32xf32>
    %364 = math.exp %363 : vector<8x32xf32>
    %cst_78 = arith.constant 1.000000e+00 : f32
    %365 = vector.broadcast %cst_78 : f32 to vector<8x32xf32>
    %366 = arith.addf %365, %364 : vector<8x32xf32>
    %367 = arith.divf %365, %366 : vector<8x32xf32>
    %368 = arith.mulf %359, %313 : vector<8x32xf32>
    %369 = arith.mulf %358, %361 : vector<8x32xf32>
    %370 = arith.addf %368, %369 : vector<8x32xf32>
    %371 = math.tanh %370 : vector<8x32xf32>
    %372 = arith.mulf %367, %371 : vector<8x32xf32>
    %c0_79 = arith.constant 0 : index
    %c6 = arith.constant 6 : index
    %373 = vector.load %arg0[%c0_79, %c6] : memref<8x8xi32, #tpu.memory_space<vmem>>, vector<8x1xi32>
    %374 = vector.broadcast %373 : vector<8x1xi32> to vector<8x16xi32>
    %375 = arith.cmpi eq, %30, %374 : vector<8x16xi32>
    %376 = arith.extui %375 : vector<8x16xi1> to vector<8x16xi32>
    %377 = arith.sitofp %376 : vector<8x16xi32> to vector<8x16xf32>
    %378 = arith.truncf %377 : vector<8x16xf32> to vector<8x16xbf16>
    %cst_80 = arith.constant dense<0.000000e+00> : vector<8x32xf32>
    %379 = tpu.matmul %378, %16, %cst_80 {dimension_numbers = #tpu.dot_dimension_numbers<[1], [0], [0], [1], [0, 0, 1, 1], [], []>} : vector<8x16xbf16>, vector<16x32xbf16>, vector<8x32xf32> -> vector<8x32xf32>
    %380 = tpu.concatenate %379, %347 in 1 : vector<8x32xf32>, vector<8x32xf32> -> vector<8x64xf32>
    %381 = arith.truncf %380 : vector<8x64xf32> to vector<8x64xbf16>
    %cst_81 = arith.constant dense<0.000000e+00> : vector<8x128xf32>
    %382 = tpu.matmul %381, %0, %cst_81 {dimension_numbers = #tpu.dot_dimension_numbers<[1], [0], [0], [1], [0, 0, 1, 1], [], []>} : vector<8x64xbf16>, vector<64x128xbf16>, vector<8x128xf32> -> vector<8x128xf32>
    %383 = arith.addf %382, %4 : vector<8x128xf32>
    %384 = vector.extract_strided_slice %383 {offsets = [0, 0], sizes = [8, 64], strides = [1, 1]} : vector<8x128xf32> to vector<8x64xf32>
    %385 = arith.negf %384 : vector<8x64xf32>
    %386 = math.exp %385 : vector<8x64xf32>
    %cst_82 = arith.constant 1.000000e+00 : f32
    %387 = vector.broadcast %cst_82 : f32 to vector<8x64xf32>
    %388 = arith.addf %387, %386 : vector<8x64xf32>
    %389 = arith.divf %387, %388 : vector<8x64xf32>
    %390 = vector.extract_strided_slice %389 {offsets = [0, 0], sizes = [8, 32], strides = [1, 1]} : vector<8x64xf32> to vector<8x32xf32>
    %391 = vector.extract_strided_slice %389 {offsets = [0, 32], sizes = [8, 32], strides = [1, 1]} : vector<8x64xf32> to vector<8x32xf32>
    %392 = vector.extract_strided_slice %383 {offsets = [0, 64], sizes = [8, 32], strides = [1, 1]} : vector<8x128xf32> to vector<8x32xf32>
    %393 = math.tanh %392 : vector<8x32xf32>
    %394 = vector.extract_strided_slice %383 {offsets = [0, 96], sizes = [8, 32], strides = [1, 1]} : vector<8x128xf32> to vector<8x32xf32>
    %395 = arith.negf %394 : vector<8x32xf32>
    %396 = math.exp %395 : vector<8x32xf32>
    %cst_83 = arith.constant 1.000000e+00 : f32
    %397 = vector.broadcast %cst_83 : f32 to vector<8x32xf32>
    %398 = arith.addf %397, %396 : vector<8x32xf32>
    %399 = arith.divf %397, %398 : vector<8x32xf32>
    %400 = arith.mulf %391, %345 : vector<8x32xf32>
    %401 = arith.mulf %390, %393 : vector<8x32xf32>
    %402 = arith.addf %400, %401 : vector<8x32xf32>
    %403 = math.tanh %402 : vector<8x32xf32>
    %404 = arith.mulf %399, %403 : vector<8x32xf32>
    %405 = tpu.concatenate %404, %372 in 1 : vector<8x32xf32>, vector<8x32xf32> -> vector<8x64xf32>
    %406 = arith.truncf %405 : vector<8x64xf32> to vector<8x64xbf16>
    %cst_84 = arith.constant dense<0.000000e+00> : vector<8x128xf32>
    %407 = tpu.matmul %406, %1, %cst_84 {dimension_numbers = #tpu.dot_dimension_numbers<[1], [0], [0], [1], [0, 0, 1, 1], [], []>} : vector<8x64xbf16>, vector<64x128xbf16>, vector<8x128xf32> -> vector<8x128xf32>
    %408 = arith.addf %407, %7 : vector<8x128xf32>
    %409 = vector.extract_strided_slice %408 {offsets = [0, 0], sizes = [8, 64], strides = [1, 1]} : vector<8x128xf32> to vector<8x64xf32>
    %410 = arith.negf %409 : vector<8x64xf32>
    %411 = math.exp %410 : vector<8x64xf32>
    %cst_85 = arith.constant 1.000000e+00 : f32
    %412 = vector.broadcast %cst_85 : f32 to vector<8x64xf32>
    %413 = arith.addf %412, %411 : vector<8x64xf32>
    %414 = arith.divf %412, %413 : vector<8x64xf32>
    %415 = vector.extract_strided_slice %414 {offsets = [0, 0], sizes = [8, 32], strides = [1, 1]} : vector<8x64xf32> to vector<8x32xf32>
    %416 = vector.extract_strided_slice %414 {offsets = [0, 32], sizes = [8, 32], strides = [1, 1]} : vector<8x64xf32> to vector<8x32xf32>
    %417 = vector.extract_strided_slice %408 {offsets = [0, 64], sizes = [8, 32], strides = [1, 1]} : vector<8x128xf32> to vector<8x32xf32>
    %418 = math.tanh %417 : vector<8x32xf32>
    %419 = vector.extract_strided_slice %408 {offsets = [0, 96], sizes = [8, 32], strides = [1, 1]} : vector<8x128xf32> to vector<8x32xf32>
    %420 = arith.negf %419 : vector<8x32xf32>
    %421 = math.exp %420 : vector<8x32xf32>
    %cst_86 = arith.constant 1.000000e+00 : f32
    %422 = vector.broadcast %cst_86 : f32 to vector<8x32xf32>
    %423 = arith.addf %422, %421 : vector<8x32xf32>
    %424 = arith.divf %422, %423 : vector<8x32xf32>
    %425 = arith.mulf %416, %370 : vector<8x32xf32>
    %426 = arith.mulf %415, %418 : vector<8x32xf32>
    %427 = arith.addf %425, %426 : vector<8x32xf32>
    %428 = math.tanh %427 : vector<8x32xf32>
    %429 = arith.mulf %424, %428 : vector<8x32xf32>
    %c0_87 = arith.constant 0 : index
    %c7 = arith.constant 7 : index
    %430 = vector.load %arg0[%c0_87, %c7] : memref<8x8xi32, #tpu.memory_space<vmem>>, vector<8x1xi32>
    %431 = vector.broadcast %430 : vector<8x1xi32> to vector<8x16xi32>
    %432 = arith.cmpi eq, %30, %431 : vector<8x16xi32>
    %433 = arith.extui %432 : vector<8x16xi1> to vector<8x16xi32>
    %434 = arith.sitofp %433 : vector<8x16xi32> to vector<8x16xf32>
    %435 = arith.truncf %434 : vector<8x16xf32> to vector<8x16xbf16>
    %cst_88 = arith.constant dense<0.000000e+00> : vector<8x32xf32>
    %436 = tpu.matmul %435, %16, %cst_88 {dimension_numbers = #tpu.dot_dimension_numbers<[1], [0], [0], [1], [0, 0, 1, 1], [], []>} : vector<8x16xbf16>, vector<16x32xbf16>, vector<8x32xf32> -> vector<8x32xf32>
    %437 = tpu.concatenate %436, %404 in 1 : vector<8x32xf32>, vector<8x32xf32> -> vector<8x64xf32>
    %438 = arith.truncf %437 : vector<8x64xf32> to vector<8x64xbf16>
    %cst_89 = arith.constant dense<0.000000e+00> : vector<8x128xf32>
    %439 = tpu.matmul %438, %0, %cst_89 {dimension_numbers = #tpu.dot_dimension_numbers<[1], [0], [0], [1], [0, 0, 1, 1], [], []>} : vector<8x64xbf16>, vector<64x128xbf16>, vector<8x128xf32> -> vector<8x128xf32>
    %440 = arith.addf %439, %4 : vector<8x128xf32>
    %441 = vector.extract_strided_slice %440 {offsets = [0, 0], sizes = [8, 64], strides = [1, 1]} : vector<8x128xf32> to vector<8x64xf32>
    %442 = arith.negf %441 : vector<8x64xf32>
    %443 = math.exp %442 : vector<8x64xf32>
    %cst_90 = arith.constant 1.000000e+00 : f32
    %444 = vector.broadcast %cst_90 : f32 to vector<8x64xf32>
    %445 = arith.addf %444, %443 : vector<8x64xf32>
    %446 = arith.divf %444, %445 : vector<8x64xf32>
    %447 = vector.extract_strided_slice %446 {offsets = [0, 0], sizes = [8, 32], strides = [1, 1]} : vector<8x64xf32> to vector<8x32xf32>
    %448 = vector.extract_strided_slice %446 {offsets = [0, 32], sizes = [8, 32], strides = [1, 1]} : vector<8x64xf32> to vector<8x32xf32>
    %449 = vector.extract_strided_slice %440 {offsets = [0, 64], sizes = [8, 32], strides = [1, 1]} : vector<8x128xf32> to vector<8x32xf32>
    %450 = math.tanh %449 : vector<8x32xf32>
    %451 = vector.extract_strided_slice %440 {offsets = [0, 96], sizes = [8, 32], strides = [1, 1]} : vector<8x128xf32> to vector<8x32xf32>
    %452 = arith.negf %451 : vector<8x32xf32>
    %453 = math.exp %452 : vector<8x32xf32>
    %cst_91 = arith.constant 1.000000e+00 : f32
    %454 = vector.broadcast %cst_91 : f32 to vector<8x32xf32>
    %455 = arith.addf %454, %453 : vector<8x32xf32>
    %456 = arith.divf %454, %455 : vector<8x32xf32>
    %457 = arith.mulf %448, %402 : vector<8x32xf32>
    %458 = arith.mulf %447, %450 : vector<8x32xf32>
    %459 = arith.addf %457, %458 : vector<8x32xf32>
    %460 = math.tanh %459 : vector<8x32xf32>
    %461 = arith.mulf %456, %460 : vector<8x32xf32>
    %462 = tpu.concatenate %461, %429 in 1 : vector<8x32xf32>, vector<8x32xf32> -> vector<8x64xf32>
    %463 = arith.truncf %462 : vector<8x64xf32> to vector<8x64xbf16>
    %cst_92 = arith.constant dense<0.000000e+00> : vector<8x128xf32>
    %464 = tpu.matmul %463, %1, %cst_92 {dimension_numbers = #tpu.dot_dimension_numbers<[1], [0], [0], [1], [0, 0, 1, 1], [], []>} : vector<8x64xbf16>, vector<64x128xbf16>, vector<8x128xf32> -> vector<8x128xf32>
    %465 = arith.addf %464, %7 : vector<8x128xf32>
    %466 = vector.extract_strided_slice %465 {offsets = [0, 0], sizes = [8, 64], strides = [1, 1]} : vector<8x128xf32> to vector<8x64xf32>
    %467 = arith.negf %466 : vector<8x64xf32>
    %468 = math.exp %467 : vector<8x64xf32>
    %cst_93 = arith.constant 1.000000e+00 : f32
    %469 = vector.broadcast %cst_93 : f32 to vector<8x64xf32>
    %470 = arith.addf %469, %468 : vector<8x64xf32>
    %471 = arith.divf %469, %470 : vector<8x64xf32>
    %472 = vector.extract_strided_slice %471 {offsets = [0, 0], sizes = [8, 32], strides = [1, 1]} : vector<8x64xf32> to vector<8x32xf32>
    %473 = vector.extract_strided_slice %471 {offsets = [0, 32], sizes = [8, 32], strides = [1, 1]} : vector<8x64xf32> to vector<8x32xf32>
    %474 = vector.extract_strided_slice %465 {offsets = [0, 64], sizes = [8, 32], strides = [1, 1]} : vector<8x128xf32> to vector<8x32xf32>
    %475 = math.tanh %474 : vector<8x32xf32>
    %476 = vector.extract_strided_slice %465 {offsets = [0, 96], sizes = [8, 32], strides = [1, 1]} : vector<8x128xf32> to vector<8x32xf32>
    %477 = arith.negf %476 : vector<8x32xf32>
    %478 = math.exp %477 : vector<8x32xf32>
    %cst_94 = arith.constant 1.000000e+00 : f32
    %479 = vector.broadcast %cst_94 : f32 to vector<8x32xf32>
    %480 = arith.addf %479, %478 : vector<8x32xf32>
    %481 = arith.divf %479, %480 : vector<8x32xf32>
    %482 = arith.mulf %473, %427 : vector<8x32xf32>
    %483 = arith.mulf %472, %475 : vector<8x32xf32>
    %484 = arith.addf %482, %483 : vector<8x32xf32>
    %485 = math.tanh %484 : vector<8x32xf32>
    %486 = arith.mulf %481, %485 : vector<8x32xf32>
    %487 = tpu.iota {dimensions = array<i32: 1>} : vector<8x16xi32>
    %488 = tpu.iota {dimensions = array<i32: 1>} : vector<8x128xi32>
    %c0_95 = arith.constant 0 : index
    %c0_96 = arith.constant 0 : index
    %489 = vector.load %arg1[%c0_95, %c0_96] : memref<8x8xi32, #tpu.memory_space<vmem>>, vector<8x1xi32>
    %490 = vector.broadcast %489 : vector<8x1xi32> to vector<8x16xi32>
    %491 = arith.cmpi eq, %487, %490 : vector<8x16xi32>
    %492 = arith.extui %491 : vector<8x16xi1> to vector<8x16xi32>
    %493 = arith.sitofp %492 : vector<8x16xi32> to vector<8x16xf32>
    %494 = arith.truncf %493 : vector<8x16xf32> to vector<8x16xbf16>
    %cst_97 = arith.constant dense<0.000000e+00> : vector<8x32xf32>
    %495 = tpu.matmul %494, %17, %cst_97 {dimension_numbers = #tpu.dot_dimension_numbers<[1], [0], [0], [1], [0, 0, 1, 1], [], []>} : vector<8x16xbf16>, vector<16x32xbf16>, vector<8x32xf32> -> vector<8x32xf32>
    %496 = tpu.concatenate %495, %461 in 1 : vector<8x32xf32>, vector<8x32xf32> -> vector<8x64xf32>
    %497 = arith.truncf %496 : vector<8x64xf32> to vector<8x64xbf16>
    %cst_98 = arith.constant dense<0.000000e+00> : vector<8x128xf32>
    %498 = tpu.matmul %497, %8, %cst_98 {dimension_numbers = #tpu.dot_dimension_numbers<[1], [0], [0], [1], [0, 0, 1, 1], [], []>} : vector<8x64xbf16>, vector<64x128xbf16>, vector<8x128xf32> -> vector<8x128xf32>
    %499 = arith.addf %498, %12 : vector<8x128xf32>
    %500 = vector.extract_strided_slice %499 {offsets = [0, 0], sizes = [8, 64], strides = [1, 1]} : vector<8x128xf32> to vector<8x64xf32>
    %501 = arith.negf %500 : vector<8x64xf32>
    %502 = math.exp %501 : vector<8x64xf32>
    %cst_99 = arith.constant 1.000000e+00 : f32
    %503 = vector.broadcast %cst_99 : f32 to vector<8x64xf32>
    %504 = arith.addf %503, %502 : vector<8x64xf32>
    %505 = arith.divf %503, %504 : vector<8x64xf32>
    %506 = vector.extract_strided_slice %505 {offsets = [0, 0], sizes = [8, 32], strides = [1, 1]} : vector<8x64xf32> to vector<8x32xf32>
    %507 = vector.extract_strided_slice %505 {offsets = [0, 32], sizes = [8, 32], strides = [1, 1]} : vector<8x64xf32> to vector<8x32xf32>
    %508 = vector.extract_strided_slice %499 {offsets = [0, 64], sizes = [8, 32], strides = [1, 1]} : vector<8x128xf32> to vector<8x32xf32>
    %509 = math.tanh %508 : vector<8x32xf32>
    %510 = vector.extract_strided_slice %499 {offsets = [0, 96], sizes = [8, 32], strides = [1, 1]} : vector<8x128xf32> to vector<8x32xf32>
    %511 = arith.negf %510 : vector<8x32xf32>
    %512 = math.exp %511 : vector<8x32xf32>
    %cst_100 = arith.constant 1.000000e+00 : f32
    %513 = vector.broadcast %cst_100 : f32 to vector<8x32xf32>
    %514 = arith.addf %513, %512 : vector<8x32xf32>
    %515 = arith.divf %513, %514 : vector<8x32xf32>
    %516 = arith.mulf %507, %459 : vector<8x32xf32>
    %517 = arith.mulf %506, %509 : vector<8x32xf32>
    %518 = arith.addf %516, %517 : vector<8x32xf32>
    %519 = math.tanh %518 : vector<8x32xf32>
    %520 = arith.mulf %515, %519 : vector<8x32xf32>
    %521 = tpu.concatenate %520, %486 in 1 : vector<8x32xf32>, vector<8x32xf32> -> vector<8x64xf32>
    %522 = arith.truncf %521 : vector<8x64xf32> to vector<8x64xbf16>
    %cst_101 = arith.constant dense<0.000000e+00> : vector<8x128xf32>
    %523 = tpu.matmul %522, %9, %cst_101 {dimension_numbers = #tpu.dot_dimension_numbers<[1], [0], [0], [1], [0, 0, 1, 1], [], []>} : vector<8x64xbf16>, vector<64x128xbf16>, vector<8x128xf32> -> vector<8x128xf32>
    %524 = arith.addf %523, %15 : vector<8x128xf32>
    %525 = vector.extract_strided_slice %524 {offsets = [0, 0], sizes = [8, 64], strides = [1, 1]} : vector<8x128xf32> to vector<8x64xf32>
    %526 = arith.negf %525 : vector<8x64xf32>
    %527 = math.exp %526 : vector<8x64xf32>
    %cst_102 = arith.constant 1.000000e+00 : f32
    %528 = vector.broadcast %cst_102 : f32 to vector<8x64xf32>
    %529 = arith.addf %528, %527 : vector<8x64xf32>
    %530 = arith.divf %528, %529 : vector<8x64xf32>
    %531 = vector.extract_strided_slice %530 {offsets = [0, 0], sizes = [8, 32], strides = [1, 1]} : vector<8x64xf32> to vector<8x32xf32>
    %532 = vector.extract_strided_slice %530 {offsets = [0, 32], sizes = [8, 32], strides = [1, 1]} : vector<8x64xf32> to vector<8x32xf32>
    %533 = vector.extract_strided_slice %524 {offsets = [0, 64], sizes = [8, 32], strides = [1, 1]} : vector<8x128xf32> to vector<8x32xf32>
    %534 = math.tanh %533 : vector<8x32xf32>
    %535 = vector.extract_strided_slice %524 {offsets = [0, 96], sizes = [8, 32], strides = [1, 1]} : vector<8x128xf32> to vector<8x32xf32>
    %536 = arith.negf %535 : vector<8x32xf32>
    %537 = math.exp %536 : vector<8x32xf32>
    %cst_103 = arith.constant 1.000000e+00 : f32
    %538 = vector.broadcast %cst_103 : f32 to vector<8x32xf32>
    %539 = arith.addf %538, %537 : vector<8x32xf32>
    %540 = arith.divf %538, %539 : vector<8x32xf32>
    %541 = arith.mulf %532, %484 : vector<8x32xf32>
    %542 = arith.mulf %531, %534 : vector<8x32xf32>
    %543 = arith.addf %541, %542 : vector<8x32xf32>
    %544 = math.tanh %543 : vector<8x32xf32>
    %545 = arith.mulf %540, %544 : vector<8x32xf32>
    %546 = arith.truncf %545 : vector<8x32xf32> to vector<8x32xbf16>
    %cst_104 = arith.constant dense<0.000000e+00> : vector<8x128xf32>
    %547 = tpu.matmul %546, %18, %cst_104 {dimension_numbers = #tpu.dot_dimension_numbers<[1], [0], [0], [1], [0, 0, 1, 1], [], []>} : vector<8x32xbf16>, vector<32x128xbf16>, vector<8x128xf32> -> vector<8x128xf32>
    %548 = arith.addf %547, %21 : vector<8x128xf32>
    %c1_105 = arith.constant 1 : index
    %c0_106 = arith.constant 0 : index
    %c0_107 = arith.constant 0 : index
    %549 = vector.load %arg15[%c1_105, %c0_106, %c0_107] : memref<8x8x128xf32, #tpu.memory_space<vmem>>, vector<1x8x128xf32>
    %550 = vector.shape_cast %549 : vector<1x8x128xf32> to vector<8x128xf32>
    %551 = vector.shape_cast %548 : vector<8x128xf32> to vector<1x8x128xf32>
    tpu.vector_store %arg15[%c1_105, %c0_106, %c0_107], %551 {strides = array<i32>} : memref<8x8x128xf32, #tpu.memory_space<vmem>>, vector<1x8x128xf32>,
    %c16_i32 = arith.constant 16 : i32
    %552 = vector.broadcast %c16_i32 : i32 to vector<8x128xi32>
    %553 = arith.cmpi slt, %488, %552 : vector<8x128xi32>
    %cst_108 = arith.constant -1.000000e+30 : f32
    %554 = vector.broadcast %cst_108 : f32 to vector<8x128xf32>
    %555 = arith.select %553, %548, %554 : vector<8x128xi1>, vector<8x128xf32>
    %cst_109 = arith.constant dense<0xFF800000> : vector<8xf32>
    %556 = vector.multi_reduction <maximumf>, %555, %cst_109 [1] : vector<8x128xf32> to vector<8xf32>
    %557 = vector.shape_cast %556 : vector<8xf32> to vector<8x1xf32>
    %558 = vector.broadcast %557 : vector<8x1xf32> to vector<8x128xf32>
    %559 = arith.cmpf oeq, %555, %558 : vector<8x128xf32>
    %c128_i32 = arith.constant 128 : i32
    %560 = vector.broadcast %c128_i32 : i32 to vector<8x128xi32>
    %561 = arith.select %559, %488, %560 : vector<8x128xi1>, vector<8x128xi32>
    %cst_110 = arith.constant dense<2147483647> : vector<8xi32>
    %562 = vector.multi_reduction <minsi>, %561, %cst_110 [1] : vector<8x128xi32> to vector<8xi32>
    %563 = vector.shape_cast %562 : vector<8xi32> to vector<8x1xi32>
    %c1_111 = arith.constant 1 : index
    %564 = memref.load %arg2[%c1_111] : memref<8xi32, #tpu.memory_space<smem>>
    %c0_i32 = arith.constant 0 : i32
    %565 = arith.cmpi ne, %564, %c0_i32 : i32
    %c0_112 = arith.constant 0 : index
    %c1_113 = arith.constant 1 : index
    %566 = vector.load %arg1[%c0_112, %c1_113] : memref<8x8xi32, #tpu.memory_space<vmem>>, vector<8x1xi32>
    %567 = arith.select %565, %566, %563 : vector<8x1xi32>
    %568 = vector.broadcast %567 : vector<8x1xi32> to vector<8x16xi32>
    %569 = arith.cmpi eq, %487, %568 : vector<8x16xi32>
    %570 = arith.extui %569 : vector<8x16xi1> to vector<8x16xi32>
    %571 = arith.sitofp %570 : vector<8x16xi32> to vector<8x16xf32>
    %572 = arith.truncf %571 : vector<8x16xf32> to vector<8x16xbf16>
    %cst_114 = arith.constant dense<0.000000e+00> : vector<8x32xf32>
    %573 = tpu.matmul %572, %17, %cst_114 {dimension_numbers = #tpu.dot_dimension_numbers<[1], [0], [0], [1], [0, 0, 1, 1], [], []>} : vector<8x16xbf16>, vector<16x32xbf16>, vector<8x32xf32> -> vector<8x32xf32>
    %574 = tpu.concatenate %573, %520 in 1 : vector<8x32xf32>, vector<8x32xf32> -> vector<8x64xf32>
    %575 = arith.truncf %574 : vector<8x64xf32> to vector<8x64xbf16>
    %cst_115 = arith.constant dense<0.000000e+00> : vector<8x128xf32>
    %576 = tpu.matmul %575, %8, %cst_115 {dimension_numbers = #tpu.dot_dimension_numbers<[1], [0], [0], [1], [0, 0, 1, 1], [], []>} : vector<8x64xbf16>, vector<64x128xbf16>, vector<8x128xf32> -> vector<8x128xf32>
    %577 = arith.addf %576, %12 : vector<8x128xf32>
    %578 = vector.extract_strided_slice %577 {offsets = [0, 0], sizes = [8, 64], strides = [1, 1]} : vector<8x128xf32> to vector<8x64xf32>
    %579 = arith.negf %578 : vector<8x64xf32>
    %580 = math.exp %579 : vector<8x64xf32>
    %cst_116 = arith.constant 1.000000e+00 : f32
    %581 = vector.broadcast %cst_116 : f32 to vector<8x64xf32>
    %582 = arith.addf %581, %580 : vector<8x64xf32>
    %583 = arith.divf %581, %582 : vector<8x64xf32>
    %584 = vector.extract_strided_slice %583 {offsets = [0, 0], sizes = [8, 32], strides = [1, 1]} : vector<8x64xf32> to vector<8x32xf32>
    %585 = vector.extract_strided_slice %583 {offsets = [0, 32], sizes = [8, 32], strides = [1, 1]} : vector<8x64xf32> to vector<8x32xf32>
    %586 = vector.extract_strided_slice %577 {offsets = [0, 64], sizes = [8, 32], strides = [1, 1]} : vector<8x128xf32> to vector<8x32xf32>
    %587 = math.tanh %586 : vector<8x32xf32>
    %588 = vector.extract_strided_slice %577 {offsets = [0, 96], sizes = [8, 32], strides = [1, 1]} : vector<8x128xf32> to vector<8x32xf32>
    %589 = arith.negf %588 : vector<8x32xf32>
    %590 = math.exp %589 : vector<8x32xf32>
    %cst_117 = arith.constant 1.000000e+00 : f32
    %591 = vector.broadcast %cst_117 : f32 to vector<8x32xf32>
    %592 = arith.addf %591, %590 : vector<8x32xf32>
    %593 = arith.divf %591, %592 : vector<8x32xf32>
    %594 = arith.mulf %585, %518 : vector<8x32xf32>
    %595 = arith.mulf %584, %587 : vector<8x32xf32>
    %596 = arith.addf %594, %595 : vector<8x32xf32>
    %597 = math.tanh %596 : vector<8x32xf32>
    %598 = arith.mulf %593, %597 : vector<8x32xf32>
    %599 = tpu.concatenate %598, %545 in 1 : vector<8x32xf32>, vector<8x32xf32> -> vector<8x64xf32>
    %600 = arith.truncf %599 : vector<8x64xf32> to vector<8x64xbf16>
    %cst_118 = arith.constant dense<0.000000e+00> : vector<8x128xf32>
    %601 = tpu.matmul %600, %9, %cst_118 {dimension_numbers = #tpu.dot_dimension_numbers<[1], [0], [0], [1], [0, 0, 1, 1], [], []>} : vector<8x64xbf16>, vector<64x128xbf16>, vector<8x128xf32> -> vector<8x128xf32>
    %602 = arith.addf %601, %15 : vector<8x128xf32>
    %603 = vector.extract_strided_slice %602 {offsets = [0, 0], sizes = [8, 64], strides = [1, 1]} : vector<8x128xf32> to vector<8x64xf32>
    %604 = arith.negf %603 : vector<8x64xf32>
    %605 = math.exp %604 : vector<8x64xf32>
    %cst_119 = arith.constant 1.000000e+00 : f32
    %606 = vector.broadcast %cst_119 : f32 to vector<8x64xf32>
    %607 = arith.addf %606, %605 : vector<8x64xf32>
    %608 = arith.divf %606, %607 : vector<8x64xf32>
    %609 = vector.extract_strided_slice %608 {offsets = [0, 0], sizes = [8, 32], strides = [1, 1]} : vector<8x64xf32> to vector<8x32xf32>
    %610 = vector.extract_strided_slice %608 {offsets = [0, 32], sizes = [8, 32], strides = [1, 1]} : vector<8x64xf32> to vector<8x32xf32>
    %611 = vector.extract_strided_slice %602 {offsets = [0, 64], sizes = [8, 32], strides = [1, 1]} : vector<8x128xf32> to vector<8x32xf32>
    %612 = math.tanh %611 : vector<8x32xf32>
    %613 = vector.extract_strided_slice %602 {offsets = [0, 96], sizes = [8, 32], strides = [1, 1]} : vector<8x128xf32> to vector<8x32xf32>
    %614 = arith.negf %613 : vector<8x32xf32>
    %615 = math.exp %614 : vector<8x32xf32>
    %cst_120 = arith.constant 1.000000e+00 : f32
    %616 = vector.broadcast %cst_120 : f32 to vector<8x32xf32>
    %617 = arith.addf %616, %615 : vector<8x32xf32>
    %618 = arith.divf %616, %617 : vector<8x32xf32>
    %619 = arith.mulf %610, %543 : vector<8x32xf32>
    %620 = arith.mulf %609, %612 : vector<8x32xf32>
    %621 = arith.addf %619, %620 : vector<8x32xf32>
    %622 = math.tanh %621 : vector<8x32xf32>
    %623 = arith.mulf %618, %622 : vector<8x32xf32>
    %624 = arith.truncf %623 : vector<8x32xf32> to vector<8x32xbf16>
    %cst_121 = arith.constant dense<0.000000e+00> : vector<8x128xf32>
    %625 = tpu.matmul %624, %18, %cst_121 {dimension_numbers = #tpu.dot_dimension_numbers<[1], [0], [0], [1], [0, 0, 1, 1], [], []>} : vector<8x32xbf16>, vector<32x128xbf16>, vector<8x128xf32> -> vector<8x128xf32>
    %626 = arith.addf %625, %21 : vector<8x128xf32>
    %c2_122 = arith.constant 2 : index
    %c0_123 = arith.constant 0 : index
    %c0_124 = arith.constant 0 : index
    %627 = vector.load %arg15[%c2_122, %c0_123, %c0_124] : memref<8x8x128xf32, #tpu.memory_space<vmem>>, vector<1x8x128xf32>
    %628 = vector.shape_cast %627 : vector<1x8x128xf32> to vector<8x128xf32>
    %629 = vector.shape_cast %626 : vector<8x128xf32> to vector<1x8x128xf32>
    tpu.vector_store %arg15[%c2_122, %c0_123, %c0_124], %629 {strides = array<i32>} : memref<8x8x128xf32, #tpu.memory_space<vmem>>, vector<1x8x128xf32>,
    %c16_i32_125 = arith.constant 16 : i32
    %630 = vector.broadcast %c16_i32_125 : i32 to vector<8x128xi32>
    %631 = arith.cmpi slt, %488, %630 : vector<8x128xi32>
    %cst_126 = arith.constant -1.000000e+30 : f32
    %632 = vector.broadcast %cst_126 : f32 to vector<8x128xf32>
    %633 = arith.select %631, %626, %632 : vector<8x128xi1>, vector<8x128xf32>
    %cst_127 = arith.constant dense<0xFF800000> : vector<8xf32>
    %634 = vector.multi_reduction <maximumf>, %633, %cst_127 [1] : vector<8x128xf32> to vector<8xf32>
    %635 = vector.shape_cast %634 : vector<8xf32> to vector<8x1xf32>
    %636 = vector.broadcast %635 : vector<8x1xf32> to vector<8x128xf32>
    %637 = arith.cmpf oeq, %633, %636 : vector<8x128xf32>
    %c128_i32_128 = arith.constant 128 : i32
    %638 = vector.broadcast %c128_i32_128 : i32 to vector<8x128xi32>
    %639 = arith.select %637, %488, %638 : vector<8x128xi1>, vector<8x128xi32>
    %cst_129 = arith.constant dense<2147483647> : vector<8xi32>
    %640 = vector.multi_reduction <minsi>, %639, %cst_129 [1] : vector<8x128xi32> to vector<8xi32>
    %641 = vector.shape_cast %640 : vector<8xi32> to vector<8x1xi32>
    %c2_130 = arith.constant 2 : index
    %642 = memref.load %arg2[%c2_130] : memref<8xi32, #tpu.memory_space<smem>>
    %c0_i32_131 = arith.constant 0 : i32
    %643 = arith.cmpi ne, %642, %c0_i32_131 : i32
    %c0_132 = arith.constant 0 : index
    %c2_133 = arith.constant 2 : index
    %644 = vector.load %arg1[%c0_132, %c2_133] : memref<8x8xi32, #tpu.memory_space<vmem>>, vector<8x1xi32>
    %645 = arith.select %643, %644, %641 : vector<8x1xi32>
    %646 = vector.broadcast %645 : vector<8x1xi32> to vector<8x16xi32>
    %647 = arith.cmpi eq, %487, %646 : vector<8x16xi32>
    %648 = arith.extui %647 : vector<8x16xi1> to vector<8x16xi32>
    %649 = arith.sitofp %648 : vector<8x16xi32> to vector<8x16xf32>
    %650 = arith.truncf %649 : vector<8x16xf32> to vector<8x16xbf16>
    %cst_134 = arith.constant dense<0.000000e+00> : vector<8x32xf32>
    %651 = tpu.matmul %650, %17, %cst_134 {dimension_numbers = #tpu.dot_dimension_numbers<[1], [0], [0], [1], [0, 0, 1, 1], [], []>} : vector<8x16xbf16>, vector<16x32xbf16>, vector<8x32xf32> -> vector<8x32xf32>
    %652 = tpu.concatenate %651, %598 in 1 : vector<8x32xf32>, vector<8x32xf32> -> vector<8x64xf32>
    %653 = arith.truncf %652 : vector<8x64xf32> to vector<8x64xbf16>
    %cst_135 = arith.constant dense<0.000000e+00> : vector<8x128xf32>
    %654 = tpu.matmul %653, %8, %cst_135 {dimension_numbers = #tpu.dot_dimension_numbers<[1], [0], [0], [1], [0, 0, 1, 1], [], []>} : vector<8x64xbf16>, vector<64x128xbf16>, vector<8x128xf32> -> vector<8x128xf32>
    %655 = arith.addf %654, %12 : vector<8x128xf32>
    %656 = vector.extract_strided_slice %655 {offsets = [0, 0], sizes = [8, 64], strides = [1, 1]} : vector<8x128xf32> to vector<8x64xf32>
    %657 = arith.negf %656 : vector<8x64xf32>
    %658 = math.exp %657 : vector<8x64xf32>
    %cst_136 = arith.constant 1.000000e+00 : f32
    %659 = vector.broadcast %cst_136 : f32 to vector<8x64xf32>
    %660 = arith.addf %659, %658 : vector<8x64xf32>
    %661 = arith.divf %659, %660 : vector<8x64xf32>
    %662 = vector.extract_strided_slice %661 {offsets = [0, 0], sizes = [8, 32], strides = [1, 1]} : vector<8x64xf32> to vector<8x32xf32>
    %663 = vector.extract_strided_slice %661 {offsets = [0, 32], sizes = [8, 32], strides = [1, 1]} : vector<8x64xf32> to vector<8x32xf32>
    %664 = vector.extract_strided_slice %655 {offsets = [0, 64], sizes = [8, 32], strides = [1, 1]} : vector<8x128xf32> to vector<8x32xf32>
    %665 = math.tanh %664 : vector<8x32xf32>
    %666 = vector.extract_strided_slice %655 {offsets = [0, 96], sizes = [8, 32], strides = [1, 1]} : vector<8x128xf32> to vector<8x32xf32>
    %667 = arith.negf %666 : vector<8x32xf32>
    %668 = math.exp %667 : vector<8x32xf32>
    %cst_137 = arith.constant 1.000000e+00 : f32
    %669 = vector.broadcast %cst_137 : f32 to vector<8x32xf32>
    %670 = arith.addf %669, %668 : vector<8x32xf32>
    %671 = arith.divf %669, %670 : vector<8x32xf32>
    %672 = arith.mulf %663, %596 : vector<8x32xf32>
    %673 = arith.mulf %662, %665 : vector<8x32xf32>
    %674 = arith.addf %672, %673 : vector<8x32xf32>
    %675 = math.tanh %674 : vector<8x32xf32>
    %676 = arith.mulf %671, %675 : vector<8x32xf32>
    %677 = tpu.concatenate %676, %623 in 1 : vector<8x32xf32>, vector<8x32xf32> -> vector<8x64xf32>
    %678 = arith.truncf %677 : vector<8x64xf32> to vector<8x64xbf16>
    %cst_138 = arith.constant dense<0.000000e+00> : vector<8x128xf32>
    %679 = tpu.matmul %678, %9, %cst_138 {dimension_numbers = #tpu.dot_dimension_numbers<[1], [0], [0], [1], [0, 0, 1, 1], [], []>} : vector<8x64xbf16>, vector<64x128xbf16>, vector<8x128xf32> -> vector<8x128xf32>
    %680 = arith.addf %679, %15 : vector<8x128xf32>
    %681 = vector.extract_strided_slice %680 {offsets = [0, 0], sizes = [8, 64], strides = [1, 1]} : vector<8x128xf32> to vector<8x64xf32>
    %682 = arith.negf %681 : vector<8x64xf32>
    %683 = math.exp %682 : vector<8x64xf32>
    %cst_139 = arith.constant 1.000000e+00 : f32
    %684 = vector.broadcast %cst_139 : f32 to vector<8x64xf32>
    %685 = arith.addf %684, %683 : vector<8x64xf32>
    %686 = arith.divf %684, %685 : vector<8x64xf32>
    %687 = vector.extract_strided_slice %686 {offsets = [0, 0], sizes = [8, 32], strides = [1, 1]} : vector<8x64xf32> to vector<8x32xf32>
    %688 = vector.extract_strided_slice %686 {offsets = [0, 32], sizes = [8, 32], strides = [1, 1]} : vector<8x64xf32> to vector<8x32xf32>
    %689 = vector.extract_strided_slice %680 {offsets = [0, 64], sizes = [8, 32], strides = [1, 1]} : vector<8x128xf32> to vector<8x32xf32>
    %690 = math.tanh %689 : vector<8x32xf32>
    %691 = vector.extract_strided_slice %680 {offsets = [0, 96], sizes = [8, 32], strides = [1, 1]} : vector<8x128xf32> to vector<8x32xf32>
    %692 = arith.negf %691 : vector<8x32xf32>
    %693 = math.exp %692 : vector<8x32xf32>
    %cst_140 = arith.constant 1.000000e+00 : f32
    %694 = vector.broadcast %cst_140 : f32 to vector<8x32xf32>
    %695 = arith.addf %694, %693 : vector<8x32xf32>
    %696 = arith.divf %694, %695 : vector<8x32xf32>
    %697 = arith.mulf %688, %621 : vector<8x32xf32>
    %698 = arith.mulf %687, %690 : vector<8x32xf32>
    %699 = arith.addf %697, %698 : vector<8x32xf32>
    %700 = math.tanh %699 : vector<8x32xf32>
    %701 = arith.mulf %696, %700 : vector<8x32xf32>
    %702 = arith.truncf %701 : vector<8x32xf32> to vector<8x32xbf16>
    %cst_141 = arith.constant dense<0.000000e+00> : vector<8x128xf32>
    %703 = tpu.matmul %702, %18, %cst_141 {dimension_numbers = #tpu.dot_dimension_numbers<[1], [0], [0], [1], [0, 0, 1, 1], [], []>} : vector<8x32xbf16>, vector<32x128xbf16>, vector<8x128xf32> -> vector<8x128xf32>
    %704 = arith.addf %703, %21 : vector<8x128xf32>
    %c3_142 = arith.constant 3 : index
    %c0_143 = arith.constant 0 : index
    %c0_144 = arith.constant 0 : index
    %705 = vector.load %arg15[%c3_142, %c0_143, %c0_144] : memref<8x8x128xf32, #tpu.memory_space<vmem>>, vector<1x8x128xf32>
    %706 = vector.shape_cast %705 : vector<1x8x128xf32> to vector<8x128xf32>
    %707 = vector.shape_cast %704 : vector<8x128xf32> to vector<1x8x128xf32>
    tpu.vector_store %arg15[%c3_142, %c0_143, %c0_144], %707 {strides = array<i32>} : memref<8x8x128xf32, #tpu.memory_space<vmem>>, vector<1x8x128xf32>,
    %c16_i32_145 = arith.constant 16 : i32
    %708 = vector.broadcast %c16_i32_145 : i32 to vector<8x128xi32>
    %709 = arith.cmpi slt, %488, %708 : vector<8x128xi32>
    %cst_146 = arith.constant -1.000000e+30 : f32
    %710 = vector.broadcast %cst_146 : f32 to vector<8x128xf32>
    %711 = arith.select %709, %704, %710 : vector<8x128xi1>, vector<8x128xf32>
    %cst_147 = arith.constant dense<0xFF800000> : vector<8xf32>
    %712 = vector.multi_reduction <maximumf>, %711, %cst_147 [1] : vector<8x128xf32> to vector<8xf32>
    %713 = vector.shape_cast %712 : vector<8xf32> to vector<8x1xf32>
    %714 = vector.broadcast %713 : vector<8x1xf32> to vector<8x128xf32>
    %715 = arith.cmpf oeq, %711, %714 : vector<8x128xf32>
    %c128_i32_148 = arith.constant 128 : i32
    %716 = vector.broadcast %c128_i32_148 : i32 to vector<8x128xi32>
    %717 = arith.select %715, %488, %716 : vector<8x128xi1>, vector<8x128xi32>
    %cst_149 = arith.constant dense<2147483647> : vector<8xi32>
    %718 = vector.multi_reduction <minsi>, %717, %cst_149 [1] : vector<8x128xi32> to vector<8xi32>
    %719 = vector.shape_cast %718 : vector<8xi32> to vector<8x1xi32>
    %c3_150 = arith.constant 3 : index
    %720 = memref.load %arg2[%c3_150] : memref<8xi32, #tpu.memory_space<smem>>
    %c0_i32_151 = arith.constant 0 : i32
    %721 = arith.cmpi ne, %720, %c0_i32_151 : i32
    %c0_152 = arith.constant 0 : index
    %c3_153 = arith.constant 3 : index
    %722 = vector.load %arg1[%c0_152, %c3_153] : memref<8x8xi32, #tpu.memory_space<vmem>>, vector<8x1xi32>
    %723 = arith.select %721, %722, %719 : vector<8x1xi32>
    %724 = vector.broadcast %723 : vector<8x1xi32> to vector<8x16xi32>
    %725 = arith.cmpi eq, %487, %724 : vector<8x16xi32>
    %726 = arith.extui %725 : vector<8x16xi1> to vector<8x16xi32>
    %727 = arith.sitofp %726 : vector<8x16xi32> to vector<8x16xf32>
    %728 = arith.truncf %727 : vector<8x16xf32> to vector<8x16xbf16>
    %cst_154 = arith.constant dense<0.000000e+00> : vector<8x32xf32>
    %729 = tpu.matmul %728, %17, %cst_154 {dimension_numbers = #tpu.dot_dimension_numbers<[1], [0], [0], [1], [0, 0, 1, 1], [], []>} : vector<8x16xbf16>, vector<16x32xbf16>, vector<8x32xf32> -> vector<8x32xf32>
    %730 = tpu.concatenate %729, %676 in 1 : vector<8x32xf32>, vector<8x32xf32> -> vector<8x64xf32>
    %731 = arith.truncf %730 : vector<8x64xf32> to vector<8x64xbf16>
    %cst_155 = arith.constant dense<0.000000e+00> : vector<8x128xf32>
    %732 = tpu.matmul %731, %8, %cst_155 {dimension_numbers = #tpu.dot_dimension_numbers<[1], [0], [0], [1], [0, 0, 1, 1], [], []>} : vector<8x64xbf16>, vector<64x128xbf16>, vector<8x128xf32> -> vector<8x128xf32>
    %733 = arith.addf %732, %12 : vector<8x128xf32>
    %734 = vector.extract_strided_slice %733 {offsets = [0, 0], sizes = [8, 64], strides = [1, 1]} : vector<8x128xf32> to vector<8x64xf32>
    %735 = arith.negf %734 : vector<8x64xf32>
    %736 = math.exp %735 : vector<8x64xf32>
    %cst_156 = arith.constant 1.000000e+00 : f32
    %737 = vector.broadcast %cst_156 : f32 to vector<8x64xf32>
    %738 = arith.addf %737, %736 : vector<8x64xf32>
    %739 = arith.divf %737, %738 : vector<8x64xf32>
    %740 = vector.extract_strided_slice %739 {offsets = [0, 0], sizes = [8, 32], strides = [1, 1]} : vector<8x64xf32> to vector<8x32xf32>
    %741 = vector.extract_strided_slice %739 {offsets = [0, 32], sizes = [8, 32], strides = [1, 1]} : vector<8x64xf32> to vector<8x32xf32>
    %742 = vector.extract_strided_slice %733 {offsets = [0, 64], sizes = [8, 32], strides = [1, 1]} : vector<8x128xf32> to vector<8x32xf32>
    %743 = math.tanh %742 : vector<8x32xf32>
    %744 = vector.extract_strided_slice %733 {offsets = [0, 96], sizes = [8, 32], strides = [1, 1]} : vector<8x128xf32> to vector<8x32xf32>
    %745 = arith.negf %744 : vector<8x32xf32>
    %746 = math.exp %745 : vector<8x32xf32>
    %cst_157 = arith.constant 1.000000e+00 : f32
    %747 = vector.broadcast %cst_157 : f32 to vector<8x32xf32>
    %748 = arith.addf %747, %746 : vector<8x32xf32>
    %749 = arith.divf %747, %748 : vector<8x32xf32>
    %750 = arith.mulf %741, %674 : vector<8x32xf32>
    %751 = arith.mulf %740, %743 : vector<8x32xf32>
    %752 = arith.addf %750, %751 : vector<8x32xf32>
    %753 = math.tanh %752 : vector<8x32xf32>
    %754 = arith.mulf %749, %753 : vector<8x32xf32>
    %755 = tpu.concatenate %754, %701 in 1 : vector<8x32xf32>, vector<8x32xf32> -> vector<8x64xf32>
    %756 = arith.truncf %755 : vector<8x64xf32> to vector<8x64xbf16>
    %cst_158 = arith.constant dense<0.000000e+00> : vector<8x128xf32>
    %757 = tpu.matmul %756, %9, %cst_158 {dimension_numbers = #tpu.dot_dimension_numbers<[1], [0], [0], [1], [0, 0, 1, 1], [], []>} : vector<8x64xbf16>, vector<64x128xbf16>, vector<8x128xf32> -> vector<8x128xf32>
    %758 = arith.addf %757, %15 : vector<8x128xf32>
    %759 = vector.extract_strided_slice %758 {offsets = [0, 0], sizes = [8, 64], strides = [1, 1]} : vector<8x128xf32> to vector<8x64xf32>
    %760 = arith.negf %759 : vector<8x64xf32>
    %761 = math.exp %760 : vector<8x64xf32>
    %cst_159 = arith.constant 1.000000e+00 : f32
    %762 = vector.broadcast %cst_159 : f32 to vector<8x64xf32>
    %763 = arith.addf %762, %761 : vector<8x64xf32>
    %764 = arith.divf %762, %763 : vector<8x64xf32>
    %765 = vector.extract_strided_slice %764 {offsets = [0, 0], sizes = [8, 32], strides = [1, 1]} : vector<8x64xf32> to vector<8x32xf32>
    %766 = vector.extract_strided_slice %764 {offsets = [0, 32], sizes = [8, 32], strides = [1, 1]} : vector<8x64xf32> to vector<8x32xf32>
    %767 = vector.extract_strided_slice %758 {offsets = [0, 64], sizes = [8, 32], strides = [1, 1]} : vector<8x128xf32> to vector<8x32xf32>
    %768 = math.tanh %767 : vector<8x32xf32>
    %769 = vector.extract_strided_slice %758 {offsets = [0, 96], sizes = [8, 32], strides = [1, 1]} : vector<8x128xf32> to vector<8x32xf32>
    %770 = arith.negf %769 : vector<8x32xf32>
    %771 = math.exp %770 : vector<8x32xf32>
    %cst_160 = arith.constant 1.000000e+00 : f32
    %772 = vector.broadcast %cst_160 : f32 to vector<8x32xf32>
    %773 = arith.addf %772, %771 : vector<8x32xf32>
    %774 = arith.divf %772, %773 : vector<8x32xf32>
    %775 = arith.mulf %766, %699 : vector<8x32xf32>
    %776 = arith.mulf %765, %768 : vector<8x32xf32>
    %777 = arith.addf %775, %776 : vector<8x32xf32>
    %778 = math.tanh %777 : vector<8x32xf32>
    %779 = arith.mulf %774, %778 : vector<8x32xf32>
    %780 = arith.truncf %779 : vector<8x32xf32> to vector<8x32xbf16>
    %cst_161 = arith.constant dense<0.000000e+00> : vector<8x128xf32>
    %781 = tpu.matmul %780, %18, %cst_161 {dimension_numbers = #tpu.dot_dimension_numbers<[1], [0], [0], [1], [0, 0, 1, 1], [], []>} : vector<8x32xbf16>, vector<32x128xbf16>, vector<8x128xf32> -> vector<8x128xf32>
    %782 = arith.addf %781, %21 : vector<8x128xf32>
    %c4_162 = arith.constant 4 : index
    %c0_163 = arith.constant 0 : index
    %c0_164 = arith.constant 0 : index
    %783 = vector.load %arg15[%c4_162, %c0_163, %c0_164] : memref<8x8x128xf32, #tpu.memory_space<vmem>>, vector<1x8x128xf32>
    %784 = vector.shape_cast %783 : vector<1x8x128xf32> to vector<8x128xf32>
    %785 = vector.shape_cast %782 : vector<8x128xf32> to vector<1x8x128xf32>
    tpu.vector_store %arg15[%c4_162, %c0_163, %c0_164], %785 {strides = array<i32>} : memref<8x8x128xf32, #tpu.memory_space<vmem>>, vector<1x8x128xf32>,
    %c16_i32_165 = arith.constant 16 : i32
    %786 = vector.broadcast %c16_i32_165 : i32 to vector<8x128xi32>
    %787 = arith.cmpi slt, %488, %786 : vector<8x128xi32>
    %cst_166 = arith.constant -1.000000e+30 : f32
    %788 = vector.broadcast %cst_166 : f32 to vector<8x128xf32>
    %789 = arith.select %787, %782, %788 : vector<8x128xi1>, vector<8x128xf32>
    %cst_167 = arith.constant dense<0xFF800000> : vector<8xf32>
    %790 = vector.multi_reduction <maximumf>, %789, %cst_167 [1] : vector<8x128xf32> to vector<8xf32>
    %791 = vector.shape_cast %790 : vector<8xf32> to vector<8x1xf32>
    %792 = vector.broadcast %791 : vector<8x1xf32> to vector<8x128xf32>
    %793 = arith.cmpf oeq, %789, %792 : vector<8x128xf32>
    %c128_i32_168 = arith.constant 128 : i32
    %794 = vector.broadcast %c128_i32_168 : i32 to vector<8x128xi32>
    %795 = arith.select %793, %488, %794 : vector<8x128xi1>, vector<8x128xi32>
    %cst_169 = arith.constant dense<2147483647> : vector<8xi32>
    %796 = vector.multi_reduction <minsi>, %795, %cst_169 [1] : vector<8x128xi32> to vector<8xi32>
    %797 = vector.shape_cast %796 : vector<8xi32> to vector<8x1xi32>
    %c4_170 = arith.constant 4 : index
    %798 = memref.load %arg2[%c4_170] : memref<8xi32, #tpu.memory_space<smem>>
    %c0_i32_171 = arith.constant 0 : i32
    %799 = arith.cmpi ne, %798, %c0_i32_171 : i32
    %c0_172 = arith.constant 0 : index
    %c4_173 = arith.constant 4 : index
    %800 = vector.load %arg1[%c0_172, %c4_173] : memref<8x8xi32, #tpu.memory_space<vmem>>, vector<8x1xi32>
    %801 = arith.select %799, %800, %797 : vector<8x1xi32>
    %802 = vector.broadcast %801 : vector<8x1xi32> to vector<8x16xi32>
    %803 = arith.cmpi eq, %487, %802 : vector<8x16xi32>
    %804 = arith.extui %803 : vector<8x16xi1> to vector<8x16xi32>
    %805 = arith.sitofp %804 : vector<8x16xi32> to vector<8x16xf32>
    %806 = arith.truncf %805 : vector<8x16xf32> to vector<8x16xbf16>
    %cst_174 = arith.constant dense<0.000000e+00> : vector<8x32xf32>
    %807 = tpu.matmul %806, %17, %cst_174 {dimension_numbers = #tpu.dot_dimension_numbers<[1], [0], [0], [1], [0, 0, 1, 1], [], []>} : vector<8x16xbf16>, vector<16x32xbf16>, vector<8x32xf32> -> vector<8x32xf32>
    %808 = tpu.concatenate %807, %754 in 1 : vector<8x32xf32>, vector<8x32xf32> -> vector<8x64xf32>
    %809 = arith.truncf %808 : vector<8x64xf32> to vector<8x64xbf16>
    %cst_175 = arith.constant dense<0.000000e+00> : vector<8x128xf32>
    %810 = tpu.matmul %809, %8, %cst_175 {dimension_numbers = #tpu.dot_dimension_numbers<[1], [0], [0], [1], [0, 0, 1, 1], [], []>} : vector<8x64xbf16>, vector<64x128xbf16>, vector<8x128xf32> -> vector<8x128xf32>
    %811 = arith.addf %810, %12 : vector<8x128xf32>
    %812 = vector.extract_strided_slice %811 {offsets = [0, 0], sizes = [8, 64], strides = [1, 1]} : vector<8x128xf32> to vector<8x64xf32>
    %813 = arith.negf %812 : vector<8x64xf32>
    %814 = math.exp %813 : vector<8x64xf32>
    %cst_176 = arith.constant 1.000000e+00 : f32
    %815 = vector.broadcast %cst_176 : f32 to vector<8x64xf32>
    %816 = arith.addf %815, %814 : vector<8x64xf32>
    %817 = arith.divf %815, %816 : vector<8x64xf32>
    %818 = vector.extract_strided_slice %817 {offsets = [0, 0], sizes = [8, 32], strides = [1, 1]} : vector<8x64xf32> to vector<8x32xf32>
    %819 = vector.extract_strided_slice %817 {offsets = [0, 32], sizes = [8, 32], strides = [1, 1]} : vector<8x64xf32> to vector<8x32xf32>
    %820 = vector.extract_strided_slice %811 {offsets = [0, 64], sizes = [8, 32], strides = [1, 1]} : vector<8x128xf32> to vector<8x32xf32>
    %821 = math.tanh %820 : vector<8x32xf32>
    %822 = vector.extract_strided_slice %811 {offsets = [0, 96], sizes = [8, 32], strides = [1, 1]} : vector<8x128xf32> to vector<8x32xf32>
    %823 = arith.negf %822 : vector<8x32xf32>
    %824 = math.exp %823 : vector<8x32xf32>
    %cst_177 = arith.constant 1.000000e+00 : f32
    %825 = vector.broadcast %cst_177 : f32 to vector<8x32xf32>
    %826 = arith.addf %825, %824 : vector<8x32xf32>
    %827 = arith.divf %825, %826 : vector<8x32xf32>
    %828 = arith.mulf %819, %752 : vector<8x32xf32>
    %829 = arith.mulf %818, %821 : vector<8x32xf32>
    %830 = arith.addf %828, %829 : vector<8x32xf32>
    %831 = math.tanh %830 : vector<8x32xf32>
    %832 = arith.mulf %827, %831 : vector<8x32xf32>
    %833 = tpu.concatenate %832, %779 in 1 : vector<8x32xf32>, vector<8x32xf32> -> vector<8x64xf32>
    %834 = arith.truncf %833 : vector<8x64xf32> to vector<8x64xbf16>
    %cst_178 = arith.constant dense<0.000000e+00> : vector<8x128xf32>
    %835 = tpu.matmul %834, %9, %cst_178 {dimension_numbers = #tpu.dot_dimension_numbers<[1], [0], [0], [1], [0, 0, 1, 1], [], []>} : vector<8x64xbf16>, vector<64x128xbf16>, vector<8x128xf32> -> vector<8x128xf32>
    %836 = arith.addf %835, %15 : vector<8x128xf32>
    %837 = vector.extract_strided_slice %836 {offsets = [0, 0], sizes = [8, 64], strides = [1, 1]} : vector<8x128xf32> to vector<8x64xf32>
    %838 = arith.negf %837 : vector<8x64xf32>
    %839 = math.exp %838 : vector<8x64xf32>
    %cst_179 = arith.constant 1.000000e+00 : f32
    %840 = vector.broadcast %cst_179 : f32 to vector<8x64xf32>
    %841 = arith.addf %840, %839 : vector<8x64xf32>
    %842 = arith.divf %840, %841 : vector<8x64xf32>
    %843 = vector.extract_strided_slice %842 {offsets = [0, 0], sizes = [8, 32], strides = [1, 1]} : vector<8x64xf32> to vector<8x32xf32>
    %844 = vector.extract_strided_slice %842 {offsets = [0, 32], sizes = [8, 32], strides = [1, 1]} : vector<8x64xf32> to vector<8x32xf32>
    %845 = vector.extract_strided_slice %836 {offsets = [0, 64], sizes = [8, 32], strides = [1, 1]} : vector<8x128xf32> to vector<8x32xf32>
    %846 = math.tanh %845 : vector<8x32xf32>
    %847 = vector.extract_strided_slice %836 {offsets = [0, 96], sizes = [8, 32], strides = [1, 1]} : vector<8x128xf32> to vector<8x32xf32>
    %848 = arith.negf %847 : vector<8x32xf32>
    %849 = math.exp %848 : vector<8x32xf32>
    %cst_180 = arith.constant 1.000000e+00 : f32
    %850 = vector.broadcast %cst_180 : f32 to vector<8x32xf32>
    %851 = arith.addf %850, %849 : vector<8x32xf32>
    %852 = arith.divf %850, %851 : vector<8x32xf32>
    %853 = arith.mulf %844, %777 : vector<8x32xf32>
    %854 = arith.mulf %843, %846 : vector<8x32xf32>
    %855 = arith.addf %853, %854 : vector<8x32xf32>
    %856 = math.tanh %855 : vector<8x32xf32>
    %857 = arith.mulf %852, %856 : vector<8x32xf32>
    %858 = arith.truncf %857 : vector<8x32xf32> to vector<8x32xbf16>
    %cst_181 = arith.constant dense<0.000000e+00> : vector<8x128xf32>
    %859 = tpu.matmul %858, %18, %cst_181 {dimension_numbers = #tpu.dot_dimension_numbers<[1], [0], [0], [1], [0, 0, 1, 1], [], []>} : vector<8x32xbf16>, vector<32x128xbf16>, vector<8x128xf32> -> vector<8x128xf32>
    %860 = arith.addf %859, %21 : vector<8x128xf32>
    %c5_182 = arith.constant 5 : index
    %c0_183 = arith.constant 0 : index
    %c0_184 = arith.constant 0 : index
    %861 = vector.load %arg15[%c5_182, %c0_183, %c0_184] : memref<8x8x128xf32, #tpu.memory_space<vmem>>, vector<1x8x128xf32>
    %862 = vector.shape_cast %861 : vector<1x8x128xf32> to vector<8x128xf32>
    %863 = vector.shape_cast %860 : vector<8x128xf32> to vector<1x8x128xf32>
    tpu.vector_store %arg15[%c5_182, %c0_183, %c0_184], %863 {strides = array<i32>} : memref<8x8x128xf32, #tpu.memory_space<vmem>>, vector<1x8x128xf32>,
    %c16_i32_185 = arith.constant 16 : i32
    %864 = vector.broadcast %c16_i32_185 : i32 to vector<8x128xi32>
    %865 = arith.cmpi slt, %488, %864 : vector<8x128xi32>
    %cst_186 = arith.constant -1.000000e+30 : f32
    %866 = vector.broadcast %cst_186 : f32 to vector<8x128xf32>
    %867 = arith.select %865, %860, %866 : vector<8x128xi1>, vector<8x128xf32>
    %cst_187 = arith.constant dense<0xFF800000> : vector<8xf32>
    %868 = vector.multi_reduction <maximumf>, %867, %cst_187 [1] : vector<8x128xf32> to vector<8xf32>
    %869 = vector.shape_cast %868 : vector<8xf32> to vector<8x1xf32>
    %870 = vector.broadcast %869 : vector<8x1xf32> to vector<8x128xf32>
    %871 = arith.cmpf oeq, %867, %870 : vector<8x128xf32>
    %c128_i32_188 = arith.constant 128 : i32
    %872 = vector.broadcast %c128_i32_188 : i32 to vector<8x128xi32>
    %873 = arith.select %871, %488, %872 : vector<8x128xi1>, vector<8x128xi32>
    %cst_189 = arith.constant dense<2147483647> : vector<8xi32>
    %874 = vector.multi_reduction <minsi>, %873, %cst_189 [1] : vector<8x128xi32> to vector<8xi32>
    %875 = vector.shape_cast %874 : vector<8xi32> to vector<8x1xi32>
    %c5_190 = arith.constant 5 : index
    %876 = memref.load %arg2[%c5_190] : memref<8xi32, #tpu.memory_space<smem>>
    %c0_i32_191 = arith.constant 0 : i32
    %877 = arith.cmpi ne, %876, %c0_i32_191 : i32
    %c0_192 = arith.constant 0 : index
    %c5_193 = arith.constant 5 : index
    %878 = vector.load %arg1[%c0_192, %c5_193] : memref<8x8xi32, #tpu.memory_space<vmem>>, vector<8x1xi32>
    %879 = arith.select %877, %878, %875 : vector<8x1xi32>
    %880 = vector.broadcast %879 : vector<8x1xi32> to vector<8x16xi32>
    %881 = arith.cmpi eq, %487, %880 : vector<8x16xi32>
    %882 = arith.extui %881 : vector<8x16xi1> to vector<8x16xi32>
    %883 = arith.sitofp %882 : vector<8x16xi32> to vector<8x16xf32>
    %884 = arith.truncf %883 : vector<8x16xf32> to vector<8x16xbf16>
    %cst_194 = arith.constant dense<0.000000e+00> : vector<8x32xf32>
    %885 = tpu.matmul %884, %17, %cst_194 {dimension_numbers = #tpu.dot_dimension_numbers<[1], [0], [0], [1], [0, 0, 1, 1], [], []>} : vector<8x16xbf16>, vector<16x32xbf16>, vector<8x32xf32> -> vector<8x32xf32>
    %886 = tpu.concatenate %885, %832 in 1 : vector<8x32xf32>, vector<8x32xf32> -> vector<8x64xf32>
    %887 = arith.truncf %886 : vector<8x64xf32> to vector<8x64xbf16>
    %cst_195 = arith.constant dense<0.000000e+00> : vector<8x128xf32>
    %888 = tpu.matmul %887, %8, %cst_195 {dimension_numbers = #tpu.dot_dimension_numbers<[1], [0], [0], [1], [0, 0, 1, 1], [], []>} : vector<8x64xbf16>, vector<64x128xbf16>, vector<8x128xf32> -> vector<8x128xf32>
    %889 = arith.addf %888, %12 : vector<8x128xf32>
    %890 = vector.extract_strided_slice %889 {offsets = [0, 0], sizes = [8, 64], strides = [1, 1]} : vector<8x128xf32> to vector<8x64xf32>
    %891 = arith.negf %890 : vector<8x64xf32>
    %892 = math.exp %891 : vector<8x64xf32>
    %cst_196 = arith.constant 1.000000e+00 : f32
    %893 = vector.broadcast %cst_196 : f32 to vector<8x64xf32>
    %894 = arith.addf %893, %892 : vector<8x64xf32>
    %895 = arith.divf %893, %894 : vector<8x64xf32>
    %896 = vector.extract_strided_slice %895 {offsets = [0, 0], sizes = [8, 32], strides = [1, 1]} : vector<8x64xf32> to vector<8x32xf32>
    %897 = vector.extract_strided_slice %895 {offsets = [0, 32], sizes = [8, 32], strides = [1, 1]} : vector<8x64xf32> to vector<8x32xf32>
    %898 = vector.extract_strided_slice %889 {offsets = [0, 64], sizes = [8, 32], strides = [1, 1]} : vector<8x128xf32> to vector<8x32xf32>
    %899 = math.tanh %898 : vector<8x32xf32>
    %900 = vector.extract_strided_slice %889 {offsets = [0, 96], sizes = [8, 32], strides = [1, 1]} : vector<8x128xf32> to vector<8x32xf32>
    %901 = arith.negf %900 : vector<8x32xf32>
    %902 = math.exp %901 : vector<8x32xf32>
    %cst_197 = arith.constant 1.000000e+00 : f32
    %903 = vector.broadcast %cst_197 : f32 to vector<8x32xf32>
    %904 = arith.addf %903, %902 : vector<8x32xf32>
    %905 = arith.divf %903, %904 : vector<8x32xf32>
    %906 = arith.mulf %897, %830 : vector<8x32xf32>
    %907 = arith.mulf %896, %899 : vector<8x32xf32>
    %908 = arith.addf %906, %907 : vector<8x32xf32>
    %909 = math.tanh %908 : vector<8x32xf32>
    %910 = arith.mulf %905, %909 : vector<8x32xf32>
    %911 = tpu.concatenate %910, %857 in 1 : vector<8x32xf32>, vector<8x32xf32> -> vector<8x64xf32>
    %912 = arith.truncf %911 : vector<8x64xf32> to vector<8x64xbf16>
    %cst_198 = arith.constant dense<0.000000e+00> : vector<8x128xf32>
    %913 = tpu.matmul %912, %9, %cst_198 {dimension_numbers = #tpu.dot_dimension_numbers<[1], [0], [0], [1], [0, 0, 1, 1], [], []>} : vector<8x64xbf16>, vector<64x128xbf16>, vector<8x128xf32> -> vector<8x128xf32>
    %914 = arith.addf %913, %15 : vector<8x128xf32>
    %915 = vector.extract_strided_slice %914 {offsets = [0, 0], sizes = [8, 64], strides = [1, 1]} : vector<8x128xf32> to vector<8x64xf32>
    %916 = arith.negf %915 : vector<8x64xf32>
    %917 = math.exp %916 : vector<8x64xf32>
    %cst_199 = arith.constant 1.000000e+00 : f32
    %918 = vector.broadcast %cst_199 : f32 to vector<8x64xf32>
    %919 = arith.addf %918, %917 : vector<8x64xf32>
    %920 = arith.divf %918, %919 : vector<8x64xf32>
    %921 = vector.extract_strided_slice %920 {offsets = [0, 0], sizes = [8, 32], strides = [1, 1]} : vector<8x64xf32> to vector<8x32xf32>
    %922 = vector.extract_strided_slice %920 {offsets = [0, 32], sizes = [8, 32], strides = [1, 1]} : vector<8x64xf32> to vector<8x32xf32>
    %923 = vector.extract_strided_slice %914 {offsets = [0, 64], sizes = [8, 32], strides = [1, 1]} : vector<8x128xf32> to vector<8x32xf32>
    %924 = math.tanh %923 : vector<8x32xf32>
    %925 = vector.extract_strided_slice %914 {offsets = [0, 96], sizes = [8, 32], strides = [1, 1]} : vector<8x128xf32> to vector<8x32xf32>
    %926 = arith.negf %925 : vector<8x32xf32>
    %927 = math.exp %926 : vector<8x32xf32>
    %cst_200 = arith.constant 1.000000e+00 : f32
    %928 = vector.broadcast %cst_200 : f32 to vector<8x32xf32>
    %929 = arith.addf %928, %927 : vector<8x32xf32>
    %930 = arith.divf %928, %929 : vector<8x32xf32>
    %931 = arith.mulf %922, %855 : vector<8x32xf32>
    %932 = arith.mulf %921, %924 : vector<8x32xf32>
    %933 = arith.addf %931, %932 : vector<8x32xf32>
    %934 = math.tanh %933 : vector<8x32xf32>
    %935 = arith.mulf %930, %934 : vector<8x32xf32>
    %936 = arith.truncf %935 : vector<8x32xf32> to vector<8x32xbf16>
    %cst_201 = arith.constant dense<0.000000e+00> : vector<8x128xf32>
    %937 = tpu.matmul %936, %18, %cst_201 {dimension_numbers = #tpu.dot_dimension_numbers<[1], [0], [0], [1], [0, 0, 1, 1], [], []>} : vector<8x32xbf16>, vector<32x128xbf16>, vector<8x128xf32> -> vector<8x128xf32>
    %938 = arith.addf %937, %21 : vector<8x128xf32>
    %c6_202 = arith.constant 6 : index
    %c0_203 = arith.constant 0 : index
    %c0_204 = arith.constant 0 : index
    %939 = vector.load %arg15[%c6_202, %c0_203, %c0_204] : memref<8x8x128xf32, #tpu.memory_space<vmem>>, vector<1x8x128xf32>
    %940 = vector.shape_cast %939 : vector<1x8x128xf32> to vector<8x128xf32>
    %941 = vector.shape_cast %938 : vector<8x128xf32> to vector<1x8x128xf32>
    tpu.vector_store %arg15[%c6_202, %c0_203, %c0_204], %941 {strides = array<i32>} : memref<8x8x128xf32, #tpu.memory_space<vmem>>, vector<1x8x128xf32>,
    %c16_i32_205 = arith.constant 16 : i32
    %942 = vector.broadcast %c16_i32_205 : i32 to vector<8x128xi32>
    %943 = arith.cmpi slt, %488, %942 : vector<8x128xi32>
    %cst_206 = arith.constant -1.000000e+30 : f32
    %944 = vector.broadcast %cst_206 : f32 to vector<8x128xf32>
    %945 = arith.select %943, %938, %944 : vector<8x128xi1>, vector<8x128xf32>
    %cst_207 = arith.constant dense<0xFF800000> : vector<8xf32>
    %946 = vector.multi_reduction <maximumf>, %945, %cst_207 [1] : vector<8x128xf32> to vector<8xf32>
    %947 = vector.shape_cast %946 : vector<8xf32> to vector<8x1xf32>
    %948 = vector.broadcast %947 : vector<8x1xf32> to vector<8x128xf32>
    %949 = arith.cmpf oeq, %945, %948 : vector<8x128xf32>
    %c128_i32_208 = arith.constant 128 : i32
    %950 = vector.broadcast %c128_i32_208 : i32 to vector<8x128xi32>
    %951 = arith.select %949, %488, %950 : vector<8x128xi1>, vector<8x128xi32>
    %cst_209 = arith.constant dense<2147483647> : vector<8xi32>
    %952 = vector.multi_reduction <minsi>, %951, %cst_209 [1] : vector<8x128xi32> to vector<8xi32>
    %953 = vector.shape_cast %952 : vector<8xi32> to vector<8x1xi32>
    %c6_210 = arith.constant 6 : index
    %954 = memref.load %arg2[%c6_210] : memref<8xi32, #tpu.memory_space<smem>>
    %c0_i32_211 = arith.constant 0 : i32
    %955 = arith.cmpi ne, %954, %c0_i32_211 : i32
    %c0_212 = arith.constant 0 : index
    %c6_213 = arith.constant 6 : index
    %956 = vector.load %arg1[%c0_212, %c6_213] : memref<8x8xi32, #tpu.memory_space<vmem>>, vector<8x1xi32>
    %957 = arith.select %955, %956, %953 : vector<8x1xi32>
    %958 = vector.broadcast %957 : vector<8x1xi32> to vector<8x16xi32>
    %959 = arith.cmpi eq, %487, %958 : vector<8x16xi32>
    %960 = arith.extui %959 : vector<8x16xi1> to vector<8x16xi32>
    %961 = arith.sitofp %960 : vector<8x16xi32> to vector<8x16xf32>
    %962 = arith.truncf %961 : vector<8x16xf32> to vector<8x16xbf16>
    %cst_214 = arith.constant dense<0.000000e+00> : vector<8x32xf32>
    %963 = tpu.matmul %962, %17, %cst_214 {dimension_numbers = #tpu.dot_dimension_numbers<[1], [0], [0], [1], [0, 0, 1, 1], [], []>} : vector<8x16xbf16>, vector<16x32xbf16>, vector<8x32xf32> -> vector<8x32xf32>
    %964 = tpu.concatenate %963, %910 in 1 : vector<8x32xf32>, vector<8x32xf32> -> vector<8x64xf32>
    %965 = arith.truncf %964 : vector<8x64xf32> to vector<8x64xbf16>
    %cst_215 = arith.constant dense<0.000000e+00> : vector<8x128xf32>
    %966 = tpu.matmul %965, %8, %cst_215 {dimension_numbers = #tpu.dot_dimension_numbers<[1], [0], [0], [1], [0, 0, 1, 1], [], []>} : vector<8x64xbf16>, vector<64x128xbf16>, vector<8x128xf32> -> vector<8x128xf32>
    %967 = arith.addf %966, %12 : vector<8x128xf32>
    %968 = vector.extract_strided_slice %967 {offsets = [0, 0], sizes = [8, 64], strides = [1, 1]} : vector<8x128xf32> to vector<8x64xf32>
    %969 = arith.negf %968 : vector<8x64xf32>
    %970 = math.exp %969 : vector<8x64xf32>
    %cst_216 = arith.constant 1.000000e+00 : f32
    %971 = vector.broadcast %cst_216 : f32 to vector<8x64xf32>
    %972 = arith.addf %971, %970 : vector<8x64xf32>
    %973 = arith.divf %971, %972 : vector<8x64xf32>
    %974 = vector.extract_strided_slice %973 {offsets = [0, 0], sizes = [8, 32], strides = [1, 1]} : vector<8x64xf32> to vector<8x32xf32>
    %975 = vector.extract_strided_slice %973 {offsets = [0, 32], sizes = [8, 32], strides = [1, 1]} : vector<8x64xf32> to vector<8x32xf32>
    %976 = vector.extract_strided_slice %967 {offsets = [0, 64], sizes = [8, 32], strides = [1, 1]} : vector<8x128xf32> to vector<8x32xf32>
    %977 = math.tanh %976 : vector<8x32xf32>
    %978 = vector.extract_strided_slice %967 {offsets = [0, 96], sizes = [8, 32], strides = [1, 1]} : vector<8x128xf32> to vector<8x32xf32>
    %979 = arith.negf %978 : vector<8x32xf32>
    %980 = math.exp %979 : vector<8x32xf32>
    %cst_217 = arith.constant 1.000000e+00 : f32
    %981 = vector.broadcast %cst_217 : f32 to vector<8x32xf32>
    %982 = arith.addf %981, %980 : vector<8x32xf32>
    %983 = arith.divf %981, %982 : vector<8x32xf32>
    %984 = arith.mulf %975, %908 : vector<8x32xf32>
    %985 = arith.mulf %974, %977 : vector<8x32xf32>
    %986 = arith.addf %984, %985 : vector<8x32xf32>
    %987 = math.tanh %986 : vector<8x32xf32>
    %988 = arith.mulf %983, %987 : vector<8x32xf32>
    %989 = tpu.concatenate %988, %935 in 1 : vector<8x32xf32>, vector<8x32xf32> -> vector<8x64xf32>
    %990 = arith.truncf %989 : vector<8x64xf32> to vector<8x64xbf16>
    %cst_218 = arith.constant dense<0.000000e+00> : vector<8x128xf32>
    %991 = tpu.matmul %990, %9, %cst_218 {dimension_numbers = #tpu.dot_dimension_numbers<[1], [0], [0], [1], [0, 0, 1, 1], [], []>} : vector<8x64xbf16>, vector<64x128xbf16>, vector<8x128xf32> -> vector<8x128xf32>
    %992 = arith.addf %991, %15 : vector<8x128xf32>
    %993 = vector.extract_strided_slice %992 {offsets = [0, 0], sizes = [8, 64], strides = [1, 1]} : vector<8x128xf32> to vector<8x64xf32>
    %994 = arith.negf %993 : vector<8x64xf32>
    %995 = math.exp %994 : vector<8x64xf32>
    %cst_219 = arith.constant 1.000000e+00 : f32
    %996 = vector.broadcast %cst_219 : f32 to vector<8x64xf32>
    %997 = arith.addf %996, %995 : vector<8x64xf32>
    %998 = arith.divf %996, %997 : vector<8x64xf32>
    %999 = vector.extract_strided_slice %998 {offsets = [0, 0], sizes = [8, 32], strides = [1, 1]} : vector<8x64xf32> to vector<8x32xf32>
    %1000 = vector.extract_strided_slice %998 {offsets = [0, 32], sizes = [8, 32], strides = [1, 1]} : vector<8x64xf32> to vector<8x32xf32>
    %1001 = vector.extract_strided_slice %992 {offsets = [0, 64], sizes = [8, 32], strides = [1, 1]} : vector<8x128xf32> to vector<8x32xf32>
    %1002 = math.tanh %1001 : vector<8x32xf32>
    %1003 = vector.extract_strided_slice %992 {offsets = [0, 96], sizes = [8, 32], strides = [1, 1]} : vector<8x128xf32> to vector<8x32xf32>
    %1004 = arith.negf %1003 : vector<8x32xf32>
    %1005 = math.exp %1004 : vector<8x32xf32>
    %cst_220 = arith.constant 1.000000e+00 : f32
    %1006 = vector.broadcast %cst_220 : f32 to vector<8x32xf32>
    %1007 = arith.addf %1006, %1005 : vector<8x32xf32>
    %1008 = arith.divf %1006, %1007 : vector<8x32xf32>
    %1009 = arith.mulf %1000, %933 : vector<8x32xf32>
    %1010 = arith.mulf %999, %1002 : vector<8x32xf32>
    %1011 = arith.addf %1009, %1010 : vector<8x32xf32>
    %1012 = math.tanh %1011 : vector<8x32xf32>
    %1013 = arith.mulf %1008, %1012 : vector<8x32xf32>
    %1014 = arith.truncf %1013 : vector<8x32xf32> to vector<8x32xbf16>
    %cst_221 = arith.constant dense<0.000000e+00> : vector<8x128xf32>
    %1015 = tpu.matmul %1014, %18, %cst_221 {dimension_numbers = #tpu.dot_dimension_numbers<[1], [0], [0], [1], [0, 0, 1, 1], [], []>} : vector<8x32xbf16>, vector<32x128xbf16>, vector<8x128xf32> -> vector<8x128xf32>
    %1016 = arith.addf %1015, %21 : vector<8x128xf32>
    %c7_222 = arith.constant 7 : index
    %c0_223 = arith.constant 0 : index
    %c0_224 = arith.constant 0 : index
    %1017 = vector.load %arg15[%c7_222, %c0_223, %c0_224] : memref<8x8x128xf32, #tpu.memory_space<vmem>>, vector<1x8x128xf32>
    %1018 = vector.shape_cast %1017 : vector<1x8x128xf32> to vector<8x128xf32>
    %1019 = vector.shape_cast %1016 : vector<8x128xf32> to vector<1x8x128xf32>
    tpu.vector_store %arg15[%c7_222, %c0_223, %c0_224], %1019 {strides = array<i32>} : memref<8x8x128xf32, #tpu.memory_space<vmem>>, vector<1x8x128xf32>,
    return
  }
}

</mosaic_0001>

<llo_original>
// kernel: _forward_jit.1
$region0: #{_forward_jit.1}
  #allocation0 [shape = 'u32[]', space=smem, size = 0x4, offset = 0x4, fixed_abs, tag = 'smem constant byte address 0x4 - core index']
  #allocation1 [shape = 'u32[144,128]{1,0:T(1,128)}', space=vmem, size = 0x12000, scoped, tag = 'internal scratch']
  %s0 = inlined_call_operand.vmem [shape: s32[8,8], index: 0, kind: input, shape index: {}]
  %s1 = inlined_call_operand.vmem [shape: s32[8,8], index: 1, kind: input, shape index: {}]
  %s2 = inlined_call_operand.hbm [shape: s32[8], index: 2, kind: input, shape index: {}]
  %s3 = inlined_call_operand.hbm [shape: bf16[16,32], index: 3, kind: input, shape index: {}]
  %s4 = inlined_call_operand.vmem [shape: bf16[64,128], index: 4, kind: input, shape index: {}]
  %s5 = inlined_call_operand.hbm [shape: f32[1,128], index: 5, kind: input, shape index: {}]
  %s6 = inlined_call_operand.hbm [shape: bf16[64,128], index: 6, kind: input, shape index: {}]
  %s7 = inlined_call_operand.hbm [shape: f32[1,128], index: 7, kind: input, shape index: {}]
  %s8 = inlined_call_operand.hbm [shape: bf16[16,32], index: 8, kind: input, shape index: {}]
  %s9 = inlined_call_operand.hbm [shape: bf16[64,128], index: 9, kind: input, shape index: {}]
  %s10 = inlined_call_operand.vmem [shape: f32[1,128], index: 10, kind: input, shape index: {}]
  %s11 = inlined_call_operand.hbm [shape: bf16[64,128], index: 11, kind: input, shape index: {}]
  %s12 = inlined_call_operand.vmem [shape: f32[1,128], index: 12, kind: input, shape index: {}]
  %s13 = inlined_call_operand.vmem [shape: bf16[32,128], index: 13, kind: input, shape index: {}]
  %s14 = inlined_call_operand.vmem [shape: f32[1,128], index: 14, kind: input, shape index: {}]
  %s15 = inlined_call_operand.vmem [shape: f32[8,8,128], index: 15, kind: output, shape index: {}]
  %s16 = sld [smem:[#allocation0]]
  $region102: #{_forward_jit.1} parent=0
    _
  %s18 = ssub.s32 1, %s16
  %s19 = scalar_select 0, %s18, %s16
  $region1: #{_forward_jit.1} parent=0
    #allocation2 [shape = 'u8[512]{0}', space=smem, size = 0x200, scoped, tag = 'input window, operand 2, single buffered']
    #allocation3 [shape = 's32[1]{0}', space=sflag, size = 0x4, scoped, tag = 'scoped memory for _forward_jit.1']
    #allocation4 [shape = 's32[1]{0}', space=sflag, size = 0x4, scoped, tag = 'scoped memory for _forward_jit.1']
    #allocation5 [shape = 'u8[4096]{0}', space=vmem, size = 0x1000, scoped, tag = 'input window, operand 3, single buffered']
    #allocation6 [shape = 'u8[512]{0}', space=vmem, size = 0x400, scoped, tag = 'input window, operand 5, single buffered']
    #allocation7 [shape = 's32[1]{0}', space=sflag, size = 0x4, scoped, tag = 'scoped memory for _forward_jit.1']
    #allocation8 [shape = 'u8[16384]{0}', space=vmem, size = 0x4000, scoped, tag = 'input window, operand 6, single buffered']
    #allocation9 [shape = 'u8[512]{0}', space=vmem, size = 0x400, scoped, tag = 'input window, operand 7, single buffered']
    #allocation10 [shape = 's32[1]{0}', space=sflag, size = 0x4, scoped, tag = 'scoped memory for _forward_jit.1']
    #allocation11 [shape = 'u8[4096]{0}', space=vmem, size = 0x1000, scoped, tag = 'input window, operand 8, single buffered']
    #allocation12 [shape = 'u8[16384]{0}', space=vmem, size = 0x4000, scoped, tag = 'input window, operand 9, single buffered']
    #allocation13 [shape = 's32[1]{0}', space=sflag, size = 0x4, scoped, tag = 'scoped memory for _forward_jit.1']
    #allocation14 [shape = 'u8[16384]{0}', space=vmem, size = 0x4000, scoped, tag = 'input window, operand 11, single buffered']
    %20 = vsyncpa [#allocation4], 0
    %21 = vsyncpa [#allocation3], 0
    %22 = vsyncpa [#allocation7], 0
    %23 = vsyncpa [#allocation10], 0
    %24 = vsyncpa [#allocation13], 0
    // Predicated region
    $region2: #{_forward_jit.1} parent=1 // pred_check
      _
    $region3: #{_forward_jit.1} parent=1 // pred_check_branch
      %26 = sbr.rel (0) target = $region5
    $region4: #{_forward_jit.1} parent=1 // pred_region
      _
    $region5: #{_forward_jit.1} parent=1 // pred_fallthru
      _
    // Predicated region
    $region6: #{_forward_jit.1} parent=1 // pred_check
      _
    $region7: #{_forward_jit.1} parent=1 // pred_check_branch
      %28 = sbr.rel (0) target = $region9
    $region8: #{_forward_jit.1} parent=1 // pred_region
      _
    $region9: #{_forward_jit.1} parent=1 // pred_fallthru
      _
    // Predicated region
    $region10: #{_forward_jit.1} parent=1 // pred_check
      _
    $region11: #{_forward_jit.1} parent=1 // pred_check_branch
      %30 = sbr.rel (0) target = $region13
    $region12: #{_forward_jit.1} parent=1 // pred_region
      %s32 = ssub.s32 16, 16
      %33 = vsyncadd [#allocation4], %s32
      %36 = dma.hbm_to_smem %s2, 16, [#allocation2], [#allocation4]
    $region13: #{_forward_jit.1} parent=1 // pred_fallthru
      _
    // Predicated region
    $region14: #{_forward_jit.1} parent=1 // pred_check
      _
    $region15: #{_forward_jit.1} parent=1 // pred_check_branch
      %38 = sbr.rel (0) target = $region17
    $region16: #{_forward_jit.1} parent=1 // pred_region
      %s40 = ssub.s32 128, 128
      %41 = vsyncadd [#allocation3], %s40
      %s42 = sshll.u32 [#allocation5], 4
      %s43 = int_to_ptr.vmem [resolvable:$true] %s42
      %48 = dma.hbm_to_vmem [thread:$0]  %s3, 128, %s43, [#allocation3], 64, 64, 4
    $region17: #{_forward_jit.1} parent=1 // pred_fallthru
      _
    // Predicated region
    $region18: #{_forward_jit.1} parent=1 // pred_check
      _
    $region19: #{_forward_jit.1} parent=1 // pred_check_branch
      %50 = sbr.rel (0) target = $region21
    $region20: #{_forward_jit.1} parent=1 // pred_region
      _
    $region21: #{_forward_jit.1} parent=1 // pred_fallthru
      _
    // Predicated region
    $region22: #{_forward_jit.1} parent=1 // pred_check
      _
    $region23: #{_forward_jit.1} parent=1 // pred_check_branch
      %52 = sbr.rel (0) target = $region25
    $region24: #{_forward_jit.1} parent=1 // pred_region
      %s54 = ssub.s32 16, 16
      %55 = vsyncadd [#allocation7], %s54
      %s57 = sshll.u32 [#allocation6], 4
      %s58 = int_to_ptr.vmem [resolvable:$true] %s57
      %60 = dma.hbm_to_vmem [thread:$0]  %s5, 16, %s58, [#allocation7]
    $region25: #{_forward_jit.1} parent=1 // pred_fallthru
      _
    // Predicated region
    $region26: #{_forward_jit.1} parent=1 // pred_check
      _
    $region27: #{_forward_jit.1} parent=1 // pred_check_branch
      %62 = sbr.rel (0) target = $region29
    $region28: #{_forward_jit.1} parent=1 // pred_region
      %s64 = ssub.s32 512, 512
      %65 = vsyncadd [#allocation7], %s64
      %s66 = sshll.u32 [#allocation8], 4
      %s67 = int_to_ptr.vmem [resolvable:$true] %s66
      %72 = dma.hbm_to_vmem [thread:$0]  %s6, 512, %s67, [#allocation7], 64, 64, 4
    $region29: #{_forward_jit.1} parent=1 // pred_fallthru
      _
    // Predicated region
    $region30: #{_forward_jit.1} parent=1 // pred_check
      _
    $region31: #{_forward_jit.1} parent=1 // pred_check_branch
      %74 = sbr.rel (0) target = $region33
    $region32: #{_forward_jit.1} parent=1 // pred_region
      %s76 = ssub.s32 16, 16
      %77 = vsyncadd [#allocation10], %s76
      %s79 = sshll.u32 [#allocation9], 4
      %s80 = int_to_ptr.vmem [resolvable:$true] %s79
      %82 = dma.hbm_to_vmem [thread:$0]  %s7, 16, %s80, [#allocation10]
    $region33: #{_forward_jit.1} parent=1 // pred_fallthru
      _
    // Predicated region
    $region34: #{_forward_jit.1} parent=1 // pred_check
      _
    $region35: #{_forward_jit.1} parent=1 // pred_check_branch
      %84 = sbr.rel (0) target = $region37
    $region36: #{_forward_jit.1} parent=1 // pred_region
      %s86 = ssub.s32 128, 128
      %87 = vsyncadd [#allocation10], %s86
      %s88 = sshll.u32 [#allocation11], 4
      %s89 = int_to_ptr.vmem [resolvable:$true] %s88
      %94 = dma.hbm_to_vmem [thread:$0]  %s8, 128, %s89, [#allocation10], 64, 64, 4
    $region37: #{_forward_jit.1} parent=1 // pred_fallthru
      _
    // Predicated region
    $region38: #{_forward_jit.1} parent=1 // pred_check
      _
    $region39: #{_forward_jit.1} parent=1 // pred_check_branch
      %96 = sbr.rel (0) target = $region41
    $region40: #{_forward_jit.1} parent=1 // pred_region
      %s98 = ssub.s32 512, 512
      %99 = vsyncadd [#allocation13], %s98
      %s100 = sshll.u32 [#allocation12], 4
      %s101 = int_to_ptr.vmem [resolvable:$true] %s100
      %106 = dma.hbm_to_vmem [thread:$0]  %s9, 512, %s101, [#allocation13], 64, 64, 4
    $region41: #{_forward_jit.1} parent=1 // pred_fallthru
      _
    // Predicated region
    $region42: #{_forward_jit.1} parent=1 // pred_check
      _
    $region43: #{_forward_jit.1} parent=1 // pred_check_branch
      %108 = sbr.rel (0) target = $region45
    $region44: #{_forward_jit.1} parent=1 // pred_region
      _
    $region45: #{_forward_jit.1} parent=1 // pred_fallthru
      _
    // Predicated region
    $region46: #{_forward_jit.1} parent=1 // pred_check
      _
    $region47: #{_forward_jit.1} parent=1 // pred_check_branch
      %110 = sbr.rel (0) target = $region49
    $region48: #{_forward_jit.1} parent=1 // pred_region
      %s112 = ssub.s32 512, 512
      %113 = vsyncadd [#allocation13], %s112
      %s114 = sshll.u32 [#allocation14], 4
      %s115 = int_to_ptr.vmem [resolvable:$true] %s114
      %120 = dma.hbm_to_vmem [thread:$0]  %s11, 512, %s115, [#allocation13], 64, 64, 4
    $region49: #{_forward_jit.1} parent=1 // pred_fallthru
      _
    // Predicated region
    $region50: #{_forward_jit.1} parent=1 // pred_check
      _
    $region51: #{_forward_jit.1} parent=1 // pred_check_branch
      %122 = sbr.rel (0) target = $region53
    $region52: #{_forward_jit.1} parent=1 // pred_region
      _
    $region53: #{_forward_jit.1} parent=1 // pred_fallthru
      _
    // Predicated region
    $region54: #{_forward_jit.1} parent=1 // pred_check
      _
    $region55: #{_forward_jit.1} parent=1 // pred_check_branch
      %124 = sbr.rel (0) target = $region57
    $region56: #{_forward_jit.1} parent=1 // pred_region
      _
    $region57: #{_forward_jit.1} parent=1 // pred_fallthru
      _
    // Predicated region
    $region58: #{_forward_jit.1} parent=1 // pred_check
      _
    $region59: #{_forward_jit.1} parent=1 // pred_check_branch
      %126 = sbr.rel (0) target = $region61
    $region60: #{_forward_jit.1} parent=1 // pred_region
      _
    $region61: #{_forward_jit.1} parent=1 // pred_fallthru
      _
    // Predicated region
    $region62: #{_forward_jit.1} parent=1 // pred_check
      _
    $region63: #{_forward_jit.1} parent=1 // pred_check_branch
      %128 = sbr.rel (0) target = $region65
    $region64: #{_forward_jit.1} parent=1 // pred_region
      %129 = dma.done [#allocation4], 16
    $region65: #{_forward_jit.1} parent=1 // pred_fallthru
      _
    // Predicated region
    $region66: #{_forward_jit.1} parent=1 // pred_check
      _
    $region67: #{_forward_jit.1} parent=1 // pred_check_branch
      %131 = sbr.rel (0) target = $region69
    $region68: #{_forward_jit.1} parent=1 // pred_region
      %132 = dma.done [#allocation3], 128
    $region69: #{_forward_jit.1} parent=1 // pred_fallthru
      _
    // Predicated region
    $region70: #{_forward_jit.1} parent=1 // pred_check
      _
    $region71: #{_forward_jit.1} parent=1 // pred_check_branch
      %134 = sbr.rel (0) target = $region73
    $region72: #{_forward_jit.1} parent=1 // pred_region
      %135 = dma.done [#allocation7], 16
    $region73: #{_forward_jit.1} parent=1 // pred_fallthru
      _
    // Predicated region
    $region74: #{_forward_jit.1} parent=1 // pred_check
      _
    $region75: #{_forward_jit.1} parent=1 // pred_check_branch
      %137 = sbr.rel (0) target = $region77
    $region76: #{_forward_jit.1} parent=1 // pred_region
      %138 = dma.done [#allocation7], 512
    $region77: #{_forward_jit.1} parent=1 // pred_fallthru
      _
    // Predicated region
    $region78: #{_forward_jit.1} parent=1 // pred_check
      _
    $region79: #{_forward_jit.1} parent=1 // pred_check_branch
      %140 = sbr.rel (0) target = $region81
    $region80: #{_forward_jit.1} parent=1 // pred_region
      %141 = dma.done [#allocation10], 16
    $region81: #{_forward_jit.1} parent=1 // pred_fallthru
      _
    // Predicated region
    $region82: #{_forward_jit.1} parent=1 // pred_check
      _
    $region83: #{_forward_jit.1} parent=1 // pred_check_branch
      %143 = sbr.rel (0) target = $region85
    $region84: #{_forward_jit.1} parent=1 // pred_region
      %144 = dma.done [#allocation10], 128
    $region85: #{_forward_jit.1} parent=1 // pred_fallthru
      _
    // Predicated region
    $region86: #{_forward_jit.1} parent=1 // pred_check
      _
    $region87: #{_forward_jit.1} parent=1 // pred_check_branch
      %146 = sbr.rel (0) target = $region89
    $region88: #{_forward_jit.1} parent=1 // pred_region
      %147 = dma.done [#allocation13], 512
    $region89: #{_forward_jit.1} parent=1 // pred_fallthru
      _
    // Predicated region
    $region90: #{_forward_jit.1} parent=1 // pred_check
      _
    $region91: #{_forward_jit.1} parent=1 // pred_check_branch
      %149 = sbr.rel (0) target = $region93
    $region92: #{_forward_jit.1} parent=1 // pred_region
      %150 = dma.done [#allocation13], 512
    $region93: #{_forward_jit.1} parent=1 // pred_fallthru
      _
    %151 = sfence
    %v153 = vld [vmem:[%s4] sm:$0xf]
    %v154 = vld [vmem:[%s4 + $0x4] sm:$0xf]
    %v155 = vld [vmem:[%s4 + $0x8] sm:$0xf]
    %v156 = vld [vmem:[%s4 + $0xc] sm:$0xf]
    %v157 = vld [vmem:[%s4 + $0x10] sm:$0xf]
    %v158 = vld [vmem:[%s4 + $0x14] sm:$0xf]
    %v159 = vld [vmem:[%s4 + $0x18] sm:$0xf]
    %v160 = vld [vmem:[%s4 + $0x1c] sm:$0xf]
    %v161 = vld [vmem:[#allocation8] sm:$0xf]
    %v162 = vld [vmem:[#allocation8 + $0x4] sm:$0xf]
    %v163 = vld [vmem:[#allocation8 + $0x8] sm:$0xf]
    %v164 = vld [vmem:[#allocation8 + $0xc] sm:$0xf]
    %v165 = vld [vmem:[#allocation8 + $0x10] sm:$0xf]
    %v166 = vld [vmem:[#allocation8 + $0x14] sm:$0xf]
    %v167 = vld [vmem:[#allocation8 + $0x18] sm:$0xf]
    %v168 = vld [vmem:[#allocation8 + $0x1c] sm:$0xf]
    %v169 = vld [vmem:[#allocation6] sm:$0x1]
    %v171 = vlaneseq
    %v172 = vshrl.u32 %v171, 7
    %v173 = vsub.s32 0, %v172
    %v174 = vrot.slane %v169, %v173
    %v176 = vld [vmem:[#allocation9] sm:$0x1]
    %v178 = vlaneseq
    %v179 = vshrl.u32 %v178, 7
    %v180 = vsub.s32 0, %v179
    %v181 = vrot.slane %v176, %v180
    %v183 = vld [vmem:[#allocation12] sm:$0xf]
    %v184 = vld [vmem:[#allocation12 + $0x4] sm:$0xf]
    %v185 = vld [vmem:[#allocation12 + $0x8] sm:$0xf]
    %v186 = vld [vmem:[#allocation12 + $0xc] sm:$0xf]
    %v187 = vld [vmem:[#allocation12 + $0x10] sm:$0xf]
    %v188 = vld [vmem:[#allocation12 + $0x14] sm:$0xf]
    %v189 = vld [vmem:[#allocation12 + $0x18] sm:$0xf]
    %v190 = vld [vmem:[#allocation12 + $0x1c] sm:$0xf]
    %v191 = vld [vmem:[#allocation14] sm:$0xf]
    %v192 = vld [vmem:[#allocation14 + $0x4] sm:$0xf]
    %v193 = vld [vmem:[#allocation14 + $0x8] sm:$0xf]
    %v194 = vld [vmem:[#allocation14 + $0xc] sm:$0xf]
    %v195 = vld [vmem:[#allocation14 + $0x10] sm:$0xf]
    %v196 = vld [vmem:[#allocation14 + $0x14] sm:$0xf]
    %v197 = vld [vmem:[#allocation14 + $0x18] sm:$0xf]
    %v198 = vld [vmem:[#allocation14 + $0x1c] sm:$0xf]
    %v199 = vld [vmem:[%s10] sm:$0x1]
    %v201 = vlaneseq
    %v202 = vshrl.u32 %v201, 7
    %v203 = vsub.s32 0, %v202
    %v204 = vrot.slane %v199, %v203
    %v206 = vld [vmem:[%s12] sm:$0x1]
    %v208 = vlaneseq
    %v209 = vshrl.u32 %v208, 7
    %v210 = vsub.s32 0, %v209
    %v211 = vrot.slane %v206, %v210
    %v213 = vld [vmem:[#allocation5] sm:$0xf]
    %v214 = vld [vmem:[#allocation5 + $0x4] sm:$0xf]
    %v215 = vld [vmem:[#allocation11] sm:$0xf]
    %v216 = vld [vmem:[#allocation11 + $0x4] sm:$0xf]
    %v217 = vld [vmem:[%s13] sm:$0xf]
    %v218 = vld [vmem:[%s13 + $0x4] sm:$0xf]
    %v219 = vld [vmem:[%s13 + $0x8] sm:$0xf]
    %v220 = vld [vmem:[%s13 + $0xc] sm:$0xf]
    %v221 = vld [vmem:[%s14] sm:$0x1]
    %v223 = vlaneseq
    %v224 = vshrl.u32 %v223, 7
    %v225 = vsub.s32 0, %v224
    %v226 = vrot.slane %v221, %v225
    %228 = vst [vmem:[%s15] sm:$0xff] 0.0
    %v229 = vlaneseq
    %v230 = vand.u32 %v229, 127
    %v231 = vld [vmem:[%s0] sm:$0xff]
    %232 = vset.pattern.permute.xlu0 0
    %233 = vperm.xlu0 %232, %v231
    %v234 = vpop.permute.xlu0 %233
    %vm235 = vcmp.eq.s32.totalorder %v230, %v234
    %v236 = vsel %vm235, 1, 0
    %v237 = vcvt.s32.f32 %v236
    %v238 = vpack.c.bf16 %v237, %v237
    %v241 = vunpack.c.l.b16 %v213
    %v242 = vunpack.c.l.b16 %v214
    %v243 = vpack.c.b16 %v242, %v241
    %vm245 = vcmask 130048
    %v247 = vsel %vm245, %v238, 0
    %249 = vmatprep.subr.bf16.mxu0 0
    %250 = vmatpush1.bf16.msra.mxu0 0
    %251 = vmatprep.subr.bf16.mxu0 0
    %252 = vmatpush1.bf16.msra.mxu0 0
    %253 = vmatprep.subr.bf16.mxu0 0
    %254 = vmatpush1.bf16.msra.mxu0 0
    %255 = vmatprep.subr.bf16.mxu0 0
    %256 = vmatpush1.bf16.msra.mxu0 0
    %257 = vmatprep.subr.bf16.mxu0 0
    %258 = vmatpush1.bf16.msra.mxu0 0
    %259 = vmatprep.subr.bf16.mxu0 0
    %260 = vmatpush1.bf16.msra.mxu0 0
    %261 = vmatprep.subr.bf16.mxu0 0
    %262 = vmatpush1.bf16.msra.mxu0 0
    %263 = vmatprep.subr.bf16.mxu0 0
    %264 = vmatpush1.bf16.msra.mxu0 %v243
    %265 = vmatprep.subr.bf16.mxu0 0
    %266 = vmatpush2.bf16.msra.mxu0 0
    %267 = vmatprep.subr.bf16.mxu0 0
    %268 = vmatpush2.bf16.msra.mxu0 0
    %269 = vmatprep.subr.bf16.mxu0 0
    %270 = vmatpush2.bf16.msra.mxu0 0
    %271 = vmatprep.subr.bf16.mxu0 0
    %272 = vmatpush2.bf16.msra.mxu0 0
    %273 = vmatprep.subr.bf16.mxu0 0
    %274 = vmatpush2.bf16.msra.mxu0 0
    %275 = vmatprep.subr.bf16.mxu0 0
    %276 = vmatpush2.bf16.msra.mxu0 0
    %277 = vmatprep.subr.bf16.mxu0 0
    %278 = vmatpush2.bf16.msra.mxu0 0
    %279 = vmatprep.subr.bf16.mxu0 0
    %280 = vmatpush2.bf16.msra.mxu0 0
    %281 = vmatprep.mubr.bf16.mxu0 0
    %282 = vmatmul.mubr.bf16.gmra.mxu0 %v247
    %v283 = vpop.f32.mrf.mxu0
    %v284 = vadd.f32 0.0, %v283
    %v285 = vpop.f32.mrf.mxu0
    %v286 = vpop.f32.mrf.mxu0
    %v287 = vpop.f32.mrf.mxu0
    %288 = vdwg.mxu0
    %vm289 = vcmask 261120
    %v290 = vsel %vm289, %v284, 0.0
    %v291 = vpack.c.bf16 %v290, %v290
    %v300 = vunpack.c.l.b16 %v153
    %v301 = vunpack.c.l.b16 %v154
    %v302 = vunpack.c.l.b16 %v155
    %v303 = vunpack.c.l.b16 %v156
    %v304 = vunpack.c.l.b16 %v157
    %v305 = vunpack.c.l.b16 %v158
    %v306 = vunpack.c.l.b16 %v159
    %v307 = vunpack.c.l.b16 %v160
    %v308 = vpack.c.b16 %v301, %v300
    %v309 = vpack.c.b16 %v303, %v302
    %v310 = vpack.c.b16 %v305, %v304
    %v311 = vpack.c.b16 %v307, %v306
    %vm316 = vcmask 523264
    %v318 = vsel %vm316, %v291, 0
    %320 = vmatprep.subr.bf16.mxu0 0
    %321 = vmatpush1.bf16.msra.mxu0 0
    %322 = vmatprep.subr.bf16.mxu0 0
    %323 = vmatpush1.bf16.msra.mxu0 0
    %324 = vmatprep.subr.bf16.mxu0 0
    %325 = vmatpush1.bf16.msra.mxu0 0
    %326 = vmatprep.subr.bf16.mxu0 0
    %327 = vmatpush1.bf16.msra.mxu0 0
    %328 = vmatprep.subr.bf16.mxu0 0
    %329 = vmatpush1.bf16.msra.mxu0 %v311
    %330 = vmatprep.subr.bf16.mxu0 0
    %331 = vmatpush1.bf16.msra.mxu0 %v310
    %332 = vmatprep.subr.bf16.mxu0 0
    %333 = vmatpush1.bf16.msra.mxu0 %v309
    %334 = vmatprep.subr.bf16.mxu0 0
    %335 = vmatpush1.bf16.msra.mxu0 %v308
    %336 = vmatprep.subr.bf16.mxu0 0
    %337 = vmatpush2.bf16.msra.mxu0 0
    %338 = vmatprep.subr.bf16.mxu0 0
    %339 = vmatpush2.bf16.msra.mxu0 0
    %340 = vmatprep.subr.bf16.mxu0 0
    %341 = vmatpush2.bf16.msra.mxu0 0
    %342 = vmatprep.subr.bf16.mxu0 0
    %343 = vmatpush2.bf16.msra.mxu0 0
    %344 = vmatprep.subr.bf16.mxu0 0
    %345 = vmatpush2.bf16.msra.mxu0 0
    %346 = vmatprep.subr.bf16.mxu0 0
    %347 = vmatpush2.bf16.msra.mxu0 0
    %348 = vmatprep.subr.bf16.mxu0 0
    %349 = vmatpush2.bf16.msra.mxu0 0
    %350 = vmatprep.subr.bf16.mxu0 0
    %351 = vmatpush2.bf16.msra.mxu0 0
    %352 = vmatprep.mubr.bf16.mxu0 0
    %353 = vmatmul.mubr.bf16.gmra.mxu0 %v318
    %v354 = vpop.f32.mrf.mxu0
    %v355 = vadd.f32 %v174, %v354
    %v356 = vpop.f32.mrf.mxu0
    %v357 = vpop.f32.mrf.mxu0
    %v358 = vpop.f32.mrf.mxu0
    %359 = vdwg.mxu0
    %v360 = vxor.u32 %v355, 2147483648
    %v361 = vmul.f32 %v360, 1.442695
    %v362 = vpow.pop %v361
    %v363 = vadd.f32 %v362, 1.0
    %v364 = vrcp.pop %v363
    %v365 = vmul.f32 1.0, %v364
    %v366 = vtanh.pop %v355
    %v367 = vmul.f32 %v365, 0.0
    %369 = vrot.lane.b32.xlu0 %v366, 64
    %v370 = vpop.permute.xlu0 %369
    %v372 = vmul.f32 %v365, %v370
    %374 = vrot.lane.b32.xlu0 %v372, 32
    %v375 = vpop.permute.xlu0 %374
    %v377 = vadd.f32 %v367, %v375
    %v378 = vtanh.pop %v377
    %380 = vrot.lane.b32.xlu0 %v378, 64
    %v381 = vpop.permute.xlu0 %380
    %v383 = vmul.f32 %v365, %v381
    %385 = vrot.lane.b32.xlu0 %v383, 32
    %v386 = vpop.permute.xlu0 %385
    %v388 = vsel %vm289, %v386, 0.0
    %v389 = vpack.c.bf16 %v388, %v388
    %v398 = vunpack.c.l.b16 %v161
    %v399 = vunpack.c.l.b16 %v162
    %v400 = vunpack.c.l.b16 %v163
    %v401 = vunpack.c.l.b16 %v164
    %v402 = vunpack.c.l.b16 %v165
    %v403 = vunpack.c.l.b16 %v166
    %v404 = vunpack.c.l.b16 %v167
    %v405 = vunpack.c.l.b16 %v168
    %v406 = vpack.c.b16 %v399, %v398
    %v407 = vpack.c.b16 %v401, %v400
    %v408 = vpack.c.b16 %v403, %v402
    %v409 = vpack.c.b16 %v405, %v404
    %v415 = vsel %vm316, %v389, 0
    %417 = vmatprep.subr.bf16.mxu0 0
    %418 = vmatpush1.bf16.msra.mxu0 0
    %419 = vmatprep.subr.bf16.mxu0 0
    %420 = vmatpush1.bf16.msra.mxu0 0
    %421 = vmatprep.subr.bf16.mxu0 0
    %422 = vmatpush1.bf16.msra.mxu0 0
    %423 = vmatprep.subr.bf16.mxu0 0
    %424 = vmatpush1.bf16.msra.mxu0 0
    %425 = vmatprep.subr.bf16.mxu0 0
    %426 = vmatpush1.bf16.msra.mxu0 %v409
    %427 = vmatprep.subr.bf16.mxu0 0
    %428 = vmatpush1.bf16.msra.mxu0 %v408
    %429 = vmatprep.subr.bf16.mxu0 0
    %430 = vmatpush1.bf16.msra.mxu0 %v407
    %431 = vmatprep.subr.bf16.mxu0 0
    %432 = vmatpush1.bf16.msra.mxu0 %v406
    %433 = vmatprep.subr.bf16.mxu0 0
    %434 = vmatpush2.bf16.msra.mxu0 0
    %435 = vmatprep.subr.bf16.mxu0 0
    %436 = vmatpush2.bf16.msra.mxu0 0
    %437 = vmatprep.subr.bf16.mxu0 0
    %438 = vmatpush2.bf16.msra.mxu0 0
    %439 = vmatprep.subr.bf16.mxu0 0
    %440 = vmatpush2.bf16.msra.mxu0 0
    %441 = vmatprep.subr.bf16.mxu0 0
    %442 = vmatpush2.bf16.msra.mxu0 0
    %443 = vmatprep.subr.bf16.mxu0 0
    %444 = vmatpush2.bf16.msra.mxu0 0
    %445 = vmatprep.subr.bf16.mxu0 0
    %446 = vmatpush2.bf16.msra.mxu0 0
    %447 = vmatprep.subr.bf16.mxu0 0
    %448 = vmatpush2.bf16.msra.mxu0 0
    %449 = vmatprep.mubr.bf16.mxu0 0
    %450 = vmatmul.mubr.bf16.gmra.mxu0 %v415
    %v451 = vpop.f32.mrf.mxu0
    %v452 = vadd.f32 %v181, %v451
    %v453 = vpop.f32.mrf.mxu0
    %v454 = vpop.f32.mrf.mxu0
    %v455 = vpop.f32.mrf.mxu0
    %456 = vdwg.mxu0
    %v457 = vxor.u32 %v452, 2147483648
    %v458 = vmul.f32 %v457, 1.442695
    %v459 = vpow.pop %v458
    %v460 = vadd.f32 %v459, 1.0
    %v461 = vrcp.pop %v460
    %v462 = vmul.f32 1.0, %v461
    %v463 = vtanh.pop %v452
    %v464 = vmul.f32 %v462, 0.0
    %466 = vrot.lane.b32.xlu0 %v463, 64
    %v467 = vpop.permute.xlu0 %466
    %v469 = vmul.f32 %v462, %v467
    %471 = vrot.lane.b32.xlu0 %v469, 32
    %v472 = vpop.permute.xlu0 %471
    %v474 = vadd.f32 %v464, %v472
    %v475 = vtanh.pop %v474
    %477 = vrot.lane.b32.xlu0 %v475, 64
    %v478 = vpop.permute.xlu0 %477
    %v480 = vmul.f32 %v462, %v478
    %481 = vset.pattern.permute.xlu0 1
    %482 = vperm.xlu0 %481, %v231
    %v483 = vpop.permute.xlu0 %482
    %vm484 = vcmp.eq.s32.totalorder %v230, %v483
    %v485 = vsel %vm484, 1, 0
    %v486 = vcvt.s32.f32 %v485
    %v487 = vpack.c.bf16 %v486, %v486
    %v489 = vsel %vm245, %v487, 0
    %491 = vmatprep.subr.bf16.mxu0 0
    %492 = vmatpush1.bf16.msra.mxu0 0
    %493 = vmatprep.subr.bf16.mxu0 0
    %494 = vmatpush1.bf16.msra.mxu0 0
    %495 = vmatprep.subr.bf16.mxu0 0
    %496 = vmatpush1.bf16.msra.mxu0 0
    %497 = vmatprep.subr.bf16.mxu0 0
    %498 = vmatpush1.bf16.msra.mxu0 0
    %499 = vmatprep.subr.bf16.mxu0 0
    %500 = vmatpush1.bf16.msra.mxu0 0
    %501 = vmatprep.subr.bf16.mxu0 0
    %502 = vmatpush1.bf16.msra.mxu0 0
    %503 = vmatprep.subr.bf16.mxu0 0
    %504 = vmatpush1.bf16.msra.mxu0 0
    %505 = vmatprep.subr.bf16.mxu0 0
    %506 = vmatpush1.bf16.msra.mxu0 %v243
    %507 = vmatprep.subr.bf16.mxu0 0
    %508 = vmatpush2.bf16.msra.mxu0 0
    %509 = vmatprep.subr.bf16.mxu0 0
    %510 = vmatpush2.bf16.msra.mxu0 0
    %511 = vmatprep.subr.bf16.mxu0 0
    %512 = vmatpush2.bf16.msra.mxu0 0
    %513 = vmatprep.subr.bf16.mxu0 0
    %514 = vmatpush2.bf16.msra.mxu0 0
    %515 = vmatprep.subr.bf16.mxu0 0
    %516 = vmatpush2.bf16.msra.mxu0 0
    %517 = vmatprep.subr.bf16.mxu0 0
    %518 = vmatpush2.bf16.msra.mxu0 0
    %519 = vmatprep.subr.bf16.mxu0 0
    %520 = vmatpush2.bf16.msra.mxu0 0
    %521 = vmatprep.subr.bf16.mxu0 0
    %522 = vmatpush2.bf16.msra.mxu0 0
    %523 = vmatprep.mubr.bf16.mxu0 0
    %524 = vmatmul.mubr.bf16.gmra.mxu0 %v489
    %v525 = vpop.f32.mrf.mxu0
    %v526 = vadd.f32 0.0, %v525
    %v527 = vpop.f32.mrf.mxu0
    %v528 = vpop.f32.mrf.mxu0
    %v529 = vpop.f32.mrf.mxu0
    %530 = vdwg.mxu0
    %531 = vrot.lane.b32.xlu0 %v383, 64
    %v532 = vpop.permute.xlu0 %531
    %v534 = vsel %vm289, %v526, %v532
    %v535 = vpack.c.bf16 %v534, %v534
    %v537 = vsel %vm316, %v535, 0
    %539 = vmatprep.subr.bf16.mxu0 0
    %540 = vmatpush1.bf16.msra.mxu0 0
    %541 = vmatprep.subr.bf16.mxu0 0
    %542 = vmatpush1.bf16.msra.mxu0 0
    %543 = vmatprep.subr.bf16.mxu0 0
    %544 = vmatpush1.bf16.msra.mxu0 0
    %545 = vmatprep.subr.bf16.mxu0 0
    %546 = vmatpush1.bf16.msra.mxu0 0
    %547 = vmatprep.subr.bf16.mxu0 0
    %548 = vmatpush1.bf16.msra.mxu0 %v311
    %549 = vmatprep.subr.bf16.mxu0 0
    %550 = vmatpush1.bf16.msra.mxu0 %v310
    %551 = vmatprep.subr.bf16.mxu0 0
    %552 = vmatpush1.bf16.msra.mxu0 %v309
    %553 = vmatprep.subr.bf16.mxu0 0
    %554 = vmatpush1.bf16.msra.mxu0 %v308
    %555 = vmatprep.subr.bf16.mxu0 0
    %556 = vmatpush2.bf16.msra.mxu0 0
    %557 = vmatprep.subr.bf16.mxu0 0
    %558 = vmatpush2.bf16.msra.mxu0 0
    %559 = vmatprep.subr.bf16.mxu0 0
    %560 = vmatpush2.bf16.msra.mxu0 0
    %561 = vmatprep.subr.bf16.mxu0 0
    %562 = vmatpush2.bf16.msra.mxu0 0
    %563 = vmatprep.subr.bf16.mxu0 0
    %564 = vmatpush2.bf16.msra.mxu0 0
    %565 = vmatprep.subr.bf16.mxu0 0
    %566 = vmatpush2.bf16.msra.mxu0 0
    %567 = vmatprep.subr.bf16.mxu0 0
    %568 = vmatpush2.bf16.msra.mxu0 0
    %569 = vmatprep.subr.bf16.mxu0 0
    %570 = vmatpush2.bf16.msra.mxu0 0
    %571 = vmatprep.mubr.bf16.mxu0 0
    %572 = vmatmul.mubr.bf16.gmra.mxu0 %v537
    %v573 = vpop.f32.mrf.mxu0
    %v574 = vadd.f32 %v174, %v573
    %v575 = vpop.f32.mrf.mxu0
    %v576 = vpop.f32.mrf.mxu0
    %v577 = vpop.f32.mrf.mxu0
    %578 = vdwg.mxu0
    %v579 = vxor.u32 %v574, 2147483648
    %v580 = vmul.f32 %v579, 1.442695
    %v581 = vpow.pop %v580
    %v582 = vadd.f32 %v581, 1.0
    %v583 = vrcp.pop %v582
    %v584 = vmul.f32 1.0, %v583
    %v585 = vtanh.pop %v574
    %v586 = vmul.f32 %v584, %v377
    %588 = vrot.lane.b32.xlu0 %v585, 64
    %v589 = vpop.permute.xlu0 %588
    %v591 = vmul.f32 %v584, %v589
    %593 = vrot.lane.b32.xlu0 %v591, 32
    %v594 = vpop.permute.xlu0 %593
    %v596 = vadd.f32 %v586, %v594
    %v597 = vtanh.pop %v596
    %599 = vrot.lane.b32.xlu0 %v597, 64
    %v600 = vpop.permute.xlu0 %599
    %v602 = vmul.f32 %v584, %v600
    %604 = vrot.lane.b32.xlu0 %v602, 32
    %v605 = vpop.permute.xlu0 %604
    %608 = vrot.lane.b32.xlu0 %v480, 64
    %v609 = vpop.permute.xlu0 %608
    %v611 = vsel %vm289, %v605, %v609
    %v612 = vpack.c.bf16 %v611, %v611
    %v614 = vsel %vm316, %v612, 0
    %616 = vmatprep.subr.bf16.mxu0 0
    %617 = vmatpush1.bf16.msra.mxu0 0
    %618 = vmatprep.subr.bf16.mxu0 0
    %619 = vmatpush1.bf16.msra.mxu0 0
    %620 = vmatprep.subr.bf16.mxu0 0
    %621 = vmatpush1.bf16.msra.mxu0 0
    %622 = vmatprep.subr.bf16.mxu0 0
    %623 = vmatpush1.bf16.msra.mxu0 0
    %624 = vmatprep.subr.bf16.mxu0 0
    %625 = vmatpush1.bf16.msra.mxu0 %v409
    %626 = vmatprep.subr.bf16.mxu0 0
    %627 = vmatpush1.bf16.msra.mxu0 %v408
    %628 = vmatprep.subr.bf16.mxu0 0
    %629 = vmatpush1.bf16.msra.mxu0 %v407
    %630 = vmatprep.subr.bf16.mxu0 0
    %631 = vmatpush1.bf16.msra.mxu0 %v406
    %632 = vmatprep.subr.bf16.mxu0 0
    %633 = vmatpush2.bf16.msra.mxu0 0
    %634 = vmatprep.subr.bf16.mxu0 0
    %635 = vmatpush2.bf16.msra.mxu0 0
    %636 = vmatprep.subr.bf16.mxu0 0
    %637 = vmatpush2.bf16.msra.mxu0 0
    %638 = vmatprep.subr.bf16.mxu0 0
    %639 = vmatpush2.bf16.msra.mxu0 0
    %640 = vmatprep.subr.bf16.mxu0 0
    %641 = vmatpush2.bf16.msra.mxu0 0
    %642 = vmatprep.subr.bf16.mxu0 0
    %643 = vmatpush2.bf16.msra.mxu0 0
    %644 = vmatprep.subr.bf16.mxu0 0
    %645 = vmatpush2.bf16.msra.mxu0 0
    %646 = vmatprep.subr.bf16.mxu0 0
    %647 = vmatpush2.bf16.msra.mxu0 0
    %648 = vmatprep.mubr.bf16.mxu0 0
    %649 = vmatmul.mubr.bf16.gmra.mxu0 %v614
    %v650 = vpop.f32.mrf.mxu0
    %v651 = vadd.f32 %v181, %v650
    %v652 = vpop.f32.mrf.mxu0
    %v653 = vpop.f32.mrf.mxu0
    %v654 = vpop.f32.mrf.mxu0
    %655 = vdwg.mxu0
    %v656 = vxor.u32 %v651, 2147483648
    %v657 = vmul.f32 %v656, 1.442695
    %v658 = vpow.pop %v657
    %v659 = vadd.f32 %v658, 1.0
    %v660 = vrcp.pop %v659
    %v661 = vmul.f32 1.0, %v660
    %v662 = vtanh.pop %v651
    %v663 = vmul.f32 %v661, %v474
    %665 = vrot.lane.b32.xlu0 %v662, 64
    %v666 = vpop.permute.xlu0 %665
    %v668 = vmul.f32 %v661, %v666
    %670 = vrot.lane.b32.xlu0 %v668, 32
    %v671 = vpop.permute.xlu0 %670
    %v673 = vadd.f32 %v663, %v671
    %v674 = vtanh.pop %v673
    %676 = vrot.lane.b32.xlu0 %v674, 64
    %v677 = vpop.permute.xlu0 %676
    %v679 = vmul.f32 %v661, %v677
    %680 = vset.pattern.permute.xlu0 2
    %681 = vperm.xlu0 %680, %v231
    %v682 = vpop.permute.xlu0 %681
    %vm683 = vcmp.eq.s32.totalorder %v230, %v682
    %v684 = vsel %vm683, 1, 0
    %v685 = vcvt.s32.f32 %v684
    %v686 = vpack.c.bf16 %v685, %v685
    %v688 = vsel %vm245, %v686, 0
    %690 = vmatprep.subr.bf16.mxu0 0
    %691 = vmatpush1.bf16.msra.mxu0 0
    %692 = vmatprep.subr.bf16.mxu0 0
    %693 = vmatpush1.bf16.msra.mxu0 0
    %694 = vmatprep.subr.bf16.mxu0 0
    %695 = vmatpush1.bf16.msra.mxu0 0
    %696 = vmatprep.subr.bf16.mxu0 0
    %697 = vmatpush1.bf16.msra.mxu0 0
    %698 = vmatprep.subr.bf16.mxu0 0
    %699 = vmatpush1.bf16.msra.mxu0 0
    %700 = vmatprep.subr.bf16.mxu0 0
    %701 = vmatpush1.bf16.msra.mxu0 0
    %702 = vmatprep.subr.bf16.mxu0 0
    %703 = vmatpush1.bf16.msra.mxu0 0
    %704 = vmatprep.subr.bf16.mxu0 0
    %705 = vmatpush1.bf16.msra.mxu0 %v243
    %706 = vmatprep.subr.bf16.mxu0 0
    %707 = vmatpush2.bf16.msra.mxu0 0
    %708 = vmatprep.subr.bf16.mxu0 0
    %709 = vmatpush2.bf16.msra.mxu0 0
    %710 = vmatprep.subr.bf16.mxu0 0
    %711 = vmatpush2.bf16.msra.mxu0 0
    %712 = vmatprep.subr.bf16.mxu0 0
    %713 = vmatpush2.bf16.msra.mxu0 0
    %714 = vmatprep.subr.bf16.mxu0 0
    %715 = vmatpush2.bf16.msra.mxu0 0
    %716 = vmatprep.subr.bf16.mxu0 0
    %717 = vmatpush2.bf16.msra.mxu0 0
    %718 = vmatprep.subr.bf16.mxu0 0
    %719 = vmatpush2.bf16.msra.mxu0 0
    %720 = vmatprep.subr.bf16.mxu0 0
    %721 = vmatpush2.bf16.msra.mxu0 0
    %722 = vmatprep.mubr.bf16.mxu0 0
    %723 = vmatmul.mubr.bf16.gmra.mxu0 %v688
    %v724 = vpop.f32.mrf.mxu0
    %v725 = vadd.f32 0.0, %v724
    %v726 = vpop.f32.mrf.mxu0
    %v727 = vpop.f32.mrf.mxu0
    %v728 = vpop.f32.mrf.mxu0
    %729 = vdwg.mxu0
    %730 = vrot.lane.b32.xlu0 %v602, 64
    %v731 = vpop.permute.xlu0 %730
    %v733 = vsel %vm289, %v725, %v731
    %v734 = vpack.c.bf16 %v733, %v733
    %v736 = vsel %vm316, %v734, 0
    %738 = vmatprep.subr.bf16.mxu0 0
    %739 = vmatpush1.bf16.msra.mxu0 0
    %740 = vmatprep.subr.bf16.mxu0 0
    %741 = vmatpush1.bf16.msra.mxu0 0
    %742 = vmatprep.subr.bf16.mxu0 0
    %743 = vmatpush1.bf16.msra.mxu0 0
    %744 = vmatprep.subr.bf16.mxu0 0
    %745 = vmatpush1.bf16.msra.mxu0 0
    %746 = vmatprep.subr.bf16.mxu0 0
    %747 = vmatpush1.bf16.msra.mxu0 %v311
    %748 = vmatprep.subr.bf16.mxu0 0
    %749 = vmatpush1.bf16.msra.mxu0 %v310
    %750 = vmatprep.subr.bf16.mxu0 0
    %751 = vmatpush1.bf16.msra.mxu0 %v309
    %752 = vmatprep.subr.bf16.mxu0 0
    %753 = vmatpush1.bf16.msra.mxu0 %v308
    %754 = vmatprep.subr.bf16.mxu0 0
    %755 = vmatpush2.bf16.msra.mxu0 0
    %756 = vmatprep.subr.bf16.mxu0 0
    %757 = vmatpush2.bf16.msra.mxu0 0
    %758 = vmatprep.subr.bf16.mxu0 0
    %759 = vmatpush2.bf16.msra.mxu0 0
    %760 = vmatprep.subr.bf16.mxu0 0
    %761 = vmatpush2.bf16.msra.mxu0 0
    %762 = vmatprep.subr.bf16.mxu0 0
    %763 = vmatpush2.bf16.msra.mxu0 0
    %764 = vmatprep.subr.bf16.mxu0 0
    %765 = vmatpush2.bf16.msra.mxu0 0
    %766 = vmatprep.subr.bf16.mxu0 0
    %767 = vmatpush2.bf16.msra.mxu0 0
    %768 = vmatprep.subr.bf16.mxu0 0
    %769 = vmatpush2.bf16.msra.mxu0 0
    %770 = vmatprep.mubr.bf16.mxu0 0
    %771 = vmatmul.mubr.bf16.gmra.mxu0 %v736
    %v772 = vpop.f32.mrf.mxu0
    %v773 = vadd.f32 %v174, %v772
    %v774 = vpop.f32.mrf.mxu0
    %v775 = vpop.f32.mrf.mxu0
    %v776 = vpop.f32.mrf.mxu0
    %777 = vdwg.mxu0
    %v778 = vxor.u32 %v773, 2147483648
    %v779 = vmul.f32 %v778, 1.442695
    %v780 = vpow.pop %v779
    %v781 = vadd.f32 %v780, 1.0
    %v782 = vrcp.pop %v781
    %v783 = vmul.f32 1.0, %v782
    %v784 = vtanh.pop %v773
    %v785 = vmul.f32 %v783, %v596
    %787 = vrot.lane.b32.xlu0 %v784, 64
    %v788 = vpop.permute.xlu0 %787
    %v790 = vmul.f32 %v783, %v788
    %792 = vrot.lane.b32.xlu0 %v790, 32
    %v793 = vpop.permute.xlu0 %792
    %v795 = vadd.f32 %v785, %v793
    %v796 = vtanh.pop %v795
    %798 = vrot.lane.b32.xlu0 %v796, 64
    %v799 = vpop.permute.xlu0 %798
    %v801 = vmul.f32 %v783, %v799
    %803 = vrot.lane.b32.xlu0 %v801, 32
    %v804 = vpop.permute.xlu0 %803
    %807 = vrot.lane.b32.xlu0 %v679, 64
    %v808 = vpop.permute.xlu0 %807
    %v810 = vsel %vm289, %v804, %v808
    %v811 = vpack.c.bf16 %v810, %v810
    %v813 = vsel %vm316, %v811, 0
    %815 = vmatprep.subr.bf16.mxu0 0
    %816 = vmatpush1.bf16.msra.mxu0 0
    %817 = vmatprep.subr.bf16.mxu0 0
    %818 = vmatpush1.bf16.msra.mxu0 0
    %819 = vmatprep.subr.bf16.mxu0 0
    %820 = vmatpush1.bf16.msra.mxu0 0
    %821 = vmatprep.subr.bf16.mxu0 0
    %822 = vmatpush1.bf16.msra.mxu0 0
    %823 = vmatprep.subr.bf16.mxu0 0
    %824 = vmatpush1.bf16.msra.mxu0 %v409
    %825 = vmatprep.subr.bf16.mxu0 0
    %826 = vmatpush1.bf16.msra.mxu0 %v408
    %827 = vmatprep.subr.bf16.mxu0 0
    %828 = vmatpush1.bf16.msra.mxu0 %v407
    %829 = vmatprep.subr.bf16.mxu0 0
    %830 = vmatpush1.bf16.msra.mxu0 %v406
    %831 = vmatprep.subr.bf16.mxu0 0
    %832 = vmatpush2.bf16.msra.mxu0 0
    %833 = vmatprep.subr.bf16.mxu0 0
    %834 = vmatpush2.bf16.msra.mxu0 0
    %835 = vmatprep.subr.bf16.mxu0 0
    %836 = vmatpush2.bf16.msra.mxu0 0
    %837 = vmatprep.subr.bf16.mxu0 0
    %838 = vmatpush2.bf16.msra.mxu0 0
    %839 = vmatprep.subr.bf16.mxu0 0
    %840 = vmatpush2.bf16.msra.mxu0 0
    %841 = vmatprep.subr.bf16.mxu0 0
    %842 = vmatpush2.bf16.msra.mxu0 0
    %843 = vmatprep.subr.bf16.mxu0 0
    %844 = vmatpush2.bf16.msra.mxu0 0
    %845 = vmatprep.subr.bf16.mxu0 0
    %846 = vmatpush2.bf16.msra.mxu0 0
    %847 = vmatprep.mubr.bf16.mxu0 0
    %848 = vmatmul.mubr.bf16.gmra.mxu0 %v813
    %v849 = vpop.f32.mrf.mxu0
    %v850 = vadd.f32 %v181, %v849
    %v851 = vpop.f32.mrf.mxu0
    %v852 = vpop.f32.mrf.mxu0
    %v853 = vpop.f32.mrf.mxu0
    %854 = vdwg.mxu0
    %v855 = vxor.u32 %v850, 2147483648
    %v856 = vmul.f32 %v855, 1.442695
    %v857 = vpow.pop %v856
    %v858 = vadd.f32 %v857, 1.0
    %v859 = vrcp.pop %v858
    %v860 = vmul.f32 1.0, %v859
    %v861 = vtanh.pop %v850
    %v862 = vmul.f32 %v860, %v673
    %864 = vrot.lane.b32.xlu0 %v861, 64
    %v865 = vpop.permute.xlu0 %864
    %v867 = vmul.f32 %v860, %v865
    %869 = vrot.lane.b32.xlu0 %v867, 32
    %v870 = vpop.permute.xlu0 %869
    %v872 = vadd.f32 %v862, %v870
    %v873 = vtanh.pop %v872
    %875 = vrot.lane.b32.xlu0 %v873, 64
    %v876 = vpop.permute.xlu0 %875
    %v878 = vmul.f32 %v860, %v876
    %879 = vset.pattern.permute.xlu0 3
    %880 = vperm.xlu0 %879, %v231
    %v881 = vpop.permute.xlu0 %880
    %vm882 = vcmp.eq.s32.totalorder %v230, %v881
    %v883 = vsel %vm882, 1, 0
    %v884 = vcvt.s32.f32 %v883
    %v885 = vpack.c.bf16 %v884, %v884
    %v887 = vsel %vm245, %v885, 0
    %889 = vmatprep.subr.bf16.mxu0 0
    %890 = vmatpush1.bf16.msra.mxu0 0
    %891 = vmatprep.subr.bf16.mxu0 0
    %892 = vmatpush1.bf16.msra.mxu0 0
    %893 = vmatprep.subr.bf16.mxu0 0
    %894 = vmatpush1.bf16.msra.mxu0 0
    %895 = vmatprep.subr.bf16.mxu0 0
    %896 = vmatpush1.bf16.msra.mxu0 0
    %897 = vmatprep.subr.bf16.mxu0 0
    %898 = vmatpush1.bf16.msra.mxu0 0
    %899 = vmatprep.subr.bf16.mxu0 0
    %900 = vmatpush1.bf16.msra.mxu0 0
    %901 = vmatprep.subr.bf16.mxu0 0
    %902 = vmatpush1.bf16.msra.mxu0 0
    %903 = vmatprep.subr.bf16.mxu0 0
    %904 = vmatpush1.bf16.msra.mxu0 %v243
    %905 = vmatprep.subr.bf16.mxu0 0
    %906 = vmatpush2.bf16.msra.mxu0 0
    %907 = vmatprep.subr.bf16.mxu0 0
    %908 = vmatpush2.bf16.msra.mxu0 0
    %909 = vmatprep.subr.bf16.mxu0 0
    %910 = vmatpush2.bf16.msra.mxu0 0
    %911 = vmatprep.subr.bf16.mxu0 0
    %912 = vmatpush2.bf16.msra.mxu0 0
    %913 = vmatprep.subr.bf16.mxu0 0
    %914 = vmatpush2.bf16.msra.mxu0 0
    %915 = vmatprep.subr.bf16.mxu0 0
    %916 = vmatpush2.bf16.msra.mxu0 0
    %917 = vmatprep.subr.bf16.mxu0 0
    %918 = vmatpush2.bf16.msra.mxu0 0
    %919 = vmatprep.subr.bf16.mxu0 0
    %920 = vmatpush2.bf16.msra.mxu0 0
    %921 = vmatprep.mubr.bf16.mxu0 0
    %922 = vmatmul.mubr.bf16.gmra.mxu0 %v887
    %v923 = vpop.f32.mrf.mxu0
    %v924 = vadd.f32 0.0, %v923
    %v925 = vpop.f32.mrf.mxu0
    %v926 = vpop.f32.mrf.mxu0
    %v927 = vpop.f32.mrf.mxu0
    %928 = vdwg.mxu0
    %929 = vrot.lane.b32.xlu0 %v801, 64
    %v930 = vpop.permute.xlu0 %929
    %v932 = vsel %vm289, %v924, %v930
    %v933 = vpack.c.bf16 %v932, %v932
    %v935 = vsel %vm316, %v933, 0
    %937 = vmatprep.subr.bf16.mxu0 0
    %938 = vmatpush1.bf16.msra.mxu0 0
    %939 = vmatprep.subr.bf16.mxu0 0
    %940 = vmatpush1.bf16.msra.mxu0 0
    %941 = vmatprep.subr.bf16.mxu0 0
    %942 = vmatpush1.bf16.msra.mxu0 0
    %943 = vmatprep.subr.bf16.mxu0 0
    %944 = vmatpush1.bf16.msra.mxu0 0
    %945 = vmatprep.subr.bf16.mxu0 0
    %946 = vmatpush1.bf16.msra.mxu0 %v311
    %947 = vmatprep.subr.bf16.mxu0 0
    %948 = vmatpush1.bf16.msra.mxu0 %v310
    %949 = vmatprep.subr.bf16.mxu0 0
    %950 = vmatpush1.bf16.msra.mxu0 %v309
    %951 = vmatprep.subr.bf16.mxu0 0
    %952 = vmatpush1.bf16.msra.mxu0 %v308
    %953 = vmatprep.subr.bf16.mxu0 0
    %954 = vmatpush2.bf16.msra.mxu0 0
    %955 = vmatprep.subr.bf16.mxu0 0
    %956 = vmatpush2.bf16.msra.mxu0 0
    %957 = vmatprep.subr.bf16.mxu0 0
    %958 = vmatpush2.bf16.msra.mxu0 0
    %959 = vmatprep.subr.bf16.mxu0 0
    %960 = vmatpush2.bf16.msra.mxu0 0
    %961 = vmatprep.subr.bf16.mxu0 0
    %962 = vmatpush2.bf16.msra.mxu0 0
    %963 = vmatprep.subr.bf16.mxu0 0
    %964 = vmatpush2.bf16.msra.mxu0 0
    %965 = vmatprep.subr.bf16.mxu0 0
    %966 = vmatpush2.bf16.msra.mxu0 0
    %967 = vmatprep.subr.bf16.mxu0 0
    %968 = vmatpush2.bf16.msra.mxu0 0
    %969 = vmatprep.mubr.bf16.mxu0 0
    %970 = vmatmul.mubr.bf16.gmra.mxu0 %v935
    %v971 = vpop.f32.mrf.mxu0
    %v972 = vadd.f32 %v174, %v971
    %v973 = vpop.f32.mrf.mxu0
    %v974 = vpop.f32.mrf.mxu0
    %v975 = vpop.f32.mrf.mxu0
    %976 = vdwg.mxu0
    %v977 = vxor.u32 %v972, 2147483648
    %v978 = vmul.f32 %v977, 1.442695
    %v979 = vpow.pop %v978
    %v980 = vadd.f32 %v979, 1.0
    %v981 = vrcp.pop %v980
    %v982 = vmul.f32 1.0, %v981
    %v983 = vtanh.pop %v972
    %v984 = vmul.f32 %v982, %v795
    %986 = vrot.lane.b32.xlu0 %v983, 64
    %v987 = vpop.permute.xlu0 %986
    %v989 = vmul.f32 %v982, %v987
    %991 = vrot.lane.b32.xlu0 %v989, 32
    %v992 = vpop.permute.xlu0 %991
    %v994 = vadd.f32 %v984, %v992
    %v995 = vtanh.pop %v994
    %997 = vrot.lane.b32.xlu0 %v995, 64
    %v998 = vpop.permute.xlu0 %997
    %v1000 = vmul.f32 %v982, %v998
    %1002 = vrot.lane.b32.xlu0 %v1000, 32
    %v1003 = vpop.permute.xlu0 %1002
    %1006 = vrot.lane.b32.xlu0 %v878, 64
    %v1007 = vpop.permute.xlu0 %1006
    %v1009 = vsel %vm289, %v1003, %v1007
    %v1010 = vpack.c.bf16 %v1009, %v1009
    %v1012 = vsel %vm316, %v1010, 0
    %1014 = vmatprep.subr.bf16.mxu0 0
    %1015 = vmatpush1.bf16.msra.mxu0 0
    %1016 = vmatprep.subr.bf16.mxu0 0
    %1017 = vmatpush1.bf16.msra.mxu0 0
    %1018 = vmatprep.subr.bf16.mxu0 0
    %1019 = vmatpush1.bf16.msra.mxu0 0
    %1020 = vmatprep.subr.bf16.mxu0 0
    %1021 = vmatpush1.bf16.msra.mxu0 0
    %1022 = vmatprep.subr.bf16.mxu0 0
    %1023 = vmatpush1.bf16.msra.mxu0 %v409
    %1024 = vmatprep.subr.bf16.mxu0 0
    %1025 = vmatpush1.bf16.msra.mxu0 %v408
    %1026 = vmatprep.subr.bf16.mxu0 0
    %1027 = vmatpush1.bf16.msra.mxu0 %v407
    %1028 = vmatprep.subr.bf16.mxu0 0
    %1029 = vmatpush1.bf16.msra.mxu0 %v406
    %1030 = vmatprep.subr.bf16.mxu0 0
    %1031 = vmatpush2.bf16.msra.mxu0 0
    %1032 = vmatprep.subr.bf16.mxu0 0
    %1033 = vmatpush2.bf16.msra.mxu0 0
    %1034 = vmatprep.subr.bf16.mxu0 0
    %1035 = vmatpush2.bf16.msra.mxu0 0
    %1036 = vmatprep.subr.bf16.mxu0 0
    %1037 = vmatpush2.bf16.msra.mxu0 0
    %1038 = vmatprep.subr.bf16.mxu0 0
    %1039 = vmatpush2.bf16.msra.mxu0 0
    %1040 = vmatprep.subr.bf16.mxu0 0
    %1041 = vmatpush2.bf16.msra.mxu0 0
    %1042 = vmatprep.subr.bf16.mxu0 0
    %1043 = vmatpush2.bf16.msra.mxu0 0
    %1044 = vmatprep.subr.bf16.mxu0 0
    %1045 = vmatpush2.bf16.msra.mxu0 0
    %1046 = vmatprep.mubr.bf16.mxu0 0
    %1047 = vmatmul.mubr.bf16.gmra.mxu0 %v1012
    %v1048 = vpop.f32.mrf.mxu0
    %v1049 = vadd.f32 %v181, %v1048
    %v1050 = vpop.f32.mrf.mxu0
    %v1051 = vpop.f32.mrf.mxu0
    %v1052 = vpop.f32.mrf.mxu0
    %1053 = vdwg.mxu0
    %v1054 = vxor.u32 %v1049, 2147483648
    %v1055 = vmul.f32 %v1054, 1.442695
    %v1056 = vpow.pop %v1055
    %v1057 = vadd.f32 %v1056, 1.0
    %v1058 = vrcp.pop %v1057
    %v1059 = vmul.f32 1.0, %v1058
    %v1060 = vtanh.pop %v1049
    %v1061 = vmul.f32 %v1059, %v872
    %1063 = vrot.lane.b32.xlu0 %v1060, 64
    %v1064 = vpop.permute.xlu0 %1063
    %v1066 = vmul.f32 %v1059, %v1064
    %1068 = vrot.lane.b32.xlu0 %v1066, 32
    %v1069 = vpop.permute.xlu0 %1068
    %v1071 = vadd.f32 %v1061, %v1069
    %v1072 = vtanh.pop %v1071
    %1074 = vrot.lane.b32.xlu0 %v1072, 64
    %v1075 = vpop.permute.xlu0 %1074
    %v1077 = vmul.f32 %v1059, %v1075
    %1078 = vset.pattern.permute.xlu0 4
    %1079 = vperm.xlu0 %1078, %v231
    %v1080 = vpop.permute.xlu0 %1079
    %vm1081 = vcmp.eq.s32.totalorder %v230, %v1080
    %v1082 = vsel %vm1081, 1, 0
    %v1083 = vcvt.s32.f32 %v1082
    %v1084 = vpack.c.bf16 %v1083, %v1083
    %v1086 = vsel %vm245, %v1084, 0
    %1088 = vmatprep.subr.bf16.mxu0 0
    %1089 = vmatpush1.bf16.msra.mxu0 0
    %1090 = vmatprep.subr.bf16.mxu0 0
    %1091 = vmatpush1.bf16.msra.mxu0 0
    %1092 = vmatprep.subr.bf16.mxu0 0
    %1093 = vmatpush1.bf16.msra.mxu0 0
    %1094 = vmatprep.subr.bf16.mxu0 0
    %1095 = vmatpush1.bf16.msra.mxu0 0
    %1096 = vmatprep.subr.bf16.mxu0 0
    %1097 = vmatpush1.bf16.msra.mxu0 0
    %1098 = vmatprep.subr.bf16.mxu0 0
    %1099 = vmatpush1.bf16.msra.mxu0 0
    %1100 = vmatprep.subr.bf16.mxu0 0
    %1101 = vmatpush1.bf16.msra.mxu0 0
    %1102 = vmatprep.subr.bf16.mxu0 0
    %1103 = vmatpush1.bf16.msra.mxu0 %v243
    %1104 = vmatprep.subr.bf16.mxu0 0
    %1105 = vmatpush2.bf16.msra.mxu0 0
    %1106 = vmatprep.subr.bf16.mxu0 0
    %1107 = vmatpush2.bf16.msra.mxu0 0
    %1108 = vmatprep.subr.bf16.mxu0 0
    %1109 = vmatpush2.bf16.msra.mxu0 0
    %1110 = vmatprep.subr.bf16.mxu0 0
    %1111 = vmatpush2.bf16.msra.mxu0 0
    %1112 = vmatprep.subr.bf16.mxu0 0
    %1113 = vmatpush2.bf16.msra.mxu0 0
    %1114 = vmatprep.subr.bf16.mxu0 0
    %1115 = vmatpush2.bf16.msra.mxu0 0
    %1116 = vmatprep.subr.bf16.mxu0 0
    %1117 = vmatpush2.bf16.msra.mxu0 0
    %1118 = vmatprep.subr.bf16.mxu0 0
    %1119 = vmatpush2.bf16.msra.mxu0 0
    %1120 = vmatprep.mubr.bf16.mxu0 0
    %1121 = vmatmul.mubr.bf16.gmra.mxu0 %v1086
    %v1122 = vpop.f32.mrf.mxu0
    %v1123 = vadd.f32 0.0, %v1122
    %v1124 = vpop.f32.mrf.mxu0
    %v1125 = vpop.f32.mrf.mxu0
    %v1126 = vpop.f32.mrf.mxu0
    %1127 = vdwg.mxu0
    %1128 = vrot.lane.b32.xlu0 %v1000, 64
    %v1129 = vpop.permute.xlu0 %1128
    %v1131 = vsel %vm289, %v1123, %v1129
    %v1132 = vpack.c.bf16 %v1131, %v1131
    %v1134 = vsel %vm316, %v1132, 0
    %1136 = vmatprep.subr.bf16.mxu0 0
    %1137 = vmatpush1.bf16.msra.mxu0 0
    %1138 = vmatprep.subr.bf16.mxu0 0
    %1139 = vmatpush1.bf16.msra.mxu0 0
    %1140 = vmatprep.subr.bf16.mxu0 0
    %1141 = vmatpush1.bf16.msra.mxu0 0
    %1142 = vmatprep.subr.bf16.mxu0 0
    %1143 = vmatpush1.bf16.msra.mxu0 0
    %1144 = vmatprep.subr.bf16.mxu0 0
    %1145 = vmatpush1.bf16.msra.mxu0 %v311
    %1146 = vmatprep.subr.bf16.mxu0 0
    %1147 = vmatpush1.bf16.msra.mxu0 %v310
    %1148 = vmatprep.subr.bf16.mxu0 0
    %1149 = vmatpush1.bf16.msra.mxu0 %v309
    %1150 = vmatprep.subr.bf16.mxu0 0
    %1151 = vmatpush1.bf16.msra.mxu0 %v308
    %1152 = vmatprep.subr.bf16.mxu0 0
    %1153 = vmatpush2.bf16.msra.mxu0 0
    %1154 = vmatprep.subr.bf16.mxu0 0
    %1155 = vmatpush2.bf16.msra.mxu0 0
    %1156 = vmatprep.subr.bf16.mxu0 0
    %1157 = vmatpush2.bf16.msra.mxu0 0
    %1158 = vmatprep.subr.bf16.mxu0 0
    %1159 = vmatpush2.bf16.msra.mxu0 0
    %1160 = vmatprep.subr.bf16.mxu0 0
    %1161 = vmatpush2.bf16.msra.mxu0 0
    %1162 = vmatprep.subr.bf16.mxu0 0
    %1163 = vmatpush2.bf16.msra.mxu0 0
    %1164 = vmatprep.subr.bf16.mxu0 0
    %1165 = vmatpush2.bf16.msra.mxu0 0
    %1166 = vmatprep.subr.bf16.mxu0 0
    %1167 = vmatpush2.bf16.msra.mxu0 0
    %1168 = vmatprep.mubr.bf16.mxu0 0
    %1169 = vmatmul.mubr.bf16.gmra.mxu0 %v1134
    %v1170 = vpop.f32.mrf.mxu0
    %v1171 = vadd.f32 %v174, %v1170
    %v1172 = vpop.f32.mrf.mxu0
    %v1173 = vpop.f32.mrf.mxu0
    %v1174 = vpop.f32.mrf.mxu0
    %1175 = vdwg.mxu0
    %v1176 = vxor.u32 %v1171, 2147483648
    %v1177 = vmul.f32 %v1176, 1.442695
    %v1178 = vpow.pop %v1177
    %v1179 = vadd.f32 %v1178, 1.0
    %v1180 = vrcp.pop %v1179
    %v1181 = vmul.f32 1.0, %v1180
    %v1182 = vtanh.pop %v1171
    %v1183 = vmul.f32 %v1181, %v994
    %1185 = vrot.lane.b32.xlu0 %v1182, 64
    %v1186 = vpop.permute.xlu0 %1185
    %v1188 = vmul.f32 %v1181, %v1186
    %1190 = vrot.lane.b32.xlu0 %v1188, 32
    %v1191 = vpop.permute.xlu0 %1190
    %v1193 = vadd.f32 %v1183, %v1191
    %v1194 = vtanh.pop %v1193
    %1196 = vrot.lane.b32.xlu0 %v1194, 64
    %v1197 = vpop.permute.xlu0 %1196
    %v1199 = vmul.f32 %v1181, %v1197
    %1201 = vrot.lane.b32.xlu0 %v1199, 32
    %v1202 = vpop.permute.xlu0 %1201
    %1205 = vrot.lane.b32.xlu0 %v1077, 64
    %v1206 = vpop.permute.xlu0 %1205
    %v1208 = vsel %vm289, %v1202, %v1206
    %v1209 = vpack.c.bf16 %v1208, %v1208
    %v1211 = vsel %vm316, %v1209, 0
    %1213 = vmatprep.subr.bf16.mxu0 0
    %1214 = vmatpush1.bf16.msra.mxu0 0
    %1215 = vmatprep.subr.bf16.mxu0 0
    %1216 = vmatpush1.bf16.msra.mxu0 0
    %1217 = vmatprep.subr.bf16.mxu0 0
    %1218 = vmatpush1.bf16.msra.mxu0 0
    %1219 = vmatprep.subr.bf16.mxu0 0
    %1220 = vmatpush1.bf16.msra.mxu0 0
    %1221 = vmatprep.subr.bf16.mxu0 0
    %1222 = vmatpush1.bf16.msra.mxu0 %v409
    %1223 = vmatprep.subr.bf16.mxu0 0
    %1224 = vmatpush1.bf16.msra.mxu0 %v408
    %1225 = vmatprep.subr.bf16.mxu0 0
    %1226 = vmatpush1.bf16.msra.mxu0 %v407
    %1227 = vmatprep.subr.bf16.mxu0 0
    %1228 = vmatpush1.bf16.msra.mxu0 %v406
    %1229 = vmatprep.subr.bf16.mxu0 0
    %1230 = vmatpush2.bf16.msra.mxu0 0
    %1231 = vmatprep.subr.bf16.mxu0 0
    %1232 = vmatpush2.bf16.msra.mxu0 0
    %1233 = vmatprep.subr.bf16.mxu0 0
    %1234 = vmatpush2.bf16.msra.mxu0 0
    %1235 = vmatprep.subr.bf16.mxu0 0
    %1236 = vmatpush2.bf16.msra.mxu0 0
    %1237 = vmatprep.subr.bf16.mxu0 0
    %1238 = vmatpush2.bf16.msra.mxu0 0
    %1239 = vmatprep.subr.bf16.mxu0 0
    %1240 = vmatpush2.bf16.msra.mxu0 0
    %1241 = vmatprep.subr.bf16.mxu0 0
    %1242 = vmatpush2.bf16.msra.mxu0 0
    %1243 = vmatprep.subr.bf16.mxu0 0
    %1244 = vmatpush2.bf16.msra.mxu0 0
    %1245 = vmatprep.mubr.bf16.mxu0 0
    %1246 = vmatmul.mubr.bf16.gmra.mxu0 %v1211
    %v1247 = vpop.f32.mrf.mxu0
    %v1248 = vadd.f32 %v181, %v1247
    %v1249 = vpop.f32.mrf.mxu0
    %v1250 = vpop.f32.mrf.mxu0
    %v1251 = vpop.f32.mrf.mxu0
    %1252 = vdwg.mxu0
    %v1253 = vxor.u32 %v1248, 2147483648
    %v1254 = vmul.f32 %v1253, 1.442695
    %v1255 = vpow.pop %v1254
    %v1256 = vadd.f32 %v1255, 1.0
    %v1257 = vrcp.pop %v1256
    %v1258 = vmul.f32 1.0, %v1257
    %v1259 = vtanh.pop %v1248
    %v1260 = vmul.f32 %v1258, %v1071
    %1262 = vrot.lane.b32.xlu0 %v1259, 64
    %v1263 = vpop.permute.xlu0 %1262
    %v1265 = vmul.f32 %v1258, %v1263
    %1267 = vrot.lane.b32.xlu0 %v1265, 32
    %v1268 = vpop.permute.xlu0 %1267
    %v1270 = vadd.f32 %v1260, %v1268
    %v1271 = vtanh.pop %v1270
    %1273 = vrot.lane.b32.xlu0 %v1271, 64
    %v1274 = vpop.permute.xlu0 %1273
    %v1276 = vmul.f32 %v1258, %v1274
    %1277 = vset.pattern.permute.xlu0 5
    %1278 = vperm.xlu0 %1277, %v231
    %v1279 = vpop.permute.xlu0 %1278
    %vm1280 = vcmp.eq.s32.totalorder %v230, %v1279
    %v1281 = vsel %vm1280, 1, 0
    %v1282 = vcvt.s32.f32 %v1281
    %v1283 = vpack.c.bf16 %v1282, %v1282
    %v1285 = vsel %vm245, %v1283, 0
    %1287 = vmatprep.subr.bf16.mxu0 0
    %1288 = vmatpush1.bf16.msra.mxu0 0
    %1289 = vmatprep.subr.bf16.mxu0 0
    %1290 = vmatpush1.bf16.msra.mxu0 0
    %1291 = vmatprep.subr.bf16.mxu0 0
    %1292 = vmatpush1.bf16.msra.mxu0 0
    %1293 = vmatprep.subr.bf16.mxu0 0
    %1294 = vmatpush1.bf16.msra.mxu0 0
    %1295 = vmatprep.subr.bf16.mxu0 0
    %1296 = vmatpush1.bf16.msra.mxu0 0
    %1297 = vmatprep.subr.bf16.mxu0 0
    %1298 = vmatpush1.bf16.msra.mxu0 0
    %1299 = vmatprep.subr.bf16.mxu0 0
    %1300 = vmatpush1.bf16.msra.mxu0 0
    %1301 = vmatprep.subr.bf16.mxu0 0
    %1302 = vmatpush1.bf16.msra.mxu0 %v243
    %1303 = vmatprep.subr.bf16.mxu0 0
    %1304 = vmatpush2.bf16.msra.mxu0 0
    %1305 = vmatprep.subr.bf16.mxu0 0
    %1306 = vmatpush2.bf16.msra.mxu0 0
    %1307 = vmatprep.subr.bf16.mxu0 0
    %1308 = vmatpush2.bf16.msra.mxu0 0
    %1309 = vmatprep.subr.bf16.mxu0 0
    %1310 = vmatpush2.bf16.msra.mxu0 0
    %1311 = vmatprep.subr.bf16.mxu0 0
    %1312 = vmatpush2.bf16.msra.mxu0 0
    %1313 = vmatprep.subr.bf16.mxu0 0
    %1314 = vmatpush2.bf16.msra.mxu0 0
    %1315 = vmatprep.subr.bf16.mxu0 0
    %1316 = vmatpush2.bf16.msra.mxu0 0
    %1317 = vmatprep.subr.bf16.mxu0 0
    %1318 = vmatpush2.bf16.msra.mxu0 0
    %1319 = vmatprep.mubr.bf16.mxu0 0
    %1320 = vmatmul.mubr.bf16.gmra.mxu0 %v1285
    %v1321 = vpop.f32.mrf.mxu0
    %v1322 = vadd.f32 0.0, %v1321
    %v1323 = vpop.f32.mrf.mxu0
    %v1324 = vpop.f32.mrf.mxu0
    %v1325 = vpop.f32.mrf.mxu0
    %1326 = vdwg.mxu0
    %1327 = vrot.lane.b32.xlu0 %v1199, 64
    %v1328 = vpop.permute.xlu0 %1327
    %v1330 = vsel %vm289, %v1322, %v1328
    %v1331 = vpack.c.bf16 %v1330, %v1330
    %v1333 = vsel %vm316, %v1331, 0
    %1335 = vmatprep.subr.bf16.mxu0 0
    %1336 = vmatpush1.bf16.msra.mxu0 0
    %1337 = vmatprep.subr.bf16.mxu0 0
    %1338 = vmatpush1.bf16.msra.mxu0 0
    %1339 = vmatprep.subr.bf16.mxu0 0
    %1340 = vmatpush1.bf16.msra.mxu0 0
    %1341 = vmatprep.subr.bf16.mxu0 0
    %1342 = vmatpush1.bf16.msra.mxu0 0
    %1343 = vmatprep.subr.bf16.mxu0 0
    %1344 = vmatpush1.bf16.msra.mxu0 %v311
    %1345 = vmatprep.subr.bf16.mxu0 0
    %1346 = vmatpush1.bf16.msra.mxu0 %v310
    %1347 = vmatprep.subr.bf16.mxu0 0
    %1348 = vmatpush1.bf16.msra.mxu0 %v309
    %1349 = vmatprep.subr.bf16.mxu0 0
    %1350 = vmatpush1.bf16.msra.mxu0 %v308
    %1351 = vmatprep.subr.bf16.mxu0 0
    %1352 = vmatpush2.bf16.msra.mxu0 0
    %1353 = vmatprep.subr.bf16.mxu0 0
    %1354 = vmatpush2.bf16.msra.mxu0 0
    %1355 = vmatprep.subr.bf16.mxu0 0
    %1356 = vmatpush2.bf16.msra.mxu0 0
    %1357 = vmatprep.subr.bf16.mxu0 0
    %1358 = vmatpush2.bf16.msra.mxu0 0
    %1359 = vmatprep.subr.bf16.mxu0 0
    %1360 = vmatpush2.bf16.msra.mxu0 0
    %1361 = vmatprep.subr.bf16.mxu0 0
    %1362 = vmatpush2.bf16.msra.mxu0 0
    %1363 = vmatprep.subr.bf16.mxu0 0
    %1364 = vmatpush2.bf16.msra.mxu0 0
    %1365 = vmatprep.subr.bf16.mxu0 0
    %1366 = vmatpush2.bf16.msra.mxu0 0
    %1367 = vmatprep.mubr.bf16.mxu0 0
    %1368 = vmatmul.mubr.bf16.gmra.mxu0 %v1333
    %v1369 = vpop.f32.mrf.mxu0
    %v1370 = vadd.f32 %v174, %v1369
    %v1371 = vpop.f32.mrf.mxu0
    %v1372 = vpop.f32.mrf.mxu0
    %v1373 = vpop.f32.mrf.mxu0
    %1374 = vdwg.mxu0
    %v1375 = vxor.u32 %v1370, 2147483648
    %v1376 = vmul.f32 %v1375, 1.442695
    %v1377 = vpow.pop %v1376
    %v1378 = vadd.f32 %v1377, 1.0
    %v1379 = vrcp.pop %v1378
    %v1380 = vmul.f32 1.0, %v1379
    %v1381 = vtanh.pop %v1370
    %v1382 = vmul.f32 %v1380, %v1193
    %1384 = vrot.lane.b32.xlu0 %v1381, 64
    %v1385 = vpop.permute.xlu0 %1384
    %v1387 = vmul.f32 %v1380, %v1385
    %1389 = vrot.lane.b32.xlu0 %v1387, 32
    %v1390 = vpop.permute.xlu0 %1389
    %v1392 = vadd.f32 %v1382, %v1390
    %v1393 = vtanh.pop %v1392
    %1395 = vrot.lane.b32.xlu0 %v1393, 64
    %v1396 = vpop.permute.xlu0 %1395
    %v1398 = vmul.f32 %v1380, %v1396
    %1400 = vrot.lane.b32.xlu0 %v1398, 32
    %v1401 = vpop.permute.xlu0 %1400
    %1404 = vrot.lane.b32.xlu0 %v1276, 64
    %v1405 = vpop.permute.xlu0 %1404
    %v1407 = vsel %vm289, %v1401, %v1405
    %v1408 = vpack.c.bf16 %v1407, %v1407
    %v1410 = vsel %vm316, %v1408, 0
    %1412 = vmatprep.subr.bf16.mxu0 0
    %1413 = vmatpush1.bf16.msra.mxu0 0
    %1414 = vmatprep.subr.bf16.mxu0 0
    %1415 = vmatpush1.bf16.msra.mxu0 0
    %1416 = vmatprep.subr.bf16.mxu0 0
    %1417 = vmatpush1.bf16.msra.mxu0 0
    %1418 = vmatprep.subr.bf16.mxu0 0
    %1419 = vmatpush1.bf16.msra.mxu0 0
    %1420 = vmatprep.subr.bf16.mxu0 0
    %1421 = vmatpush1.bf16.msra.mxu0 %v409
    %1422 = vmatprep.subr.bf16.mxu0 0
    %1423 = vmatpush1.bf16.msra.mxu0 %v408
    %1424 = vmatprep.subr.bf16.mxu0 0
    %1425 = vmatpush1.bf16.msra.mxu0 %v407
    %1426 = vmatprep.subr.bf16.mxu0 0
    %1427 = vmatpush1.bf16.msra.mxu0 %v406
    %1428 = vmatprep.subr.bf16.mxu0 0
    %1429 = vmatpush2.bf16.msra.mxu0 0
    %1430 = vmatprep.subr.bf16.mxu0 0
    %1431 = vmatpush2.bf16.msra.mxu0 0
    %1432 = vmatprep.subr.bf16.mxu0 0
    %1433 = vmatpush2.bf16.msra.mxu0 0
    %1434 = vmatprep.subr.bf16.mxu0 0
    %1435 = vmatpush2.bf16.msra.mxu0 0
    %1436 = vmatprep.subr.bf16.mxu0 0
    %1437 = vmatpush2.bf16.msra.mxu0 0
    %1438 = vmatprep.subr.bf16.mxu0 0
    %1439 = vmatpush2.bf16.msra.mxu0 0
    %1440 = vmatprep.subr.bf16.mxu0 0
    %1441 = vmatpush2.bf16.msra.mxu0 0
    %1442 = vmatprep.subr.bf16.mxu0 0
    %1443 = vmatpush2.bf16.msra.mxu0 0
    %1444 = vmatprep.mubr.bf16.mxu0 0
    %1445 = vmatmul.mubr.bf16.gmra.mxu0 %v1410
    %v1446 = vpop.f32.mrf.mxu0
    %v1447 = vadd.f32 %v181, %v1446
    %v1448 = vpop.f32.mrf.mxu0
    %v1449 = vpop.f32.mrf.mxu0
    %v1450 = vpop.f32.mrf.mxu0
    %1451 = vdwg.mxu0
    %v1452 = vxor.u32 %v1447, 2147483648
    %v1453 = vmul.f32 %v1452, 1.442695
    %v1454 = vpow.pop %v1453
    %v1455 = vadd.f32 %v1454, 1.0
    %v1456 = vrcp.pop %v1455
    %v1457 = vmul.f32 1.0, %v1456
    %v1458 = vtanh.pop %v1447
    %v1459 = vmul.f32 %v1457, %v1270
    %1461 = vrot.lane.b32.xlu0 %v1458, 64
    %v1462 = vpop.permute.xlu0 %1461
    %v1464 = vmul.f32 %v1457, %v1462
    %1466 = vrot.lane.b32.xlu0 %v1464, 32
    %v1467 = vpop.permute.xlu0 %1466
    %v1469 = vadd.f32 %v1459, %v1467
    %v1470 = vtanh.pop %v1469
    %1472 = vrot.lane.b32.xlu0 %v1470, 64
    %v1473 = vpop.permute.xlu0 %1472
    %v1475 = vmul.f32 %v1457, %v1473
    %1476 = vset.pattern.permute.xlu0 6
    %1477 = vperm.xlu0 %1476, %v231
    %v1478 = vpop.permute.xlu0 %1477
    %vm1479 = vcmp.eq.s32.totalorder %v230, %v1478
    %v1480 = vsel %vm1479, 1, 0
    %v1481 = vcvt.s32.f32 %v1480
    %v1482 = vpack.c.bf16 %v1481, %v1481
    %v1484 = vsel %vm245, %v1482, 0
    %1486 = vmatprep.subr.bf16.mxu0 0
    %1487 = vmatpush1.bf16.msra.mxu0 0
    %1488 = vmatprep.subr.bf16.mxu0 0
    %1489 = vmatpush1.bf16.msra.mxu0 0
    %1490 = vmatprep.subr.bf16.mxu0 0
    %1491 = vmatpush1.bf16.msra.mxu0 0
    %1492 = vmatprep.subr.bf16.mxu0 0
    %1493 = vmatpush1.bf16.msra.mxu0 0
    %1494 = vmatprep.subr.bf16.mxu0 0
    %1495 = vmatpush1.bf16.msra.mxu0 0
    %1496 = vmatprep.subr.bf16.mxu0 0
    %1497 = vmatpush1.bf16.msra.mxu0 0
    %1498 = vmatprep.subr.bf16.mxu0 0
    %1499 = vmatpush1.bf16.msra.mxu0 0
    %1500 = vmatprep.subr.bf16.mxu0 0
    %1501 = vmatpush1.bf16.msra.mxu0 %v243
    %1502 = vmatprep.subr.bf16.mxu0 0
    %1503 = vmatpush2.bf16.msra.mxu0 0
    %1504 = vmatprep.subr.bf16.mxu0 0
    %1505 = vmatpush2.bf16.msra.mxu0 0
    %1506 = vmatprep.subr.bf16.mxu0 0
    %1507 = vmatpush2.bf16.msra.mxu0 0
    %1508 = vmatprep.subr.bf16.mxu0 0
    %1509 = vmatpush2.bf16.msra.mxu0 0
    %1510 = vmatprep.subr.bf16.mxu0 0
    %1511 = vmatpush2.bf16.msra.mxu0 0
    %1512 = vmatprep.subr.bf16.mxu0 0
    %1513 = vmatpush2.bf16.msra.mxu0 0
    %1514 = vmatprep.subr.bf16.mxu0 0
    %1515 = vmatpush2.bf16.msra.mxu0 0
    %1516 = vmatprep.subr.bf16.mxu0 0
    %1517 = vmatpush2.bf16.msra.mxu0 0
    %1518 = vmatprep.mubr.bf16.mxu0 0
    %1519 = vmatmul.mubr.bf16.gmra.mxu0 %v1484
    %v1520 = vpop.f32.mrf.mxu0
    %v1521 = vadd.f32 0.0, %v1520
    %v1522 = vpop.f32.mrf.mxu0
    %v1523 = vpop.f32.mrf.mxu0
    %v1524 = vpop.f32.mrf.mxu0
    %1525 = vdwg.mxu0
    %1526 = vrot.lane.b32.xlu0 %v1398, 64
    %v1527 = vpop.permute.xlu0 %1526
    %v1529 = vsel %vm289, %v1521, %v1527
    %v1530 = vpack.c.bf16 %v1529, %v1529
    %v1532 = vsel %vm316, %v1530, 0
    %1534 = vmatprep.subr.bf16.mxu0 0
    %1535 = vmatpush1.bf16.msra.mxu0 0
    %1536 = vmatprep.subr.bf16.mxu0 0
    %1537 = vmatpush1.bf16.msra.mxu0 0
    %1538 = vmatprep.subr.bf16.mxu0 0
    %1539 = vmatpush1.bf16.msra.mxu0 0
    %1540 = vmatprep.subr.bf16.mxu0 0
    %1541 = vmatpush1.bf16.msra.mxu0 0
    %1542 = vmatprep.subr.bf16.mxu0 0
    %1543 = vmatpush1.bf16.msra.mxu0 %v311
    %1544 = vmatprep.subr.bf16.mxu0 0
    %1545 = vmatpush1.bf16.msra.mxu0 %v310
    %1546 = vmatprep.subr.bf16.mxu0 0
    %1547 = vmatpush1.bf16.msra.mxu0 %v309
    %1548 = vmatprep.subr.bf16.mxu0 0
    %1549 = vmatpush1.bf16.msra.mxu0 %v308
    %1550 = vmatprep.subr.bf16.mxu0 0
    %1551 = vmatpush2.bf16.msra.mxu0 0
    %1552 = vmatprep.subr.bf16.mxu0 0
    %1553 = vmatpush2.bf16.msra.mxu0 0
    %1554 = vmatprep.subr.bf16.mxu0 0
    %1555 = vmatpush2.bf16.msra.mxu0 0
    %1556 = vmatprep.subr.bf16.mxu0 0
    %1557 = vmatpush2.bf16.msra.mxu0 0
    %1558 = vmatprep.subr.bf16.mxu0 0
    %1559 = vmatpush2.bf16.msra.mxu0 0
    %1560 = vmatprep.subr.bf16.mxu0 0
    %1561 = vmatpush2.bf16.msra.mxu0 0
    %1562 = vmatprep.subr.bf16.mxu0 0
    %1563 = vmatpush2.bf16.msra.mxu0 0
    %1564 = vmatprep.subr.bf16.mxu0 0
    %1565 = vmatpush2.bf16.msra.mxu0 0
    %1566 = vmatprep.mubr.bf16.mxu0 0
    %1567 = vmatmul.mubr.bf16.gmra.mxu0 %v1532
    %v1568 = vpop.f32.mrf.mxu0
    %v1569 = vadd.f32 %v174, %v1568
    %v1570 = vpop.f32.mrf.mxu0
    %v1571 = vpop.f32.mrf.mxu0
    %v1572 = vpop.f32.mrf.mxu0
    %1573 = vdwg.mxu0
    %v1574 = vxor.u32 %v1569, 2147483648
    %v1575 = vmul.f32 %v1574, 1.442695
    %v1576 = vpow.pop %v1575
    %v1577 = vadd.f32 %v1576, 1.0
    %v1578 = vrcp.pop %v1577
    %v1579 = vmul.f32 1.0, %v1578
    %v1580 = vtanh.pop %v1569
    %v1581 = vmul.f32 %v1579, %v1392
    %1583 = vrot.lane.b32.xlu0 %v1580, 64
    %v1584 = vpop.permute.xlu0 %1583
    %v1586 = vmul.f32 %v1579, %v1584
    %1588 = vrot.lane.b32.xlu0 %v1586, 32
    %v1589 = vpop.permute.xlu0 %1588
    %v1591 = vadd.f32 %v1581, %v1589
    %v1592 = vtanh.pop %v1591
    %1594 = vrot.lane.b32.xlu0 %v1592, 64
    %v1595 = vpop.permute.xlu0 %1594
    %v1597 = vmul.f32 %v1579, %v1595
    %1599 = vrot.lane.b32.xlu0 %v1597, 32
    %v1600 = vpop.permute.xlu0 %1599
    %1603 = vrot.lane.b32.xlu0 %v1475, 64
    %v1604 = vpop.permute.xlu0 %1603
    %v1606 = vsel %vm289, %v1600, %v1604
    %v1607 = vpack.c.bf16 %v1606, %v1606
    %v1609 = vsel %vm316, %v1607, 0
    %1611 = vmatprep.subr.bf16.mxu0 0
    %1612 = vmatpush1.bf16.msra.mxu0 0
    %1613 = vmatprep.subr.bf16.mxu0 0
    %1614 = vmatpush1.bf16.msra.mxu0 0
    %1615 = vmatprep.subr.bf16.mxu0 0
    %1616 = vmatpush1.bf16.msra.mxu0 0
    %1617 = vmatprep.subr.bf16.mxu0 0
    %1618 = vmatpush1.bf16.msra.mxu0 0
    %1619 = vmatprep.subr.bf16.mxu0 0
    %1620 = vmatpush1.bf16.msra.mxu0 %v409
    %1621 = vmatprep.subr.bf16.mxu0 0
    %1622 = vmatpush1.bf16.msra.mxu0 %v408
    %1623 = vmatprep.subr.bf16.mxu0 0
    %1624 = vmatpush1.bf16.msra.mxu0 %v407
    %1625 = vmatprep.subr.bf16.mxu0 0
    %1626 = vmatpush1.bf16.msra.mxu0 %v406
    %1627 = vmatprep.subr.bf16.mxu0 0
    %1628 = vmatpush2.bf16.msra.mxu0 0
    %1629 = vmatprep.subr.bf16.mxu0 0
    %1630 = vmatpush2.bf16.msra.mxu0 0
    %1631 = vmatprep.subr.bf16.mxu0 0
    %1632 = vmatpush2.bf16.msra.mxu0 0
    %1633 = vmatprep.subr.bf16.mxu0 0
    %1634 = vmatpush2.bf16.msra.mxu0 0
    %1635 = vmatprep.subr.bf16.mxu0 0
    %1636 = vmatpush2.bf16.msra.mxu0 0
    %1637 = vmatprep.subr.bf16.mxu0 0
    %1638 = vmatpush2.bf16.msra.mxu0 0
    %1639 = vmatprep.subr.bf16.mxu0 0
    %1640 = vmatpush2.bf16.msra.mxu0 0
    %1641 = vmatprep.subr.bf16.mxu0 0
    %1642 = vmatpush2.bf16.msra.mxu0 0
    %1643 = vmatprep.mubr.bf16.mxu0 0
    %1644 = vmatmul.mubr.bf16.gmra.mxu0 %v1609
    %v1645 = vpop.f32.mrf.mxu0
    %v1646 = vadd.f32 %v181, %v1645
    %v1647 = vpop.f32.mrf.mxu0
    %v1648 = vpop.f32.mrf.mxu0
    %v1649 = vpop.f32.mrf.mxu0
    %1650 = vdwg.mxu0
    %v1651 = vxor.u32 %v1646, 2147483648
    %v1652 = vmul.f32 %v1651, 1.442695
    %v1653 = vpow.pop %v1652
    %v1654 = vadd.f32 %v1653, 1.0
    %v1655 = vrcp.pop %v1654
    %v1656 = vmul.f32 1.0, %v1655
    %v1657 = vtanh.pop %v1646
    %v1658 = vmul.f32 %v1656, %v1469
    %1660 = vrot.lane.b32.xlu0 %v1657, 64
    %v1661 = vpop.permute.xlu0 %1660
    %v1663 = vmul.f32 %v1656, %v1661
    %1665 = vrot.lane.b32.xlu0 %v1663, 32
    %v1666 = vpop.permute.xlu0 %1665
    %v1668 = vadd.f32 %v1658, %v1666
    %v1669 = vtanh.pop %v1668
    %1671 = vrot.lane.b32.xlu0 %v1669, 64
    %v1672 = vpop.permute.xlu0 %1671
    %v1674 = vmul.f32 %v1656, %v1672
    %1675 = vset.pattern.permute.xlu0 7
    %1676 = vperm.xlu0 %1675, %v231
    %v1677 = vpop.permute.xlu0 %1676
    %vm1678 = vcmp.eq.s32.totalorder %v230, %v1677
    %v1679 = vsel %vm1678, 1, 0
    %v1680 = vcvt.s32.f32 %v1679
    %v1681 = vpack.c.bf16 %v1680, %v1680
    %v1683 = vsel %vm245, %v1681, 0
    %1685 = vmatprep.subr.bf16.mxu0 0
    %1686 = vmatpush1.bf16.msra.mxu0 0
    %1687 = vmatprep.subr.bf16.mxu0 0
    %1688 = vmatpush1.bf16.msra.mxu0 0
    %1689 = vmatprep.subr.bf16.mxu0 0
    %1690 = vmatpush1.bf16.msra.mxu0 0
    %1691 = vmatprep.subr.bf16.mxu0 0
    %1692 = vmatpush1.bf16.msra.mxu0 0
    %1693 = vmatprep.subr.bf16.mxu0 0
    %1694 = vmatpush1.bf16.msra.mxu0 0
    %1695 = vmatprep.subr.bf16.mxu0 0
    %1696 = vmatpush1.bf16.msra.mxu0 0
    %1697 = vmatprep.subr.bf16.mxu0 0
    %1698 = vmatpush1.bf16.msra.mxu0 0
    %1699 = vmatprep.subr.bf16.mxu0 0
    %1700 = vmatpush1.bf16.msra.mxu0 %v243
    %1701 = vmatprep.subr.bf16.mxu0 0
    %1702 = vmatpush2.bf16.msra.mxu0 0
    %1703 = vmatprep.subr.bf16.mxu0 0
    %1704 = vmatpush2.bf16.msra.mxu0 0
    %1705 = vmatprep.subr.bf16.mxu0 0
    %1706 = vmatpush2.bf16.msra.mxu0 0
    %1707 = vmatprep.subr.bf16.mxu0 0
    %1708 = vmatpush2.bf16.msra.mxu0 0
    %1709 = vmatprep.subr.bf16.mxu0 0
    %1710 = vmatpush2.bf16.msra.mxu0 0
    %1711 = vmatprep.subr.bf16.mxu0 0
    %1712 = vmatpush2.bf16.msra.mxu0 0
    %1713 = vmatprep.subr.bf16.mxu0 0
    %1714 = vmatpush2.bf16.msra.mxu0 0
    %1715 = vmatprep.subr.bf16.mxu0 0
    %1716 = vmatpush2.bf16.msra.mxu0 0
    %1717 = vmatprep.mubr.bf16.mxu0 0
    %1718 = vmatmul.mubr.bf16.gmra.mxu0 %v1683
    %v1719 = vpop.f32.mrf.mxu0
    %v1720 = vadd.f32 0.0, %v1719
    %v1721 = vpop.f32.mrf.mxu0
    %v1722 = vpop.f32.mrf.mxu0
    %v1723 = vpop.f32.mrf.mxu0
    %1724 = vdwg.mxu0
    %1725 = vrot.lane.b32.xlu0 %v1597, 64
    %v1726 = vpop.permute.xlu0 %1725
    %v1728 = vsel %vm289, %v1720, %v1726
    %v1729 = vpack.c.bf16 %v1728, %v1728
    %v1731 = vsel %vm316, %v1729, 0
    %1733 = vmatprep.subr.bf16.mxu0 0
    %1734 = vmatpush1.bf16.msra.mxu0 0
    %1735 = vmatprep.subr.bf16.mxu0 0
    %1736 = vmatpush1.bf16.msra.mxu0 0
    %1737 = vmatprep.subr.bf16.mxu0 0
    %1738 = vmatpush1.bf16.msra.mxu0 0
    %1739 = vmatprep.subr.bf16.mxu0 0
    %1740 = vmatpush1.bf16.msra.mxu0 0
    %1741 = vmatprep.subr.bf16.mxu0 0
    %1742 = vmatpush1.bf16.msra.mxu0 %v311
    %1743 = vmatprep.subr.bf16.mxu0 0
    %1744 = vmatpush1.bf16.msra.mxu0 %v310
    %1745 = vmatprep.subr.bf16.mxu0 0
    %1746 = vmatpush1.bf16.msra.mxu0 %v309
    %1747 = vmatprep.subr.bf16.mxu0 0
    %1748 = vmatpush1.bf16.msra.mxu0 %v308
    %1749 = vmatprep.subr.bf16.mxu0 0
    %1750 = vmatpush2.bf16.msra.mxu0 0
    %1751 = vmatprep.subr.bf16.mxu0 0
    %1752 = vmatpush2.bf16.msra.mxu0 0
    %1753 = vmatprep.subr.bf16.mxu0 0
    %1754 = vmatpush2.bf16.msra.mxu0 0
    %1755 = vmatprep.subr.bf16.mxu0 0
    %1756 = vmatpush2.bf16.msra.mxu0 0
    %1757 = vmatprep.subr.bf16.mxu0 0
    %1758 = vmatpush2.bf16.msra.mxu0 0
    %1759 = vmatprep.subr.bf16.mxu0 0
    %1760 = vmatpush2.bf16.msra.mxu0 0
    %1761 = vmatprep.subr.bf16.mxu0 0
    %1762 = vmatpush2.bf16.msra.mxu0 0
    %1763 = vmatprep.subr.bf16.mxu0 0
    %1764 = vmatpush2.bf16.msra.mxu0 0
    %1765 = vmatprep.mubr.bf16.mxu0 0
    %1766 = vmatmul.mubr.bf16.gmra.mxu0 %v1731
    %v1767 = vpop.f32.mrf.mxu0
    %v1768 = vadd.f32 %v174, %v1767
    %v1769 = vpop.f32.mrf.mxu0
    %v1770 = vpop.f32.mrf.mxu0
    %v1771 = vpop.f32.mrf.mxu0
    %1772 = vdwg.mxu0
    %v1773 = vxor.u32 %v1768, 2147483648
    %v1774 = vmul.f32 %v1773, 1.442695
    %v1775 = vpow.pop %v1774
    %v1776 = vadd.f32 %v1775, 1.0
    %v1777 = vrcp.pop %v1776
    %v1778 = vmul.f32 1.0, %v1777
    %v1779 = vtanh.pop %v1768
    %v1780 = vmul.f32 %v1778, %v1591
    %1782 = vrot.lane.b32.xlu0 %v1779, 64
    %v1783 = vpop.permute.xlu0 %1782
    %v1785 = vmul.f32 %v1778, %v1783
    %1787 = vrot.lane.b32.xlu0 %v1785, 32
    %v1788 = vpop.permute.xlu0 %1787
    %v1790 = vadd.f32 %v1780, %v1788
    %v1791 = vtanh.pop %v1790
    %1793 = vrot.lane.b32.xlu0 %v1791, 64
    %v1794 = vpop.permute.xlu0 %1793
    %v1796 = vmul.f32 %v1778, %v1794
    %1798 = vrot.lane.b32.xlu0 %v1796, 32
    %v1799 = vpop.permute.xlu0 %1798
    %1802 = vrot.lane.b32.xlu0 %v1674, 64
    %v1803 = vpop.permute.xlu0 %1802
    %v1805 = vsel %vm289, %v1799, %v1803
    %v1806 = vpack.c.bf16 %v1805, %v1805
    %v1808 = vsel %vm316, %v1806, 0
    %1810 = vmatprep.subr.bf16.mxu0 0
    %1811 = vmatpush1.bf16.msra.mxu0 0
    %1812 = vmatprep.subr.bf16.mxu0 0
    %1813 = vmatpush1.bf16.msra.mxu0 0
    %1814 = vmatprep.subr.bf16.mxu0 0
    %1815 = vmatpush1.bf16.msra.mxu0 0
    %1816 = vmatprep.subr.bf16.mxu0 0
    %1817 = vmatpush1.bf16.msra.mxu0 0
    %1818 = vmatprep.subr.bf16.mxu0 0
    %1819 = vmatpush1.bf16.msra.mxu0 %v409
    %1820 = vmatprep.subr.bf16.mxu0 0
    %1821 = vmatpush1.bf16.msra.mxu0 %v408
    %1822 = vmatprep.subr.bf16.mxu0 0
    %1823 = vmatpush1.bf16.msra.mxu0 %v407
    %1824 = vmatprep.subr.bf16.mxu0 0
    %1825 = vmatpush1.bf16.msra.mxu0 %v406
    %1826 = vmatprep.subr.bf16.mxu0 0
    %1827 = vmatpush2.bf16.msra.mxu0 0
    %1828 = vmatprep.subr.bf16.mxu0 0
    %1829 = vmatpush2.bf16.msra.mxu0 0
    %1830 = vmatprep.subr.bf16.mxu0 0
    %1831 = vmatpush2.bf16.msra.mxu0 0
    %1832 = vmatprep.subr.bf16.mxu0 0
    %1833 = vmatpush2.bf16.msra.mxu0 0
    %1834 = vmatprep.subr.bf16.mxu0 0
    %1835 = vmatpush2.bf16.msra.mxu0 0
    %1836 = vmatprep.subr.bf16.mxu0 0
    %1837 = vmatpush2.bf16.msra.mxu0 0
    %1838 = vmatprep.subr.bf16.mxu0 0
    %1839 = vmatpush2.bf16.msra.mxu0 0
    %1840 = vmatprep.subr.bf16.mxu0 0
    %1841 = vmatpush2.bf16.msra.mxu0 0
    %1842 = vmatprep.mubr.bf16.mxu0 0
    %1843 = vmatmul.mubr.bf16.gmra.mxu0 %v1808
    %v1844 = vpop.f32.mrf.mxu0
    %v1845 = vadd.f32 %v181, %v1844
    %v1846 = vpop.f32.mrf.mxu0
    %v1847 = vpop.f32.mrf.mxu0
    %v1848 = vpop.f32.mrf.mxu0
    %1849 = vdwg.mxu0
    %v1850 = vxor.u32 %v1845, 2147483648
    %v1851 = vmul.f32 %v1850, 1.442695
    %v1852 = vpow.pop %v1851
    %v1853 = vadd.f32 %v1852, 1.0
    %v1854 = vrcp.pop %v1853
    %v1855 = vmul.f32 1.0, %v1854
    %v1856 = vtanh.pop %v1845
    %v1857 = vmul.f32 %v1855, %v1668
    %1859 = vrot.lane.b32.xlu0 %v1856, 64
    %v1860 = vpop.permute.xlu0 %1859
    %v1862 = vmul.f32 %v1855, %v1860
    %1864 = vrot.lane.b32.xlu0 %v1862, 32
    %v1865 = vpop.permute.xlu0 %1864
    %v1867 = vadd.f32 %v1857, %v1865
    %v1868 = vtanh.pop %v1867
    %1870 = vrot.lane.b32.xlu0 %v1868, 64
    %v1871 = vpop.permute.xlu0 %1870
    %v1873 = vmul.f32 %v1855, %v1871
    %v1874 = vld [vmem:[%s1] sm:$0xff]
    %1875 = vset.pattern.permute.xlu0 0
    %1876 = vperm.xlu0 %1875, %v1874
    %v1877 = vpop.permute.xlu0 %1876
    %vm1878 = vcmp.eq.s32.totalorder %v230, %v1877
    %v1879 = vsel %vm1878, 1, 0
    %v1880 = vcvt.s32.f32 %v1879
    %v1881 = vpack.c.bf16 %v1880, %v1880
    %v1884 = vunpack.c.l.b16 %v215
    %v1885 = vunpack.c.l.b16 %v216
    %v1886 = vpack.c.b16 %v1885, %v1884
    %v1889 = vsel %vm245, %v1881, 0
    %1891 = vmatprep.subr.bf16.mxu0 0
    %1892 = vmatpush1.bf16.msra.mxu0 0
    %1893 = vmatprep.subr.bf16.mxu0 0
    %1894 = vmatpush1.bf16.msra.mxu0 0
    %1895 = vmatprep.subr.bf16.mxu0 0
    %1896 = vmatpush1.bf16.msra.mxu0 0
    %1897 = vmatprep.subr.bf16.mxu0 0
    %1898 = vmatpush1.bf16.msra.mxu0 0
    %1899 = vmatprep.subr.bf16.mxu0 0
    %1900 = vmatpush1.bf16.msra.mxu0 0
    %1901 = vmatprep.subr.bf16.mxu0 0
    %1902 = vmatpush1.bf16.msra.mxu0 0
    %1903 = vmatprep.subr.bf16.mxu0 0
    %1904 = vmatpush1.bf16.msra.mxu0 0
    %1905 = vmatprep.subr.bf16.mxu0 0
    %1906 = vmatpush1.bf16.msra.mxu0 %v1886
    %1907 = vmatprep.subr.bf16.mxu0 0
    %1908 = vmatpush2.bf16.msra.mxu0 0
    %1909 = vmatprep.subr.bf16.mxu0 0
    %1910 = vmatpush2.bf16.msra.mxu0 0
    %1911 = vmatprep.subr.bf16.mxu0 0
    %1912 = vmatpush2.bf16.msra.mxu0 0
    %1913 = vmatprep.subr.bf16.mxu0 0
    %1914 = vmatpush2.bf16.msra.mxu0 0
    %1915 = vmatprep.subr.bf16.mxu0 0
    %1916 = vmatpush2.bf16.msra.mxu0 0
    %1917 = vmatprep.subr.bf16.mxu0 0
    %1918 = vmatpush2.bf16.msra.mxu0 0
    %1919 = vmatprep.subr.bf16.mxu0 0
    %1920 = vmatpush2.bf16.msra.mxu0 0
    %1921 = vmatprep.subr.bf16.mxu0 0
    %1922 = vmatpush2.bf16.msra.mxu0 0
    %1923 = vmatprep.mubr.bf16.mxu0 0
    %1924 = vmatmul.mubr.bf16.gmra.mxu0 %v1889
    %v1925 = vpop.f32.mrf.mxu0
    %v1926 = vadd.f32 0.0, %v1925
    %v1927 = vpop.f32.mrf.mxu0
    %v1928 = vpop.f32.mrf.mxu0
    %v1929 = vpop.f32.mrf.mxu0
    %1930 = vdwg.mxu0
    %1931 = vrot.lane.b32.xlu0 %v1796, 64
    %v1932 = vpop.permute.xlu0 %1931
    %v1934 = vsel %vm289, %v1926, %v1932
    %v1935 = vpack.c.bf16 %v1934, %v1934
    %v1944 = vunpack.c.l.b16 %v183
    %v1945 = vunpack.c.l.b16 %v184
    %v1946 = vunpack.c.l.b16 %v185
    %v1947 = vunpack.c.l.b16 %v186
    %v1948 = vunpack.c.l.b16 %v187
    %v1949 = vunpack.c.l.b16 %v188
    %v1950 = vunpack.c.l.b16 %v189
    %v1951 = vunpack.c.l.b16 %v190
    %v1952 = vpack.c.b16 %v1945, %v1944
    %v1953 = vpack.c.b16 %v1947, %v1946
    %v1954 = vpack.c.b16 %v1949, %v1948
    %v1955 = vpack.c.b16 %v1951, %v1950
    %v1961 = vsel %vm316, %v1935, 0
    %1963 = vmatprep.subr.bf16.mxu0 0
    %1964 = vmatpush1.bf16.msra.mxu0 0
    %1965 = vmatprep.subr.bf16.mxu0 0
    %1966 = vmatpush1.bf16.msra.mxu0 0
    %1967 = vmatprep.subr.bf16.mxu0 0
    %1968 = vmatpush1.bf16.msra.mxu0 0
    %1969 = vmatprep.subr.bf16.mxu0 0
    %1970 = vmatpush1.bf16.msra.mxu0 0
    %1971 = vmatprep.subr.bf16.mxu0 0
    %1972 = vmatpush1.bf16.msra.mxu0 %v1955
    %1973 = vmatprep.subr.bf16.mxu0 0
    %1974 = vmatpush1.bf16.msra.mxu0 %v1954
    %1975 = vmatprep.subr.bf16.mxu0 0
    %1976 = vmatpush1.bf16.msra.mxu0 %v1953
    %1977 = vmatprep.subr.bf16.mxu0 0
    %1978 = vmatpush1.bf16.msra.mxu0 %v1952
    %1979 = vmatprep.subr.bf16.mxu0 0
    %1980 = vmatpush2.bf16.msra.mxu0 0
    %1981 = vmatprep.subr.bf16.mxu0 0
    %1982 = vmatpush2.bf16.msra.mxu0 0
    %1983 = vmatprep.subr.bf16.mxu0 0
    %1984 = vmatpush2.bf16.msra.mxu0 0
    %1985 = vmatprep.subr.bf16.mxu0 0
    %1986 = vmatpush2.bf16.msra.mxu0 0
    %1987 = vmatprep.subr.bf16.mxu0 0
    %1988 = vmatpush2.bf16.msra.mxu0 0
    %1989 = vmatprep.subr.bf16.mxu0 0
    %1990 = vmatpush2.bf16.msra.mxu0 0
    %1991 = vmatprep.subr.bf16.mxu0 0
    %1992 = vmatpush2.bf16.msra.mxu0 0
    %1993 = vmatprep.subr.bf16.mxu0 0
    %1994 = vmatpush2.bf16.msra.mxu0 0
    %1995 = vmatprep.mubr.bf16.mxu0 0
    %1996 = vmatmul.mubr.bf16.gmra.mxu0 %v1961
    %v1997 = vpop.f32.mrf.mxu0
    %v1998 = vadd.f32 %v204, %v1997
    %v1999 = vpop.f32.mrf.mxu0
    %v2000 = vpop.f32.mrf.mxu0
    %v2001 = vpop.f32.mrf.mxu0
    %2002 = vdwg.mxu0
    %v2003 = vxor.u32 %v1998, 2147483648
    %v2004 = vmul.f32 %v2003, 1.442695
    %v2005 = vpow.pop %v2004
    %v2006 = vadd.f32 %v2005, 1.0
    %v2007 = vrcp.pop %v2006
    %v2008 = vmul.f32 1.0, %v2007
    %v2009 = vtanh.pop %v1998
    %v2010 = vmul.f32 %v2008, %v1790
    %2012 = vrot.lane.b32.xlu0 %v2009, 64
    %v2013 = vpop.permute.xlu0 %2012
    %v2015 = vmul.f32 %v2008, %v2013
    %2017 = vrot.lane.b32.xlu0 %v2015, 32
    %v2018 = vpop.permute.xlu0 %2017
    %v2020 = vadd.f32 %v2010, %v2018
    %v2021 = vtanh.pop %v2020
    %2023 = vrot.lane.b32.xlu0 %v2021, 64
    %v2024 = vpop.permute.xlu0 %2023
    %v2026 = vmul.f32 %v2008, %v2024
    %2028 = vrot.lane.b32.xlu0 %v2026, 32
    %v2029 = vpop.permute.xlu0 %2028
    %2032 = vrot.lane.b32.xlu0 %v1873, 64
    %v2033 = vpop.permute.xlu0 %2032
    %v2035 = vsel %vm289, %v2029, %v2033
    %v2036 = vpack.c.bf16 %v2035, %v2035
    %v2045 = vunpack.c.l.b16 %v191
    %v2046 = vunpack.c.l.b16 %v192
    %v2047 = vunpack.c.l.b16 %v193
    %v2048 = vunpack.c.l.b16 %v194
    %v2049 = vunpack.c.l.b16 %v195
    %v2050 = vunpack.c.l.b16 %v196
    %v2051 = vunpack.c.l.b16 %v197
    %v2052 = vunpack.c.l.b16 %v198
    %v2053 = vpack.c.b16 %v2046, %v2045
    %v2054 = vpack.c.b16 %v2048, %v2047
    %v2055 = vpack.c.b16 %v2050, %v2049
    %v2056 = vpack.c.b16 %v2052, %v2051
    %v2062 = vsel %vm316, %v2036, 0
    %2064 = vmatprep.subr.bf16.mxu0 0
    %2065 = vmatpush1.bf16.msra.mxu0 0
    %2066 = vmatprep.subr.bf16.mxu0 0
    %2067 = vmatpush1.bf16.msra.mxu0 0
    %2068 = vmatprep.subr.bf16.mxu0 0
    %2069 = vmatpush1.bf16.msra.mxu0 0
    %2070 = vmatprep.subr.bf16.mxu0 0
    %2071 = vmatpush1.bf16.msra.mxu0 0
    %2072 = vmatprep.subr.bf16.mxu0 0
    %2073 = vmatpush1.bf16.msra.mxu0 %v2056
    %2074 = vmatprep.subr.bf16.mxu0 0
    %2075 = vmatpush1.bf16.msra.mxu0 %v2055
    %2076 = vmatprep.subr.bf16.mxu0 0
    %2077 = vmatpush1.bf16.msra.mxu0 %v2054
    %2078 = vmatprep.subr.bf16.mxu0 0
    %2079 = vmatpush1.bf16.msra.mxu0 %v2053
    %2080 = vmatprep.subr.bf16.mxu0 0
    %2081 = vmatpush2.bf16.msra.mxu0 0
    %2082 = vmatprep.subr.bf16.mxu0 0
    %2083 = vmatpush2.bf16.msra.mxu0 0
    %2084 = vmatprep.subr.bf16.mxu0 0
    %2085 = vmatpush2.bf16.msra.mxu0 0
    %2086 = vmatprep.subr.bf16.mxu0 0
    %2087 = vmatpush2.bf16.msra.mxu0 0
    %2088 = vmatprep.subr.bf16.mxu0 0
    %2089 = vmatpush2.bf16.msra.mxu0 0
    %2090 = vmatprep.subr.bf16.mxu0 0
    %2091 = vmatpush2.bf16.msra.mxu0 0
    %2092 = vmatprep.subr.bf16.mxu0 0
    %2093 = vmatpush2.bf16.msra.mxu0 0
    %2094 = vmatprep.subr.bf16.mxu0 0
    %2095 = vmatpush2.bf16.msra.mxu0 0
    %2096 = vmatprep.mubr.bf16.mxu0 0
    %2097 = vmatmul.mubr.bf16.gmra.mxu0 %v2062
    %v2098 = vpop.f32.mrf.mxu0
    %v2099 = vadd.f32 %v211, %v2098
    %v2100 = vpop.f32.mrf.mxu0
    %v2101 = vpop.f32.mrf.mxu0
    %v2102 = vpop.f32.mrf.mxu0
    %2103 = vdwg.mxu0
    %v2104 = vxor.u32 %v2099, 2147483648
    %v2105 = vmul.f32 %v2104, 1.442695
    %v2106 = vpow.pop %v2105
    %v2107 = vadd.f32 %v2106, 1.0
    %v2108 = vrcp.pop %v2107
    %v2109 = vmul.f32 1.0, %v2108
    %v2110 = vtanh.pop %v2099
    %v2111 = vmul.f32 %v2109, %v1867
    %2113 = vrot.lane.b32.xlu0 %v2110, 64
    %v2114 = vpop.permute.xlu0 %2113
    %v2116 = vmul.f32 %v2109, %v2114
    %2118 = vrot.lane.b32.xlu0 %v2116, 32
    %v2119 = vpop.permute.xlu0 %2118
    %v2121 = vadd.f32 %v2111, %v2119
    %v2122 = vtanh.pop %v2121
    %2124 = vrot.lane.b32.xlu0 %v2122, 64
    %v2125 = vpop.permute.xlu0 %2124
    %v2127 = vmul.f32 %v2109, %v2125
    %v2128 = vpack.c.bf16 %v2127, %v2127
    %2130 = vrot.lane.b32.xlu0 %v2128, 32
    %v2131 = vpop.permute.xlu0 %2130
    %v2136 = vunpack.c.l.b16 %v217
    %v2137 = vunpack.c.l.b16 %v218
    %v2138 = vunpack.c.l.b16 %v219
    %v2139 = vunpack.c.l.b16 %v220
    %v2140 = vpack.c.b16 %v2137, %v2136
    %v2141 = vpack.c.b16 %v2139, %v2138
    %v2145 = vsel %vm289, %v2131, 0
    %2147 = vmatprep.subr.bf16.mxu0 0
    %2148 = vmatpush1.bf16.msra.mxu0 0
    %2149 = vmatprep.subr.bf16.mxu0 0
    %2150 = vmatpush1.bf16.msra.mxu0 0
    %2151 = vmatprep.subr.bf16.mxu0 0
    %2152 = vmatpush1.bf16.msra.mxu0 0
    %2153 = vmatprep.subr.bf16.mxu0 0
    %2154 = vmatpush1.bf16.msra.mxu0 0
    %2155 = vmatprep.subr.bf16.mxu0 0
    %2156 = vmatpush1.bf16.msra.mxu0 0
    %2157 = vmatprep.subr.bf16.mxu0 0
    %2158 = vmatpush1.bf16.msra.mxu0 0
    %2159 = vmatprep.subr.bf16.mxu0 0
    %2160 = vmatpush1.bf16.msra.mxu0 %v2141
    %2161 = vmatprep.subr.bf16.mxu0 0
    %2162 = vmatpush1.bf16.msra.mxu0 %v2140
    %2163 = vmatprep.subr.bf16.mxu0 0
    %2164 = vmatpush2.bf16.msra.mxu0 0
    %2165 = vmatprep.subr.bf16.mxu0 0
    %2166 = vmatpush2.bf16.msra.mxu0 0
    %2167 = vmatprep.subr.bf16.mxu0 0
    %2168 = vmatpush2.bf16.msra.mxu0 0
    %2169 = vmatprep.subr.bf16.mxu0 0
    %2170 = vmatpush2.bf16.msra.mxu0 0
    %2171 = vmatprep.subr.bf16.mxu0 0
    %2172 = vmatpush2.bf16.msra.mxu0 0
    %2173 = vmatprep.subr.bf16.mxu0 0
    %2174 = vmatpush2.bf16.msra.mxu0 0
    %2175 = vmatprep.subr.bf16.mxu0 0
    %2176 = vmatpush2.bf16.msra.mxu0 0
    %2177 = vmatprep.subr.bf16.mxu0 0
    %2178 = vmatpush2.bf16.msra.mxu0 0
    %2179 = vmatprep.mubr.bf16.mxu0 0
    %2180 = vmatmul.mubr.bf16.gmra.mxu0 %v2145
    %v2181 = vpop.f32.mrf.mxu0
    %v2182 = vadd.f32 %v226, %v2181
    %v2183 = vpop.f32.mrf.mxu0
    %v2184 = vpop.f32.mrf.mxu0
    %v2185 = vpop.f32.mrf.mxu0
    %2186 = vdwg.mxu0
    %s2187 = scalar_lea.vmem %s15, 8
    %2188 = vst [vmem:[%s2187] sm:$0xff] %v2182
    %vm2189 = vcmp.lt.s32.totalorder %v230, 16
    %v2190 = vsel %vm2189, %v2182, -1e+30
    %2191 = vmax.xlane.f32.xlu0 %v2190
    %v2192 = vpop.xlane.xlu0 %2191
    %vm2193 = vcmp.eq.f32.partialorder %v2190, %v2192
    %v2194 = vsel %vm2193, %v230, 128
    %v2195 = vand.u32 %v2194, 65535
    %v2196 = vshra.s32 %v2194, 16
    %v2197 = vcvt.s32.f32 %v2195
    %v2198 = vcvt.s32.f32 %v2196
    %2199 = vmin.xlane.f32.xlu0 %v2198
    %v2200 = vpop.xlane.xlu0 %2199
    %vm2201 = vcmp.eq.f32.partialorder %v2198, %v2200
    %v2202 = vsel %vm2201, %v2197, inf
    %2203 = vmin.xlane.f32.xlu0 %v2202
    %v2204 = vpop.xlane.xlu0 %2203
    %v2205 = vcvt.f32.s32 %v2204
    %v2206 = vcvt.f32.s32 %v2200
    %v2207 = vshll.u32 %v2206, 16
    %v2208 = vadd.s32 %v2207, %v2205
    %s2209 = sld [smem:[#allocation2 + $0x1]]
    %p2210 = scmp.ne.s32.totalorder %s2209, 0
    %v2211 = vld [vmem:[%s1] sm:$0xff]
    %s2212 = scalar_select %p2210, 1, 0
    %v2213 = vstv %s2212
    %vm2214 = vcmp.eq.s32.totalorder %v2213, 1
    %v2215 = vsel %vm2214, %v2211, %v2208
    %2216 = vset.pattern.permute.xlu0 1
    %2217 = vperm.xlu0 %2216, %v2215
    %v2218 = vpop.permute.xlu0 %2217
    %vm2219 = vcmp.eq.s32.totalorder %v230, %v2218
    %v2220 = vsel %vm2219, 1, 0
    %v2221 = vcvt.s32.f32 %v2220
    %v2222 = vpack.c.bf16 %v2221, %v2221
    %v2224 = vsel %vm245, %v2222, 0
    %2226 = vmatprep.subr.bf16.mxu0 0
    %2227 = vmatpush1.bf16.msra.mxu0 0
    %2228 = vmatprep.subr.bf16.mxu0 0
    %2229 = vmatpush1.bf16.msra.mxu0 0
    %2230 = vmatprep.subr.bf16.mxu0 0
    %2231 = vmatpush1.bf16.msra.mxu0 0
    %2232 = vmatprep.subr.bf16.mxu0 0
    %2233 = vmatpush1.bf16.msra.mxu0 0
    %2234 = vmatprep.subr.bf16.mxu0 0
    %2235 = vmatpush1.bf16.msra.mxu0 0
    %2236 = vmatprep.subr.bf16.mxu0 0
    %2237 = vmatpush1.bf16.msra.mxu0 0
    %2238 = vmatprep.subr.bf16.mxu0 0
    %2239 = vmatpush1.bf16.msra.mxu0 0
    %2240 = vmatprep.subr.bf16.mxu0 0
    %2241 = vmatpush1.bf16.msra.mxu0 %v1886
    %2242 = vmatprep.subr.bf16.mxu0 0
    %2243 = vmatpush2.bf16.msra.mxu0 0
    %2244 = vmatprep.subr.bf16.mxu0 0
    %2245 = vmatpush2.bf16.msra.mxu0 0
    %2246 = vmatprep.subr.bf16.mxu0 0
    %2247 = vmatpush2.bf16.msra.mxu0 0
    %2248 = vmatprep.subr.bf16.mxu0 0
    %2249 = vmatpush2.bf16.msra.mxu0 0
    %2250 = vmatprep.subr.bf16.mxu0 0
    %2251 = vmatpush2.bf16.msra.mxu0 0
    %2252 = vmatprep.subr.bf16.mxu0 0
    %2253 = vmatpush2.bf16.msra.mxu0 0
    %2254 = vmatprep.subr.bf16.mxu0 0
    %2255 = vmatpush2.bf16.msra.mxu0 0
    %2256 = vmatprep.subr.bf16.mxu0 0
    %2257 = vmatpush2.bf16.msra.mxu0 0
    %2258 = vmatprep.mubr.bf16.mxu0 0
    %2259 = vmatmul.mubr.bf16.gmra.mxu0 %v2224
    %v2260 = vpop.f32.mrf.mxu0
    %v2261 = vadd.f32 0.0, %v2260
    %v2262 = vpop.f32.mrf.mxu0
    %v2263 = vpop.f32.mrf.mxu0
    %v2264 = vpop.f32.mrf.mxu0
    %2265 = vdwg.mxu0
    %2266 = vrot.lane.b32.xlu0 %v2026, 64
    %v2267 = vpop.permute.xlu0 %2266
    %v2269 = vsel %vm289, %v2261, %v2267
    %v2270 = vpack.c.bf16 %v2269, %v2269
    %v2272 = vsel %vm316, %v2270, 0
    %2274 = vmatprep.subr.bf16.mxu0 0
    %2275 = vmatpush1.bf16.msra.mxu0 0
    %2276 = vmatprep.subr.bf16.mxu0 0
    %2277 = vmatpush1.bf16.msra.mxu0 0
    %2278 = vmatprep.subr.bf16.mxu0 0
    %2279 = vmatpush1.bf16.msra.mxu0 0
    %2280 = vmatprep.subr.bf16.mxu0 0
    %2281 = vmatpush1.bf16.msra.mxu0 0
    %2282 = vmatprep.subr.bf16.mxu0 0
    %2283 = vmatpush1.bf16.msra.mxu0 %v1955
    %2284 = vmatprep.subr.bf16.mxu0 0
    %2285 = vmatpush1.bf16.msra.mxu0 %v1954
    %2286 = vmatprep.subr.bf16.mxu0 0
    %2287 = vmatpush1.bf16.msra.mxu0 %v1953
    %2288 = vmatprep.subr.bf16.mxu0 0
    %2289 = vmatpush1.bf16.msra.mxu0 %v1952
    %2290 = vmatprep.subr.bf16.mxu0 0
    %2291 = vmatpush2.bf16.msra.mxu0 0
    %2292 = vmatprep.subr.bf16.mxu0 0
    %2293 = vmatpush2.bf16.msra.mxu0 0
    %2294 = vmatprep.subr.bf16.mxu0 0
    %2295 = vmatpush2.bf16.msra.mxu0 0
    %2296 = vmatprep.subr.bf16.mxu0 0
    %2297 = vmatpush2.bf16.msra.mxu0 0
    %2298 = vmatprep.subr.bf16.mxu0 0
    %2299 = vmatpush2.bf16.msra.mxu0 0
    %2300 = vmatprep.subr.bf16.mxu0 0
    %2301 = vmatpush2.bf16.msra.mxu0 0
    %2302 = vmatprep.subr.bf16.mxu0 0
    %2303 = vmatpush2.bf16.msra.mxu0 0
    %2304 = vmatprep.subr.bf16.mxu0 0
    %2305 = vmatpush2.bf16.msra.mxu0 0
    %2306 = vmatprep.mubr.bf16.mxu0 0
    %2307 = vmatmul.mubr.bf16.gmra.mxu0 %v2272
    %v2308 = vpop.f32.mrf.mxu0
    %v2309 = vadd.f32 %v204, %v2308
    %v2310 = vpop.f32.mrf.mxu0
    %v2311 = vpop.f32.mrf.mxu0
    %v2312 = vpop.f32.mrf.mxu0
    %2313 = vdwg.mxu0
    %v2314 = vxor.u32 %v2309, 2147483648
    %v2315 = vmul.f32 %v2314, 1.442695
    %v2316 = vpow.pop %v2315
    %v2317 = vadd.f32 %v2316, 1.0
    %v2318 = vrcp.pop %v2317
    %v2319 = vmul.f32 1.0, %v2318
    %v2320 = vtanh.pop %v2309
    %v2321 = vmul.f32 %v2319, %v2020
    %2323 = vrot.lane.b32.xlu0 %v2320, 64
    %v2324 = vpop.permute.xlu0 %2323
    %v2326 = vmul.f32 %v2319, %v2324
    %2328 = vrot.lane.b32.xlu0 %v2326, 32
    %v2329 = vpop.permute.xlu0 %2328
    %v2331 = vadd.f32 %v2321, %v2329
    %v2332 = vtanh.pop %v2331
    %2334 = vrot.lane.b32.xlu0 %v2332, 64
    %v2335 = vpop.permute.xlu0 %2334
    %v2337 = vmul.f32 %v2319, %v2335
    %2339 = vrot.lane.b32.xlu0 %v2337, 32
    %v2340 = vpop.permute.xlu0 %2339
    %2343 = vrot.lane.b32.xlu0 %v2127, 64
    %v2344 = vpop.permute.xlu0 %2343
    %v2346 = vsel %vm289, %v2340, %v2344
    %v2347 = vpack.c.bf16 %v2346, %v2346
    %v2349 = vsel %vm316, %v2347, 0
    %2351 = vmatprep.subr.bf16.mxu0 0
    %2352 = vmatpush1.bf16.msra.mxu0 0
    %2353 = vmatprep.subr.bf16.mxu0 0
    %2354 = vmatpush1.bf16.msra.mxu0 0
    %2355 = vmatprep.subr.bf16.mxu0 0
    %2356 = vmatpush1.bf16.msra.mxu0 0
    %2357 = vmatprep.subr.bf16.mxu0 0
    %2358 = vmatpush1.bf16.msra.mxu0 0
    %2359 = vmatprep.subr.bf16.mxu0 0
    %2360 = vmatpush1.bf16.msra.mxu0 %v2056
    %2361 = vmatprep.subr.bf16.mxu0 0
    %2362 = vmatpush1.bf16.msra.mxu0 %v2055
    %2363 = vmatprep.subr.bf16.mxu0 0
    %2364 = vmatpush1.bf16.msra.mxu0 %v2054
    %2365 = vmatprep.subr.bf16.mxu0 0
    %2366 = vmatpush1.bf16.msra.mxu0 %v2053
    %2367 = vmatprep.subr.bf16.mxu0 0
    %2368 = vmatpush2.bf16.msra.mxu0 0
    %2369 = vmatprep.subr.bf16.mxu0 0
    %2370 = vmatpush2.bf16.msra.mxu0 0
    %2371 = vmatprep.subr.bf16.mxu0 0
    %2372 = vmatpush2.bf16.msra.mxu0 0
    %2373 = vmatprep.subr.bf16.mxu0 0
    %2374 = vmatpush2.bf16.msra.mxu0 0
    %2375 = vmatprep.subr.bf16.mxu0 0
    %2376 = vmatpush2.bf16.msra.mxu0 0
    %2377 = vmatprep.subr.bf16.mxu0 0
    %2378 = vmatpush2.bf16.msra.mxu0 0
    %2379 = vmatprep.subr.bf16.mxu0 0
    %2380 = vmatpush2.bf16.msra.mxu0 0
    %2381 = vmatprep.subr.bf16.mxu0 0
    %2382 = vmatpush2.bf16.msra.mxu0 0
    %2383 = vmatprep.mubr.bf16.mxu0 0
    %2384 = vmatmul.mubr.bf16.gmra.mxu0 %v2349
    %v2385 = vpop.f32.mrf.mxu0
    %v2386 = vadd.f32 %v211, %v2385
    %v2387 = vpop.f32.mrf.mxu0
    %v2388 = vpop.f32.mrf.mxu0
    %v2389 = vpop.f32.mrf.mxu0
    %2390 = vdwg.mxu0
    %v2391 = vxor.u32 %v2386, 2147483648
    %v2392 = vmul.f32 %v2391, 1.442695
    %v2393 = vpow.pop %v2392
    %v2394 = vadd.f32 %v2393, 1.0
    %v2395 = vrcp.pop %v2394
    %v2396 = vmul.f32 1.0, %v2395
    %v2397 = vtanh.pop %v2386
    %v2398 = vmul.f32 %v2396, %v2121
    %2400 = vrot.lane.b32.xlu0 %v2397, 64
    %v2401 = vpop.permute.xlu0 %2400
    %v2403 = vmul.f32 %v2396, %v2401
    %2405 = vrot.lane.b32.xlu0 %v2403, 32
    %v2406 = vpop.permute.xlu0 %2405
    %v2408 = vadd.f32 %v2398, %v2406
    %v2409 = vtanh.pop %v2408
    %2411 = vrot.lane.b32.xlu0 %v2409, 64
    %v2412 = vpop.permute.xlu0 %2411
    %v2414 = vmul.f32 %v2396, %v2412
    %v2415 = vpack.c.bf16 %v2414, %v2414
    %2417 = vrot.lane.b32.xlu0 %v2415, 32
    %v2418 = vpop.permute.xlu0 %2417
    %v2420 = vsel %vm289, %v2418, 0
    %2422 = vmatprep.subr.bf16.mxu0 0
    %2423 = vmatpush1.bf16.msra.mxu0 0
    %2424 = vmatprep.subr.bf16.mxu0 0
    %2425 = vmatpush1.bf16.msra.mxu0 0
    %2426 = vmatprep.subr.bf16.mxu0 0
    %2427 = vmatpush1.bf16.msra.mxu0 0
    %2428 = vmatprep.subr.bf16.mxu0 0
    %2429 = vmatpush1.bf16.msra.mxu0 0
    %2430 = vmatprep.subr.bf16.mxu0 0
    %2431 = vmatpush1.bf16.msra.mxu0 0
    %2432 = vmatprep.subr.bf16.mxu0 0
    %2433 = vmatpush1.bf16.msra.mxu0 0
    %2434 = vmatprep.subr.bf16.mxu0 0
    %2435 = vmatpush1.bf16.msra.mxu0 %v2141
    %2436 = vmatprep.subr.bf16.mxu0 0
    %2437 = vmatpush1.bf16.msra.mxu0 %v2140
    %2438 = vmatprep.subr.bf16.mxu0 0
    %2439 = vmatpush2.bf16.msra.mxu0 0
    %2440 = vmatprep.subr.bf16.mxu0 0
    %2441 = vmatpush2.bf16.msra.mxu0 0
    %2442 = vmatprep.subr.bf16.mxu0 0
    %2443 = vmatpush2.bf16.msra.mxu0 0
    %2444 = vmatprep.subr.bf16.mxu0 0
    %2445 = vmatpush2.bf16.msra.mxu0 0
    %2446 = vmatprep.subr.bf16.mxu0 0
    %2447 = vmatpush2.bf16.msra.mxu0 0
    %2448 = vmatprep.subr.bf16.mxu0 0
    %2449 = vmatpush2.bf16.msra.mxu0 0
    %2450 = vmatprep.subr.bf16.mxu0 0
    %2451 = vmatpush2.bf16.msra.mxu0 0
    %2452 = vmatprep.subr.bf16.mxu0 0
    %2453 = vmatpush2.bf16.msra.mxu0 0
    %2454 = vmatprep.mubr.bf16.mxu0 0
    %2455 = vmatmul.mubr.bf16.gmra.mxu0 %v2420
    %v2456 = vpop.f32.mrf.mxu0
    %v2457 = vadd.f32 %v226, %v2456
    %v2458 = vpop.f32.mrf.mxu0
    %v2459 = vpop.f32.mrf.mxu0
    %v2460 = vpop.f32.mrf.mxu0
    %2461 = vdwg.mxu0
    %s2462 = scalar_lea.vmem %s15, 16
    %2463 = vst [vmem:[%s2462] sm:$0xff] %v2457
    %v2464 = vsel %vm2189, %v2457, -1e+30
    %2465 = vmax.xlane.f32.xlu0 %v2464
    %v2466 = vpop.xlane.xlu0 %2465
    %vm2467 = vcmp.eq.f32.partialorder %v2464, %v2466
    %v2468 = vsel %vm2467, %v230, 128
    %v2469 = vand.u32 %v2468, 65535
    %v2470 = vshra.s32 %v2468, 16
    %v2471 = vcvt.s32.f32 %v2469
    %v2472 = vcvt.s32.f32 %v2470
    %2473 = vmin.xlane.f32.xlu0 %v2472
    %v2474 = vpop.xlane.xlu0 %2473
    %vm2475 = vcmp.eq.f32.partialorder %v2472, %v2474
    %v2476 = vsel %vm2475, %v2471, inf
    %2477 = vmin.xlane.f32.xlu0 %v2476
    %v2478 = vpop.xlane.xlu0 %2477
    %v2479 = vcvt.f32.s32 %v2478
    %v2480 = vcvt.f32.s32 %v2474
    %v2481 = vshll.u32 %v2480, 16
    %v2482 = vadd.s32 %v2481, %v2479
    %s2483 = sld [smem:[#allocation2 + $0x2]]
    %p2484 = scmp.ne.s32.totalorder %s2483, 0
    %v2485 = vld [vmem:[%s1] sm:$0xff]
    %s2486 = scalar_select %p2484, 1, 0
    %v2487 = vstv %s2486
    %vm2488 = vcmp.eq.s32.totalorder %v2487, 1
    %v2489 = vsel %vm2488, %v2485, %v2482
    %2490 = vset.pattern.permute.xlu0 2
    %2491 = vperm.xlu0 %2490, %v2489
    %v2492 = vpop.permute.xlu0 %2491
    %vm2493 = vcmp.eq.s32.totalorder %v230, %v2492
    %v2494 = vsel %vm2493, 1, 0
    %v2495 = vcvt.s32.f32 %v2494
    %v2496 = vpack.c.bf16 %v2495, %v2495
    %v2498 = vsel %vm245, %v2496, 0
    %2500 = vmatprep.subr.bf16.mxu0 0
    %2501 = vmatpush1.bf16.msra.mxu0 0
    %2502 = vmatprep.subr.bf16.mxu0 0
    %2503 = vmatpush1.bf16.msra.mxu0 0
    %2504 = vmatprep.subr.bf16.mxu0 0
    %2505 = vmatpush1.bf16.msra.mxu0 0
    %2506 = vmatprep.subr.bf16.mxu0 0
    %2507 = vmatpush1.bf16.msra.mxu0 0
    %2508 = vmatprep.subr.bf16.mxu0 0
    %2509 = vmatpush1.bf16.msra.mxu0 0
    %2510 = vmatprep.subr.bf16.mxu0 0
    %2511 = vmatpush1.bf16.msra.mxu0 0
    %2512 = vmatprep.subr.bf16.mxu0 0
    %2513 = vmatpush1.bf16.msra.mxu0 0
    %2514 = vmatprep.subr.bf16.mxu0 0
    %2515 = vmatpush1.bf16.msra.mxu0 %v1886
    %2516 = vmatprep.subr.bf16.mxu0 0
    %2517 = vmatpush2.bf16.msra.mxu0 0
    %2518 = vmatprep.subr.bf16.mxu0 0
    %2519 = vmatpush2.bf16.msra.mxu0 0
    %2520 = vmatprep.subr.bf16.mxu0 0
    %2521 = vmatpush2.bf16.msra.mxu0 0
    %2522 = vmatprep.subr.bf16.mxu0 0
    %2523 = vmatpush2.bf16.msra.mxu0 0
    %2524 = vmatprep.subr.bf16.mxu0 0
    %2525 = vmatpush2.bf16.msra.mxu0 0
    %2526 = vmatprep.subr.bf16.mxu0 0
    %2527 = vmatpush2.bf16.msra.mxu0 0
    %2528 = vmatprep.subr.bf16.mxu0 0
    %2529 = vmatpush2.bf16.msra.mxu0 0
    %2530 = vmatprep.subr.bf16.mxu0 0
    %2531 = vmatpush2.bf16.msra.mxu0 0
    %2532 = vmatprep.mubr.bf16.mxu0 0
    %2533 = vmatmul.mubr.bf16.gmra.mxu0 %v2498
    %v2534 = vpop.f32.mrf.mxu0
    %v2535 = vadd.f32 0.0, %v2534
    %v2536 = vpop.f32.mrf.mxu0
    %v2537 = vpop.f32.mrf.mxu0
    %v2538 = vpop.f32.mrf.mxu0
    %2539 = vdwg.mxu0
    %2540 = vrot.lane.b32.xlu0 %v2337, 64
    %v2541 = vpop.permute.xlu0 %2540
    %v2543 = vsel %vm289, %v2535, %v2541
    %v2544 = vpack.c.bf16 %v2543, %v2543
    %v2546 = vsel %vm316, %v2544, 0
    %2548 = vmatprep.subr.bf16.mxu0 0
    %2549 = vmatpush1.bf16.msra.mxu0 0
    %2550 = vmatprep.subr.bf16.mxu0 0
    %2551 = vmatpush1.bf16.msra.mxu0 0
    %2552 = vmatprep.subr.bf16.mxu0 0
    %2553 = vmatpush1.bf16.msra.mxu0 0
    %2554 = vmatprep.subr.bf16.mxu0 0
    %2555 = vmatpush1.bf16.msra.mxu0 0
    %2556 = vmatprep.subr.bf16.mxu0 0
    %2557 = vmatpush1.bf16.msra.mxu0 %v1955
    %2558 = vmatprep.subr.bf16.mxu0 0
    %2559 = vmatpush1.bf16.msra.mxu0 %v1954
    %2560 = vmatprep.subr.bf16.mxu0 0
    %2561 = vmatpush1.bf16.msra.mxu0 %v1953
    %2562 = vmatprep.subr.bf16.mxu0 0
    %2563 = vmatpush1.bf16.msra.mxu0 %v1952
    %2564 = vmatprep.subr.bf16.mxu0 0
    %2565 = vmatpush2.bf16.msra.mxu0 0
    %2566 = vmatprep.subr.bf16.mxu0 0
    %2567 = vmatpush2.bf16.msra.mxu0 0
    %2568 = vmatprep.subr.bf16.mxu0 0
    %2569 = vmatpush2.bf16.msra.mxu0 0
    %2570 = vmatprep.subr.bf16.mxu0 0
    %2571 = vmatpush2.bf16.msra.mxu0 0
    %2572 = vmatprep.subr.bf16.mxu0 0
    %2573 = vmatpush2.bf16.msra.mxu0 0
    %2574 = vmatprep.subr.bf16.mxu0 0
    %2575 = vmatpush2.bf16.msra.mxu0 0
    %2576 = vmatprep.subr.bf16.mxu0 0
    %2577 = vmatpush2.bf16.msra.mxu0 0
    %2578 = vmatprep.subr.bf16.mxu0 0
    %2579 = vmatpush2.bf16.msra.mxu0 0
    %2580 = vmatprep.mubr.bf16.mxu0 0
    %2581 = vmatmul.mubr.bf16.gmra.mxu0 %v2546
    %v2582 = vpop.f32.mrf.mxu0
    %v2583 = vadd.f32 %v204, %v2582
    %v2584 = vpop.f32.mrf.mxu0
    %v2585 = vpop.f32.mrf.mxu0
    %v2586 = vpop.f32.mrf.mxu0
    %2587 = vdwg.mxu0
    %v2588 = vxor.u32 %v2583, 2147483648
    %v2589 = vmul.f32 %v2588, 1.442695
    %v2590 = vpow.pop %v2589
    %v2591 = vadd.f32 %v2590, 1.0
    %v2592 = vrcp.pop %v2591
    %v2593 = vmul.f32 1.0, %v2592
    %v2594 = vtanh.pop %v2583
    %v2595 = vmul.f32 %v2593, %v2331
    %2597 = vrot.lane.b32.xlu0 %v2594, 64
    %v2598 = vpop.permute.xlu0 %2597
    %v2600 = vmul.f32 %v2593, %v2598
    %2602 = vrot.lane.b32.xlu0 %v2600, 32
    %v2603 = vpop.permute.xlu0 %2602
    %v2605 = vadd.f32 %v2595, %v2603
    %v2606 = vtanh.pop %v2605
    %2608 = vrot.lane.b32.xlu0 %v2606, 64
    %v2609 = vpop.permute.xlu0 %2608
    %v2611 = vmul.f32 %v2593, %v2609
    %2613 = vrot.lane.b32.xlu0 %v2611, 32
    %v2614 = vpop.permute.xlu0 %2613
    %2617 = vrot.lane.b32.xlu0 %v2414, 64
    %v2618 = vpop.permute.xlu0 %2617
    %v2620 = vsel %vm289, %v2614, %v2618
    %v2621 = vpack.c.bf16 %v2620, %v2620
    %v2623 = vsel %vm316, %v2621, 0
    %2625 = vmatprep.subr.bf16.mxu0 0
    %2626 = vmatpush1.bf16.msra.mxu0 0
    %2627 = vmatprep.subr.bf16.mxu0 0
    %2628 = vmatpush1.bf16.msra.mxu0 0
    %2629 = vmatprep.subr.bf16.mxu0 0
    %2630 = vmatpush1.bf16.msra.mxu0 0
    %2631 = vmatprep.subr.bf16.mxu0 0
    %2632 = vmatpush1.bf16.msra.mxu0 0
    %2633 = vmatprep.subr.bf16.mxu0 0
    %2634 = vmatpush1.bf16.msra.mxu0 %v2056
    %2635 = vmatprep.subr.bf16.mxu0 0
    %2636 = vmatpush1.bf16.msra.mxu0 %v2055
    %2637 = vmatprep.subr.bf16.mxu0 0
    %2638 = vmatpush1.bf16.msra.mxu0 %v2054
    %2639 = vmatprep.subr.bf16.mxu0 0
    %2640 = vmatpush1.bf16.msra.mxu0 %v2053
    %2641 = vmatprep.subr.bf16.mxu0 0
    %2642 = vmatpush2.bf16.msra.mxu0 0
    %2643 = vmatprep.subr.bf16.mxu0 0
    %2644 = vmatpush2.bf16.msra.mxu0 0
    %2645 = vmatprep.subr.bf16.mxu0 0
    %2646 = vmatpush2.bf16.msra.mxu0 0
    %2647 = vmatprep.subr.bf16.mxu0 0
    %2648 = vmatpush2.bf16.msra.mxu0 0
    %2649 = vmatprep.subr.bf16.mxu0 0
    %2650 = vmatpush2.bf16.msra.mxu0 0
    %2651 = vmatprep.subr.bf16.mxu0 0
    %2652 = vmatpush2.bf16.msra.mxu0 0
    %2653 = vmatprep.subr.bf16.mxu0 0
    %2654 = vmatpush2.bf16.msra.mxu0 0
    %2655 = vmatprep.subr.bf16.mxu0 0
    %2656 = vmatpush2.bf16.msra.mxu0 0
    %2657 = vmatprep.mubr.bf16.mxu0 0
    %2658 = vmatmul.mubr.bf16.gmra.mxu0 %v2623
    %v2659 = vpop.f32.mrf.mxu0
    %v2660 = vadd.f32 %v211, %v2659
    %v2661 = vpop.f32.mrf.mxu0
    %v2662 = vpop.f32.mrf.mxu0
    %v2663 = vpop.f32.mrf.mxu0
    %2664 = vdwg.mxu0
    %v2665 = vxor.u32 %v2660, 2147483648
    %v2666 = vmul.f32 %v2665, 1.442695
    %v2667 = vpow.pop %v2666
    %v2668 = vadd.f32 %v2667, 1.0
    %v2669 = vrcp.pop %v2668
    %v2670 = vmul.f32 1.0, %v2669
    %v2671 = vtanh.pop %v2660
    %v2672 = vmul.f32 %v2670, %v2408
    %2674 = vrot.lane.b32.xlu0 %v2671, 64
    %v2675 = vpop.permute.xlu0 %2674
    %v2677 = vmul.f32 %v2670, %v2675
    %2679 = vrot.lane.b32.xlu0 %v2677, 32
    %v2680 = vpop.permute.xlu0 %2679
    %v2682 = vadd.f32 %v2672, %v2680
    %v2683 = vtanh.pop %v2682
    %2685 = vrot.lane.b32.xlu0 %v2683, 64
    %v2686 = vpop.permute.xlu0 %2685
    %v2688 = vmul.f32 %v2670, %v2686
    %v2689 = vpack.c.bf16 %v2688, %v2688
    %2691 = vrot.lane.b32.xlu0 %v2689, 32
    %v2692 = vpop.permute.xlu0 %2691
    %v2694 = vsel %vm289, %v2692, 0
    %2696 = vmatprep.subr.bf16.mxu0 0
    %2697 = vmatpush1.bf16.msra.mxu0 0
    %2698 = vmatprep.subr.bf16.mxu0 0
    %2699 = vmatpush1.bf16.msra.mxu0 0
    %2700 = vmatprep.subr.bf16.mxu0 0
    %2701 = vmatpush1.bf16.msra.mxu0 0
    %2702 = vmatprep.subr.bf16.mxu0 0
    %2703 = vmatpush1.bf16.msra.mxu0 0
    %2704 = vmatprep.subr.bf16.mxu0 0
    %2705 = vmatpush1.bf16.msra.mxu0 0
    %2706 = vmatprep.subr.bf16.mxu0 0
    %2707 = vmatpush1.bf16.msra.mxu0 0
    %2708 = vmatprep.subr.bf16.mxu0 0
    %2709 = vmatpush1.bf16.msra.mxu0 %v2141
    %2710 = vmatprep.subr.bf16.mxu0 0
    %2711 = vmatpush1.bf16.msra.mxu0 %v2140
    %2712 = vmatprep.subr.bf16.mxu0 0
    %2713 = vmatpush2.bf16.msra.mxu0 0
    %2714 = vmatprep.subr.bf16.mxu0 0
    %2715 = vmatpush2.bf16.msra.mxu0 0
    %2716 = vmatprep.subr.bf16.mxu0 0
    %2717 = vmatpush2.bf16.msra.mxu0 0
    %2718 = vmatprep.subr.bf16.mxu0 0
    %2719 = vmatpush2.bf16.msra.mxu0 0
    %2720 = vmatprep.subr.bf16.mxu0 0
    %2721 = vmatpush2.bf16.msra.mxu0 0
    %2722 = vmatprep.subr.bf16.mxu0 0
    %2723 = vmatpush2.bf16.msra.mxu0 0
    %2724 = vmatprep.subr.bf16.mxu0 0
    %2725 = vmatpush2.bf16.msra.mxu0 0
    %2726 = vmatprep.subr.bf16.mxu0 0
    %2727 = vmatpush2.bf16.msra.mxu0 0
    %2728 = vmatprep.mubr.bf16.mxu0 0
    %2729 = vmatmul.mubr.bf16.gmra.mxu0 %v2694
    %v2730 = vpop.f32.mrf.mxu0
    %v2731 = vadd.f32 %v226, %v2730
    %v2732 = vpop.f32.mrf.mxu0
    %v2733 = vpop.f32.mrf.mxu0
    %v2734 = vpop.f32.mrf.mxu0
    %2735 = vdwg.mxu0
    %s2736 = scalar_lea.vmem %s15, 24
    %2737 = vst [vmem:[%s2736] sm:$0xff] %v2731
    %v2738 = vsel %vm2189, %v2731, -1e+30
    %2739 = vmax.xlane.f32.xlu0 %v2738
    %v2740 = vpop.xlane.xlu0 %2739
    %vm2741 = vcmp.eq.f32.partialorder %v2738, %v2740
    %v2742 = vsel %vm2741, %v230, 128
    %v2743 = vand.u32 %v2742, 65535
    %v2744 = vshra.s32 %v2742, 16
    %v2745 = vcvt.s32.f32 %v2743
    %v2746 = vcvt.s32.f32 %v2744
    %2747 = vmin.xlane.f32.xlu0 %v2746
    %v2748 = vpop.xlane.xlu0 %2747
    %vm2749 = vcmp.eq.f32.partialorder %v2746, %v2748
    %v2750 = vsel %vm2749, %v2745, inf
    %2751 = vmin.xlane.f32.xlu0 %v2750
    %v2752 = vpop.xlane.xlu0 %2751
    %v2753 = vcvt.f32.s32 %v2752
    %v2754 = vcvt.f32.s32 %v2748
    %v2755 = vshll.u32 %v2754, 16
    %v2756 = vadd.s32 %v2755, %v2753
    %s2757 = sld [smem:[#allocation2 + $0x3]]
    %p2758 = scmp.ne.s32.totalorder %s2757, 0
    %v2759 = vld [vmem:[%s1] sm:$0xff]
    %s2760 = scalar_select %p2758, 1, 0
    %v2761 = vstv %s2760
    %vm2762 = vcmp.eq.s32.totalorder %v2761, 1
    %v2763 = vsel %vm2762, %v2759, %v2756
    %2764 = vset.pattern.permute.xlu0 3
    %2765 = vperm.xlu0 %2764, %v2763
    %v2766 = vpop.permute.xlu0 %2765
    %vm2767 = vcmp.eq.s32.totalorder %v230, %v2766
    %v2768 = vsel %vm2767, 1, 0
    %v2769 = vcvt.s32.f32 %v2768
    %v2770 = vpack.c.bf16 %v2769, %v2769
    %v2772 = vsel %vm245, %v2770, 0
    %2774 = vmatprep.subr.bf16.mxu0 0
    %2775 = vmatpush1.bf16.msra.mxu0 0
    %2776 = vmatprep.subr.bf16.mxu0 0
    %2777 = vmatpush1.bf16.msra.mxu0 0
    %2778 = vmatprep.subr.bf16.mxu0 0
    %2779 = vmatpush1.bf16.msra.mxu0 0
    %2780 = vmatprep.subr.bf16.mxu0 0
    %2781 = vmatpush1.bf16.msra.mxu0 0
    %2782 = vmatprep.subr.bf16.mxu0 0
    %2783 = vmatpush1.bf16.msra.mxu0 0
    %2784 = vmatprep.subr.bf16.mxu0 0
    %2785 = vmatpush1.bf16.msra.mxu0 0
    %2786 = vmatprep.subr.bf16.mxu0 0
    %2787 = vmatpush1.bf16.msra.mxu0 0
    %2788 = vmatprep.subr.bf16.mxu0 0
    %2789 = vmatpush1.bf16.msra.mxu0 %v1886
    %2790 = vmatprep.subr.bf16.mxu0 0
    %2791 = vmatpush2.bf16.msra.mxu0 0
    %2792 = vmatprep.subr.bf16.mxu0 0
    %2793 = vmatpush2.bf16.msra.mxu0 0
    %2794 = vmatprep.subr.bf16.mxu0 0
    %2795 = vmatpush2.bf16.msra.mxu0 0
    %2796 = vmatprep.subr.bf16.mxu0 0
    %2797 = vmatpush2.bf16.msra.mxu0 0
    %2798 = vmatprep.subr.bf16.mxu0 0
    %2799 = vmatpush2.bf16.msra.mxu0 0
    %2800 = vmatprep.subr.bf16.mxu0 0
    %2801 = vmatpush2.bf16.msra.mxu0 0
    %2802 = vmatprep.subr.bf16.mxu0 0
    %2803 = vmatpush2.bf16.msra.mxu0 0
    %2804 = vmatprep.subr.bf16.mxu0 0
    %2805 = vmatpush2.bf16.msra.mxu0 0
    %2806 = vmatprep.mubr.bf16.mxu0 0
    %2807 = vmatmul.mubr.bf16.gmra.mxu0 %v2772
    %v2808 = vpop.f32.mrf.mxu0
    %v2809 = vadd.f32 0.0, %v2808
    %v2810 = vpop.f32.mrf.mxu0
    %v2811 = vpop.f32.mrf.mxu0
    %v2812 = vpop.f32.mrf.mxu0
    %2813 = vdwg.mxu0
    %2814 = vrot.lane.b32.xlu0 %v2611, 64
    %v2815 = vpop.permute.xlu0 %2814
    %v2817 = vsel %vm289, %v2809, %v2815
    %v2818 = vpack.c.bf16 %v2817, %v2817
    %v2820 = vsel %vm316, %v2818, 0
    %2822 = vmatprep.subr.bf16.mxu0 0
    %2823 = vmatpush1.bf16.msra.mxu0 0
    %2824 = vmatprep.subr.bf16.mxu0 0
    %2825 = vmatpush1.bf16.msra.mxu0 0
    %2826 = vmatprep.subr.bf16.mxu0 0
    %2827 = vmatpush1.bf16.msra.mxu0 0
    %2828 = vmatprep.subr.bf16.mxu0 0
    %2829 = vmatpush1.bf16.msra.mxu0 0
    %2830 = vmatprep.subr.bf16.mxu0 0
    %2831 = vmatpush1.bf16.msra.mxu0 %v1955
    %2832 = vmatprep.subr.bf16.mxu0 0
    %2833 = vmatpush1.bf16.msra.mxu0 %v1954
    %2834 = vmatprep.subr.bf16.mxu0 0
    %2835 = vmatpush1.bf16.msra.mxu0 %v1953
    %2836 = vmatprep.subr.bf16.mxu0 0
    %2837 = vmatpush1.bf16.msra.mxu0 %v1952
    %2838 = vmatprep.subr.bf16.mxu0 0
    %2839 = vmatpush2.bf16.msra.mxu0 0
    %2840 = vmatprep.subr.bf16.mxu0 0
    %2841 = vmatpush2.bf16.msra.mxu0 0
    %2842 = vmatprep.subr.bf16.mxu0 0
    %2843 = vmatpush2.bf16.msra.mxu0 0
    %2844 = vmatprep.subr.bf16.mxu0 0
    %2845 = vmatpush2.bf16.msra.mxu0 0
    %2846 = vmatprep.subr.bf16.mxu0 0
    %2847 = vmatpush2.bf16.msra.mxu0 0
    %2848 = vmatprep.subr.bf16.mxu0 0
    %2849 = vmatpush2.bf16.msra.mxu0 0
    %2850 = vmatprep.subr.bf16.mxu0 0
    %2851 = vmatpush2.bf16.msra.mxu0 0
    %2852 = vmatprep.subr.bf16.mxu0 0
    %2853 = vmatpush2.bf16.msra.mxu0 0
    %2854 = vmatprep.mubr.bf16.mxu0 0
    %2855 = vmatmul.mubr.bf16.gmra.mxu0 %v2820
    %v2856 = vpop.f32.mrf.mxu0
    %v2857 = vadd.f32 %v204, %v2856
    %v2858 = vpop.f32.mrf.mxu0
    %v2859 = vpop.f32.mrf.mxu0
    %v2860 = vpop.f32.mrf.mxu0
    %2861 = vdwg.mxu0
    %v2862 = vxor.u32 %v2857, 2147483648
    %v2863 = vmul.f32 %v2862, 1.442695
    %v2864 = vpow.pop %v2863
    %v2865 = vadd.f32 %v2864, 1.0
    %v2866 = vrcp.pop %v2865
    %v2867 = vmul.f32 1.0, %v2866
    %v2868 = vtanh.pop %v2857
    %v2869 = vmul.f32 %v2867, %v2605
    %2871 = vrot.lane.b32.xlu0 %v2868, 64
    %v2872 = vpop.permute.xlu0 %2871
    %v2874 = vmul.f32 %v2867, %v2872
    %2876 = vrot.lane.b32.xlu0 %v2874, 32
    %v2877 = vpop.permute.xlu0 %2876
    %v2879 = vadd.f32 %v2869, %v2877
    %v2880 = vtanh.pop %v2879
    %2882 = vrot.lane.b32.xlu0 %v2880, 64
    %v2883 = vpop.permute.xlu0 %2882
    %v2885 = vmul.f32 %v2867, %v2883
    %2887 = vrot.lane.b32.xlu0 %v2885, 32
    %v2888 = vpop.permute.xlu0 %2887
    %2891 = vrot.lane.b32.xlu0 %v2688, 64
    %v2892 = vpop.permute.xlu0 %2891
    %v2894 = vsel %vm289, %v2888, %v2892
    %v2895 = vpack.c.bf16 %v2894, %v2894
    %v2897 = vsel %vm316, %v2895, 0
    %2899 = vmatprep.subr.bf16.mxu0 0
    %2900 = vmatpush1.bf16.msra.mxu0 0
    %2901 = vmatprep.subr.bf16.mxu0 0
    %2902 = vmatpush1.bf16.msra.mxu0 0
    %2903 = vmatprep.subr.bf16.mxu0 0
    %2904 = vmatpush1.bf16.msra.mxu0 0
    %2905 = vmatprep.subr.bf16.mxu0 0
    %2906 = vmatpush1.bf16.msra.mxu0 0
    %2907 = vmatprep.subr.bf16.mxu0 0
    %2908 = vmatpush1.bf16.msra.mxu0 %v2056
    %2909 = vmatprep.subr.bf16.mxu0 0
    %2910 = vmatpush1.bf16.msra.mxu0 %v2055
    %2911 = vmatprep.subr.bf16.mxu0 0
    %2912 = vmatpush1.bf16.msra.mxu0 %v2054
    %2913 = vmatprep.subr.bf16.mxu0 0
    %2914 = vmatpush1.bf16.msra.mxu0 %v2053
    %2915 = vmatprep.subr.bf16.mxu0 0
    %2916 = vmatpush2.bf16.msra.mxu0 0
    %2917 = vmatprep.subr.bf16.mxu0 0
    %2918 = vmatpush2.bf16.msra.mxu0 0
    %2919 = vmatprep.subr.bf16.mxu0 0
    %2920 = vmatpush2.bf16.msra.mxu0 0
    %2921 = vmatprep.subr.bf16.mxu0 0
    %2922 = vmatpush2.bf16.msra.mxu0 0
    %2923 = vmatprep.subr.bf16.mxu0 0
    %2924 = vmatpush2.bf16.msra.mxu0 0
    %2925 = vmatprep.subr.bf16.mxu0 0
    %2926 = vmatpush2.bf16.msra.mxu0 0
    %2927 = vmatprep.subr.bf16.mxu0 0
    %2928 = vmatpush2.bf16.msra.mxu0 0
    %2929 = vmatprep.subr.bf16.mxu0 0
    %2930 = vmatpush2.bf16.msra.mxu0 0
    %2931 = vmatprep.mubr.bf16.mxu0 0
    %2932 = vmatmul.mubr.bf16.gmra.mxu0 %v2897
    %v2933 = vpop.f32.mrf.mxu0
    %v2934 = vadd.f32 %v211, %v2933
    %v2935 = vpop.f32.mrf.mxu0
    %v2936 = vpop.f32.mrf.mxu0
    %v2937 = vpop.f32.mrf.mxu0
    %2938 = vdwg.mxu0
    %v2939 = vxor.u32 %v2934, 2147483648
    %v2940 = vmul.f32 %v2939, 1.442695
    %v2941 = vpow.pop %v2940
    %v2942 = vadd.f32 %v2941, 1.0
    %v2943 = vrcp.pop %v2942
    %v2944 = vmul.f32 1.0, %v2943
    %v2945 = vtanh.pop %v2934
    %v2946 = vmul.f32 %v2944, %v2682
    %2948 = vrot.lane.b32.xlu0 %v2945, 64
    %v2949 = vpop.permute.xlu0 %2948
    %v2951 = vmul.f32 %v2944, %v2949
    %2953 = vrot.lane.b32.xlu0 %v2951, 32
    %v2954 = vpop.permute.xlu0 %2953
    %v2956 = vadd.f32 %v2946, %v2954
    %v2957 = vtanh.pop %v2956
    %2959 = vrot.lane.b32.xlu0 %v2957, 64
    %v2960 = vpop.permute.xlu0 %2959
    %v2962 = vmul.f32 %v2944, %v2960
    %v2963 = vpack.c.bf16 %v2962, %v2962
    %2965 = vrot.lane.b32.xlu0 %v2963, 32
    %v2966 = vpop.permute.xlu0 %2965
    %v2968 = vsel %vm289, %v2966, 0
    %2970 = vmatprep.subr.bf16.mxu0 0
    %2971 = vmatpush1.bf16.msra.mxu0 0
    %2972 = vmatprep.subr.bf16.mxu0 0
    %2973 = vmatpush1.bf16.msra.mxu0 0
    %2974 = vmatprep.subr.bf16.mxu0 0
    %2975 = vmatpush1.bf16.msra.mxu0 0
    %2976 = vmatprep.subr.bf16.mxu0 0
    %2977 = vmatpush1.bf16.msra.mxu0 0
    %2978 = vmatprep.subr.bf16.mxu0 0
    %2979 = vmatpush1.bf16.msra.mxu0 0
    %2980 = vmatprep.subr.bf16.mxu0 0
    %2981 = vmatpush1.bf16.msra.mxu0 0
    %2982 = vmatprep.subr.bf16.mxu0 0
    %2983 = vmatpush1.bf16.msra.mxu0 %v2141
    %2984 = vmatprep.subr.bf16.mxu0 0
    %2985 = vmatpush1.bf16.msra.mxu0 %v2140
    %2986 = vmatprep.subr.bf16.mxu0 0
    %2987 = vmatpush2.bf16.msra.mxu0 0
    %2988 = vmatprep.subr.bf16.mxu0 0
    %2989 = vmatpush2.bf16.msra.mxu0 0
    %2990 = vmatprep.subr.bf16.mxu0 0
    %2991 = vmatpush2.bf16.msra.mxu0 0
    %2992 = vmatprep.subr.bf16.mxu0 0
    %2993 = vmatpush2.bf16.msra.mxu0 0
    %2994 = vmatprep.subr.bf16.mxu0 0
    %2995 = vmatpush2.bf16.msra.mxu0 0
    %2996 = vmatprep.subr.bf16.mxu0 0
    %2997 = vmatpush2.bf16.msra.mxu0 0
    %2998 = vmatprep.subr.bf16.mxu0 0
    %2999 = vmatpush2.bf16.msra.mxu0 0
    %3000 = vmatprep.subr.bf16.mxu0 0
    %3001 = vmatpush2.bf16.msra.mxu0 0
    %3002 = vmatprep.mubr.bf16.mxu0 0
    %3003 = vmatmul.mubr.bf16.gmra.mxu0 %v2968
    %v3004 = vpop.f32.mrf.mxu0
    %v3005 = vadd.f32 %v226, %v3004
    %v3006 = vpop.f32.mrf.mxu0
    %v3007 = vpop.f32.mrf.mxu0
    %v3008 = vpop.f32.mrf.mxu0
    %3009 = vdwg.mxu0
    %s3010 = scalar_lea.vmem %s15, 32
    %3011 = vst [vmem:[%s3010] sm:$0xff] %v3005
    %v3012 = vsel %vm2189, %v3005, -1e+30
    %3013 = vmax.xlane.f32.xlu0 %v3012
    %v3014 = vpop.xlane.xlu0 %3013
    %vm3015 = vcmp.eq.f32.partialorder %v3012, %v3014
    %v3016 = vsel %vm3015, %v230, 128
    %v3017 = vand.u32 %v3016, 65535
    %v3018 = vshra.s32 %v3016, 16
    %v3019 = vcvt.s32.f32 %v3017
    %v3020 = vcvt.s32.f32 %v3018
    %3021 = vmin.xlane.f32.xlu0 %v3020
    %v3022 = vpop.xlane.xlu0 %3021
    %vm3023 = vcmp.eq.f32.partialorder %v3020, %v3022
    %v3024 = vsel %vm3023, %v3019, inf
    %3025 = vmin.xlane.f32.xlu0 %v3024
    %v3026 = vpop.xlane.xlu0 %3025
    %v3027 = vcvt.f32.s32 %v3026
    %v3028 = vcvt.f32.s32 %v3022
    %v3029 = vshll.u32 %v3028, 16
    %v3030 = vadd.s32 %v3029, %v3027
    %s3031 = sld [smem:[#allocation2 + $0x4]]
    %p3032 = scmp.ne.s32.totalorder %s3031, 0
    %v3033 = vld [vmem:[%s1] sm:$0xff]
    %s3034 = scalar_select %p3032, 1, 0
    %v3035 = vstv %s3034
    %vm3036 = vcmp.eq.s32.totalorder %v3035, 1
    %v3037 = vsel %vm3036, %v3033, %v3030
    %3038 = vset.pattern.permute.xlu0 4
    %3039 = vperm.xlu0 %3038, %v3037
    %v3040 = vpop.permute.xlu0 %3039
    %vm3041 = vcmp.eq.s32.totalorder %v230, %v3040
    %v3042 = vsel %vm3041, 1, 0
    %v3043 = vcvt.s32.f32 %v3042
    %v3044 = vpack.c.bf16 %v3043, %v3043
    %v3046 = vsel %vm245, %v3044, 0
    %3048 = vmatprep.subr.bf16.mxu0 0
    %3049 = vmatpush1.bf16.msra.mxu0 0
    %3050 = vmatprep.subr.bf16.mxu0 0
    %3051 = vmatpush1.bf16.msra.mxu0 0
    %3052 = vmatprep.subr.bf16.mxu0 0
    %3053 = vmatpush1.bf16.msra.mxu0 0
    %3054 = vmatprep.subr.bf16.mxu0 0
    %3055 = vmatpush1.bf16.msra.mxu0 0
    %3056 = vmatprep.subr.bf16.mxu0 0
    %3057 = vmatpush1.bf16.msra.mxu0 0
    %3058 = vmatprep.subr.bf16.mxu0 0
    %3059 = vmatpush1.bf16.msra.mxu0 0
    %3060 = vmatprep.subr.bf16.mxu0 0
    %3061 = vmatpush1.bf16.msra.mxu0 0
    %3062 = vmatprep.subr.bf16.mxu0 0
    %3063 = vmatpush1.bf16.msra.mxu0 %v1886
    %3064 = vmatprep.subr.bf16.mxu0 0
    %3065 = vmatpush2.bf16.msra.mxu0 0
    %3066 = vmatprep.subr.bf16.mxu0 0
    %3067 = vmatpush2.bf16.msra.mxu0 0
    %3068 = vmatprep.subr.bf16.mxu0 0
    %3069 = vmatpush2.bf16.msra.mxu0 0
    %3070 = vmatprep.subr.bf16.mxu0 0
    %3071 = vmatpush2.bf16.msra.mxu0 0
    %3072 = vmatprep.subr.bf16.mxu0 0
    %3073 = vmatpush2.bf16.msra.mxu0 0
    %3074 = vmatprep.subr.bf16.mxu0 0
    %3075 = vmatpush2.bf16.msra.mxu0 0
    %3076 = vmatprep.subr.bf16.mxu0 0
    %3077 = vmatpush2.bf16.msra.mxu0 0
    %3078 = vmatprep.subr.bf16.mxu0 0
    %3079 = vmatpush2.bf16.msra.mxu0 0
    %3080 = vmatprep.mubr.bf16.mxu0 0
    %3081 = vmatmul.mubr.bf16.gmra.mxu0 %v3046
    %v3082 = vpop.f32.mrf.mxu0
    %v3083 = vadd.f32 0.0, %v3082
    %v3084 = vpop.f32.mrf.mxu0
    %v3085 = vpop.f32.mrf.mxu0
    %v3086 = vpop.f32.mrf.mxu0
    %3087 = vdwg.mxu0
    %3088 = vrot.lane.b32.xlu0 %v2885, 64
    %v3089 = vpop.permute.xlu0 %3088
    %v3091 = vsel %vm289, %v3083, %v3089
    %v3092 = vpack.c.bf16 %v3091, %v3091
    %v3094 = vsel %vm316, %v3092, 0
    %3096 = vmatprep.subr.bf16.mxu0 0
    %3097 = vmatpush1.bf16.msra.mxu0 0
    %3098 = vmatprep.subr.bf16.mxu0 0
    %3099 = vmatpush1.bf16.msra.mxu0 0
    %3100 = vmatprep.subr.bf16.mxu0 0
    %3101 = vmatpush1.bf16.msra.mxu0 0
    %3102 = vmatprep.subr.bf16.mxu0 0
    %3103 = vmatpush1.bf16.msra.mxu0 0
    %3104 = vmatprep.subr.bf16.mxu0 0
    %3105 = vmatpush1.bf16.msra.mxu0 %v1955
    %3106 = vmatprep.subr.bf16.mxu0 0
    %3107 = vmatpush1.bf16.msra.mxu0 %v1954
    %3108 = vmatprep.subr.bf16.mxu0 0
    %3109 = vmatpush1.bf16.msra.mxu0 %v1953
    %3110 = vmatprep.subr.bf16.mxu0 0
    %3111 = vmatpush1.bf16.msra.mxu0 %v1952
    %3112 = vmatprep.subr.bf16.mxu0 0
    %3113 = vmatpush2.bf16.msra.mxu0 0
    %3114 = vmatprep.subr.bf16.mxu0 0
    %3115 = vmatpush2.bf16.msra.mxu0 0
    %3116 = vmatprep.subr.bf16.mxu0 0
    %3117 = vmatpush2.bf16.msra.mxu0 0
    %3118 = vmatprep.subr.bf16.mxu0 0
    %3119 = vmatpush2.bf16.msra.mxu0 0
    %3120 = vmatprep.subr.bf16.mxu0 0
    %3121 = vmatpush2.bf16.msra.mxu0 0
    %3122 = vmatprep.subr.bf16.mxu0 0
    %3123 = vmatpush2.bf16.msra.mxu0 0
    %3124 = vmatprep.subr.bf16.mxu0 0
    %3125 = vmatpush2.bf16.msra.mxu0 0
    %3126 = vmatprep.subr.bf16.mxu0 0
    %3127 = vmatpush2.bf16.msra.mxu0 0
    %3128 = vmatprep.mubr.bf16.mxu0 0
    %3129 = vmatmul.mubr.bf16.gmra.mxu0 %v3094
    %v3130 = vpop.f32.mrf.mxu0
    %v3131 = vadd.f32 %v204, %v3130
    %v3132 = vpop.f32.mrf.mxu0
    %v3133 = vpop.f32.mrf.mxu0
    %v3134 = vpop.f32.mrf.mxu0
    %3135 = vdwg.mxu0
    %v3136 = vxor.u32 %v3131, 2147483648
    %v3137 = vmul.f32 %v3136, 1.442695
    %v3138 = vpow.pop %v3137
    %v3139 = vadd.f32 %v3138, 1.0
    %v3140 = vrcp.pop %v3139
    %v3141 = vmul.f32 1.0, %v3140
    %v3142 = vtanh.pop %v3131
    %v3143 = vmul.f32 %v3141, %v2879
    %3145 = vrot.lane.b32.xlu0 %v3142, 64
    %v3146 = vpop.permute.xlu0 %3145
    %v3148 = vmul.f32 %v3141, %v3146
    %3150 = vrot.lane.b32.xlu0 %v3148, 32
    %v3151 = vpop.permute.xlu0 %3150
    %v3153 = vadd.f32 %v3143, %v3151
    %v3154 = vtanh.pop %v3153
    %3156 = vrot.lane.b32.xlu0 %v3154, 64
    %v3157 = vpop.permute.xlu0 %3156
    %v3159 = vmul.f32 %v3141, %v3157
    %3161 = vrot.lane.b32.xlu0 %v3159, 32
    %v3162 = vpop.permute.xlu0 %3161
    %3165 = vrot.lane.b32.xlu0 %v2962, 64
    %v3166 = vpop.permute.xlu0 %3165
    %v3168 = vsel %vm289, %v3162, %v3166
    %v3169 = vpack.c.bf16 %v3168, %v3168
    %v3171 = vsel %vm316, %v3169, 0
    %3173 = vmatprep.subr.bf16.mxu0 0
    %3174 = vmatpush1.bf16.msra.mxu0 0
    %3175 = vmatprep.subr.bf16.mxu0 0
    %3176 = vmatpush1.bf16.msra.mxu0 0
    %3177 = vmatprep.subr.bf16.mxu0 0
    %3178 = vmatpush1.bf16.msra.mxu0 0
    %3179 = vmatprep.subr.bf16.mxu0 0
    %3180 = vmatpush1.bf16.msra.mxu0 0
    %3181 = vmatprep.subr.bf16.mxu0 0
    %3182 = vmatpush1.bf16.msra.mxu0 %v2056
    %3183 = vmatprep.subr.bf16.mxu0 0
    %3184 = vmatpush1.bf16.msra.mxu0 %v2055
    %3185 = vmatprep.subr.bf16.mxu0 0
    %3186 = vmatpush1.bf16.msra.mxu0 %v2054
    %3187 = vmatprep.subr.bf16.mxu0 0
    %3188 = vmatpush1.bf16.msra.mxu0 %v2053
    %3189 = vmatprep.subr.bf16.mxu0 0
    %3190 = vmatpush2.bf16.msra.mxu0 0
    %3191 = vmatprep.subr.bf16.mxu0 0
    %3192 = vmatpush2.bf16.msra.mxu0 0
    %3193 = vmatprep.subr.bf16.mxu0 0
    %3194 = vmatpush2.bf16.msra.mxu0 0
    %3195 = vmatprep.subr.bf16.mxu0 0
    %3196 = vmatpush2.bf16.msra.mxu0 0
    %3197 = vmatprep.subr.bf16.mxu0 0
    %3198 = vmatpush2.bf16.msra.mxu0 0
    %3199 = vmatprep.subr.bf16.mxu0 0
    %3200 = vmatpush2.bf16.msra.mxu0 0
    %3201 = vmatprep.subr.bf16.mxu0 0
    %3202 = vmatpush2.bf16.msra.mxu0 0
    %3203 = vmatprep.subr.bf16.mxu0 0
    %3204 = vmatpush2.bf16.msra.mxu0 0
    %3205 = vmatprep.mubr.bf16.mxu0 0
    %3206 = vmatmul.mubr.bf16.gmra.mxu0 %v3171
    %v3207 = vpop.f32.mrf.mxu0
    %v3208 = vadd.f32 %v211, %v3207
    %v3209 = vpop.f32.mrf.mxu0
    %v3210 = vpop.f32.mrf.mxu0
    %v3211 = vpop.f32.mrf.mxu0
    %3212 = vdwg.mxu0
    %v3213 = vxor.u32 %v3208, 2147483648
    %v3214 = vmul.f32 %v3213, 1.442695
    %v3215 = vpow.pop %v3214
    %v3216 = vadd.f32 %v3215, 1.0
    %v3217 = vrcp.pop %v3216
    %v3218 = vmul.f32 1.0, %v3217
    %v3219 = vtanh.pop %v3208
    %v3220 = vmul.f32 %v3218, %v2956
    %3222 = vrot.lane.b32.xlu0 %v3219, 64
    %v3223 = vpop.permute.xlu0 %3222
    %v3225 = vmul.f32 %v3218, %v3223
    %3227 = vrot.lane.b32.xlu0 %v3225, 32
    %v3228 = vpop.permute.xlu0 %3227
    %v3230 = vadd.f32 %v3220, %v3228
    %v3231 = vtanh.pop %v3230
    %3233 = vrot.lane.b32.xlu0 %v3231, 64
    %v3234 = vpop.permute.xlu0 %3233
    %v3236 = vmul.f32 %v3218, %v3234
    %v3237 = vpack.c.bf16 %v3236, %v3236
    %3239 = vrot.lane.b32.xlu0 %v3237, 32
    %v3240 = vpop.permute.xlu0 %3239
    %v3242 = vsel %vm289, %v3240, 0
    %3244 = vmatprep.subr.bf16.mxu0 0
    %3245 = vmatpush1.bf16.msra.mxu0 0
    %3246 = vmatprep.subr.bf16.mxu0 0
    %3247 = vmatpush1.bf16.msra.mxu0 0
    %3248 = vmatprep.subr.bf16.mxu0 0
    %3249 = vmatpush1.bf16.msra.mxu0 0
    %3250 = vmatprep.subr.bf16.mxu0 0
    %3251 = vmatpush1.bf16.msra.mxu0 0
    %3252 = vmatprep.subr.bf16.mxu0 0
    %3253 = vmatpush1.bf16.msra.mxu0 0
    %3254 = vmatprep.subr.bf16.mxu0 0
    %3255 = vmatpush1.bf16.msra.mxu0 0
    %3256 = vmatprep.subr.bf16.mxu0 0
    %3257 = vmatpush1.bf16.msra.mxu0 %v2141
    %3258 = vmatprep.subr.bf16.mxu0 0
    %3259 = vmatpush1.bf16.msra.mxu0 %v2140
    %3260 = vmatprep.subr.bf16.mxu0 0
    %3261 = vmatpush2.bf16.msra.mxu0 0
    %3262 = vmatprep.subr.bf16.mxu0 0
    %3263 = vmatpush2.bf16.msra.mxu0 0
    %3264 = vmatprep.subr.bf16.mxu0 0
    %3265 = vmatpush2.bf16.msra.mxu0 0
    %3266 = vmatprep.subr.bf16.mxu0 0
    %3267 = vmatpush2.bf16.msra.mxu0 0
    %3268 = vmatprep.subr.bf16.mxu0 0
    %3269 = vmatpush2.bf16.msra.mxu0 0
    %3270 = vmatprep.subr.bf16.mxu0 0
    %3271 = vmatpush2.bf16.msra.mxu0 0
    %3272 = vmatprep.subr.bf16.mxu0 0
    %3273 = vmatpush2.bf16.msra.mxu0 0
    %3274 = vmatprep.subr.bf16.mxu0 0
    %3275 = vmatpush2.bf16.msra.mxu0 0
    %3276 = vmatprep.mubr.bf16.mxu0 0
    %3277 = vmatmul.mubr.bf16.gmra.mxu0 %v3242
    %v3278 = vpop.f32.mrf.mxu0
    %v3279 = vadd.f32 %v226, %v3278
    %v3280 = vpop.f32.mrf.mxu0
    %v3281 = vpop.f32.mrf.mxu0
    %v3282 = vpop.f32.mrf.mxu0
    %3283 = vdwg.mxu0
    %s3284 = scalar_lea.vmem %s15, 40
    %3285 = vst [vmem:[%s3284] sm:$0xff] %v3279
    %v3286 = vsel %vm2189, %v3279, -1e+30
    %3287 = vmax.xlane.f32.xlu0 %v3286
    %v3288 = vpop.xlane.xlu0 %3287
    %vm3289 = vcmp.eq.f32.partialorder %v3286, %v3288
    %v3290 = vsel %vm3289, %v230, 128
    %v3291 = vand.u32 %v3290, 65535
    %v3292 = vshra.s32 %v3290, 16
    %v3293 = vcvt.s32.f32 %v3291
    %v3294 = vcvt.s32.f32 %v3292
    %3295 = vmin.xlane.f32.xlu0 %v3294
    %v3296 = vpop.xlane.xlu0 %3295
    %vm3297 = vcmp.eq.f32.partialorder %v3294, %v3296
    %v3298 = vsel %vm3297, %v3293, inf
    %3299 = vmin.xlane.f32.xlu0 %v3298
    %v3300 = vpop.xlane.xlu0 %3299
    %v3301 = vcvt.f32.s32 %v3300
    %v3302 = vcvt.f32.s32 %v3296
    %v3303 = vshll.u32 %v3302, 16
    %v3304 = vadd.s32 %v3303, %v3301
    %s3305 = sld [smem:[#allocation2 + $0x5]]
    %p3306 = scmp.ne.s32.totalorder %s3305, 0
    %v3307 = vld [vmem:[%s1] sm:$0xff]
    %s3308 = scalar_select %p3306, 1, 0
    %v3309 = vstv %s3308
    %vm3310 = vcmp.eq.s32.totalorder %v3309, 1
    %v3311 = vsel %vm3310, %v3307, %v3304
    %3312 = vset.pattern.permute.xlu0 5
    %3313 = vperm.xlu0 %3312, %v3311
    %v3314 = vpop.permute.xlu0 %3313
    %vm3315 = vcmp.eq.s32.totalorder %v230, %v3314
    %v3316 = vsel %vm3315, 1, 0
    %v3317 = vcvt.s32.f32 %v3316
    %v3318 = vpack.c.bf16 %v3317, %v3317
    %v3320 = vsel %vm245, %v3318, 0
    %3322 = vmatprep.subr.bf16.mxu0 0
    %3323 = vmatpush1.bf16.msra.mxu0 0
    %3324 = vmatprep.subr.bf16.mxu0 0
    %3325 = vmatpush1.bf16.msra.mxu0 0
    %3326 = vmatprep.subr.bf16.mxu0 0
    %3327 = vmatpush1.bf16.msra.mxu0 0
    %3328 = vmatprep.subr.bf16.mxu0 0
    %3329 = vmatpush1.bf16.msra.mxu0 0
    %3330 = vmatprep.subr.bf16.mxu0 0
    %3331 = vmatpush1.bf16.msra.mxu0 0
    %3332 = vmatprep.subr.bf16.mxu0 0
    %3333 = vmatpush1.bf16.msra.mxu0 0
    %3334 = vmatprep.subr.bf16.mxu0 0
    %3335 = vmatpush1.bf16.msra.mxu0 0
    %3336 = vmatprep.subr.bf16.mxu0 0
    %3337 = vmatpush1.bf16.msra.mxu0 %v1886
    %3338 = vmatprep.subr.bf16.mxu0 0
    %3339 = vmatpush2.bf16.msra.mxu0 0
    %3340 = vmatprep.subr.bf16.mxu0 0
    %3341 = vmatpush2.bf16.msra.mxu0 0
    %3342 = vmatprep.subr.bf16.mxu0 0
    %3343 = vmatpush2.bf16.msra.mxu0 0
    %3344 = vmatprep.subr.bf16.mxu0 0
    %3345 = vmatpush2.bf16.msra.mxu0 0
    %3346 = vmatprep.subr.bf16.mxu0 0
    %3347 = vmatpush2.bf16.msra.mxu0 0
    %3348 = vmatprep.subr.bf16.mxu0 0
    %3349 = vmatpush2.bf16.msra.mxu0 0
    %3350 = vmatprep.subr.bf16.mxu0 0
    %3351 = vmatpush2.bf16.msra.mxu0 0
    %3352 = vmatprep.subr.bf16.mxu0 0
    %3353 = vmatpush2.bf16.msra.mxu0 0
    %3354 = vmatprep.mubr.bf16.mxu0 0
    %3355 = vmatmul.mubr.bf16.gmra.mxu0 %v3320
    %v3356 = vpop.f32.mrf.mxu0
    %v3357 = vadd.f32 0.0, %v3356
    %v3358 = vpop.f32.mrf.mxu0
    %v3359 = vpop.f32.mrf.mxu0
    %v3360 = vpop.f32.mrf.mxu0
    %3361 = vdwg.mxu0
    %3362 = vrot.lane.b32.xlu0 %v3159, 64
    %v3363 = vpop.permute.xlu0 %3362
    %v3365 = vsel %vm289, %v3357, %v3363
    %v3366 = vpack.c.bf16 %v3365, %v3365
    %v3368 = vsel %vm316, %v3366, 0
    %3370 = vmatprep.subr.bf16.mxu0 0
    %3371 = vmatpush1.bf16.msra.mxu0 0
    %3372 = vmatprep.subr.bf16.mxu0 0
    %3373 = vmatpush1.bf16.msra.mxu0 0
    %3374 = vmatprep.subr.bf16.mxu0 0
    %3375 = vmatpush1.bf16.msra.mxu0 0
    %3376 = vmatprep.subr.bf16.mxu0 0
    %3377 = vmatpush1.bf16.msra.mxu0 0
    %3378 = vmatprep.subr.bf16.mxu0 0
    %3379 = vmatpush1.bf16.msra.mxu0 %v1955
    %3380 = vmatprep.subr.bf16.mxu0 0
    %3381 = vmatpush1.bf16.msra.mxu0 %v1954
    %3382 = vmatprep.subr.bf16.mxu0 0
    %3383 = vmatpush1.bf16.msra.mxu0 %v1953
    %3384 = vmatprep.subr.bf16.mxu0 0
    %3385 = vmatpush1.bf16.msra.mxu0 %v1952
    %3386 = vmatprep.subr.bf16.mxu0 0
    %3387 = vmatpush2.bf16.msra.mxu0 0
    %3388 = vmatprep.subr.bf16.mxu0 0
    %3389 = vmatpush2.bf16.msra.mxu0 0
    %3390 = vmatprep.subr.bf16.mxu0 0
    %3391 = vmatpush2.bf16.msra.mxu0 0
    %3392 = vmatprep.subr.bf16.mxu0 0
    %3393 = vmatpush2.bf16.msra.mxu0 0
    %3394 = vmatprep.subr.bf16.mxu0 0
    %3395 = vmatpush2.bf16.msra.mxu0 0
    %3396 = vmatprep.subr.bf16.mxu0 0
    %3397 = vmatpush2.bf16.msra.mxu0 0
    %3398 = vmatprep.subr.bf16.mxu0 0
    %3399 = vmatpush2.bf16.msra.mxu0 0
    %3400 = vmatprep.subr.bf16.mxu0 0
    %3401 = vmatpush2.bf16.msra.mxu0 0
    %3402 = vmatprep.mubr.bf16.mxu0 0
    %3403 = vmatmul.mubr.bf16.gmra.mxu0 %v3368
    %v3404 = vpop.f32.mrf.mxu0
    %v3405 = vadd.f32 %v204, %v3404
    %v3406 = vpop.f32.mrf.mxu0
    %v3407 = vpop.f32.mrf.mxu0
    %v3408 = vpop.f32.mrf.mxu0
    %3409 = vdwg.mxu0
    %v3410 = vxor.u32 %v3405, 2147483648
    %v3411 = vmul.f32 %v3410, 1.442695
    %v3412 = vpow.pop %v3411
    %v3413 = vadd.f32 %v3412, 1.0
    %v3414 = vrcp.pop %v3413
    %v3415 = vmul.f32 1.0, %v3414
    %v3416 = vtanh.pop %v3405
    %v3417 = vmul.f32 %v3415, %v3153
    %3419 = vrot.lane.b32.xlu0 %v3416, 64
    %v3420 = vpop.permute.xlu0 %3419
    %v3422 = vmul.f32 %v3415, %v3420
    %3424 = vrot.lane.b32.xlu0 %v3422, 32
    %v3425 = vpop.permute.xlu0 %3424
    %v3427 = vadd.f32 %v3417, %v3425
    %v3428 = vtanh.pop %v3427
    %3430 = vrot.lane.b32.xlu0 %v3428, 64
    %v3431 = vpop.permute.xlu0 %3430
    %v3433 = vmul.f32 %v3415, %v3431
    %3435 = vrot.lane.b32.xlu0 %v3433, 32
    %v3436 = vpop.permute.xlu0 %3435
    %3439 = vrot.lane.b32.xlu0 %v3236, 64
    %v3440 = vpop.permute.xlu0 %3439
    %v3442 = vsel %vm289, %v3436, %v3440
    %v3443 = vpack.c.bf16 %v3442, %v3442
    %v3445 = vsel %vm316, %v3443, 0
    %3447 = vmatprep.subr.bf16.mxu0 0
    %3448 = vmatpush1.bf16.msra.mxu0 0
    %3449 = vmatprep.subr.bf16.mxu0 0
    %3450 = vmatpush1.bf16.msra.mxu0 0
    %3451 = vmatprep.subr.bf16.mxu0 0
    %3452 = vmatpush1.bf16.msra.mxu0 0
    %3453 = vmatprep.subr.bf16.mxu0 0
    %3454 = vmatpush1.bf16.msra.mxu0 0
    %3455 = vmatprep.subr.bf16.mxu0 0
    %3456 = vmatpush1.bf16.msra.mxu0 %v2056
    %3457 = vmatprep.subr.bf16.mxu0 0
    %3458 = vmatpush1.bf16.msra.mxu0 %v2055
    %3459 = vmatprep.subr.bf16.mxu0 0
    %3460 = vmatpush1.bf16.msra.mxu0 %v2054
    %3461 = vmatprep.subr.bf16.mxu0 0
    %3462 = vmatpush1.bf16.msra.mxu0 %v2053
    %3463 = vmatprep.subr.bf16.mxu0 0
    %3464 = vmatpush2.bf16.msra.mxu0 0
    %3465 = vmatprep.subr.bf16.mxu0 0
    %3466 = vmatpush2.bf16.msra.mxu0 0
    %3467 = vmatprep.subr.bf16.mxu0 0
    %3468 = vmatpush2.bf16.msra.mxu0 0
    %3469 = vmatprep.subr.bf16.mxu0 0
    %3470 = vmatpush2.bf16.msra.mxu0 0
    %3471 = vmatprep.subr.bf16.mxu0 0
    %3472 = vmatpush2.bf16.msra.mxu0 0
    %3473 = vmatprep.subr.bf16.mxu0 0
    %3474 = vmatpush2.bf16.msra.mxu0 0
    %3475 = vmatprep.subr.bf16.mxu0 0
    %3476 = vmatpush2.bf16.msra.mxu0 0
    %3477 = vmatprep.subr.bf16.mxu0 0
    %3478 = vmatpush2.bf16.msra.mxu0 0
    %3479 = vmatprep.mubr.bf16.mxu0 0
    %3480 = vmatmul.mubr.bf16.gmra.mxu0 %v3445
    %v3481 = vpop.f32.mrf.mxu0
    %v3482 = vadd.f32 %v211, %v3481
    %v3483 = vpop.f32.mrf.mxu0
    %v3484 = vpop.f32.mrf.mxu0
    %v3485 = vpop.f32.mrf.mxu0
    %3486 = vdwg.mxu0
    %v3487 = vxor.u32 %v3482, 2147483648
    %v3488 = vmul.f32 %v3487, 1.442695
    %v3489 = vpow.pop %v3488
    %v3490 = vadd.f32 %v3489, 1.0
    %v3491 = vrcp.pop %v3490
    %v3492 = vmul.f32 1.0, %v3491
    %v3493 = vtanh.pop %v3482
    %v3494 = vmul.f32 %v3492, %v3230
    %3496 = vrot.lane.b32.xlu0 %v3493, 64
    %v3497 = vpop.permute.xlu0 %3496
    %v3499 = vmul.f32 %v3492, %v3497
    %3501 = vrot.lane.b32.xlu0 %v3499, 32
    %v3502 = vpop.permute.xlu0 %3501
    %v3504 = vadd.f32 %v3494, %v3502
    %v3505 = vtanh.pop %v3504
    %3507 = vrot.lane.b32.xlu0 %v3505, 64
    %v3508 = vpop.permute.xlu0 %3507
    %v3510 = vmul.f32 %v3492, %v3508
    %v3511 = vpack.c.bf16 %v3510, %v3510
    %3513 = vrot.lane.b32.xlu0 %v3511, 32
    %v3514 = vpop.permute.xlu0 %3513
    %v3516 = vsel %vm289, %v3514, 0
    %3518 = vmatprep.subr.bf16.mxu0 0
    %3519 = vmatpush1.bf16.msra.mxu0 0
    %3520 = vmatprep.subr.bf16.mxu0 0
    %3521 = vmatpush1.bf16.msra.mxu0 0
    %3522 = vmatprep.subr.bf16.mxu0 0
    %3523 = vmatpush1.bf16.msra.mxu0 0
    %3524 = vmatprep.subr.bf16.mxu0 0
    %3525 = vmatpush1.bf16.msra.mxu0 0
    %3526 = vmatprep.subr.bf16.mxu0 0
    %3527 = vmatpush1.bf16.msra.mxu0 0
    %3528 = vmatprep.subr.bf16.mxu0 0
    %3529 = vmatpush1.bf16.msra.mxu0 0
    %3530 = vmatprep.subr.bf16.mxu0 0
    %3531 = vmatpush1.bf16.msra.mxu0 %v2141
    %3532 = vmatprep.subr.bf16.mxu0 0
    %3533 = vmatpush1.bf16.msra.mxu0 %v2140
    %3534 = vmatprep.subr.bf16.mxu0 0
    %3535 = vmatpush2.bf16.msra.mxu0 0
    %3536 = vmatprep.subr.bf16.mxu0 0
    %3537 = vmatpush2.bf16.msra.mxu0 0
    %3538 = vmatprep.subr.bf16.mxu0 0
    %3539 = vmatpush2.bf16.msra.mxu0 0
    %3540 = vmatprep.subr.bf16.mxu0 0
    %3541 = vmatpush2.bf16.msra.mxu0 0
    %3542 = vmatprep.subr.bf16.mxu0 0
    %3543 = vmatpush2.bf16.msra.mxu0 0
    %3544 = vmatprep.subr.bf16.mxu0 0
    %3545 = vmatpush2.bf16.msra.mxu0 0
    %3546 = vmatprep.subr.bf16.mxu0 0
    %3547 = vmatpush2.bf16.msra.mxu0 0
    %3548 = vmatprep.subr.bf16.mxu0 0
    %3549 = vmatpush2.bf16.msra.mxu0 0
    %3550 = vmatprep.mubr.bf16.mxu0 0
    %3551 = vmatmul.mubr.bf16.gmra.mxu0 %v3516
    %v3552 = vpop.f32.mrf.mxu0
    %v3553 = vadd.f32 %v226, %v3552
    %v3554 = vpop.f32.mrf.mxu0
    %v3555 = vpop.f32.mrf.mxu0
    %v3556 = vpop.f32.mrf.mxu0
    %3557 = vdwg.mxu0
    %s3558 = scalar_lea.vmem %s15, 48
    %3559 = vst [vmem:[%s3558] sm:$0xff] %v3553
    %v3560 = vsel %vm2189, %v3553, -1e+30
    %3561 = vmax.xlane.f32.xlu0 %v3560
    %v3562 = vpop.xlane.xlu0 %3561
    %vm3563 = vcmp.eq.f32.partialorder %v3560, %v3562
    %v3564 = vsel %vm3563, %v230, 128
    %v3565 = vand.u32 %v3564, 65535
    %v3566 = vshra.s32 %v3564, 16
    %v3567 = vcvt.s32.f32 %v3565
    %v3568 = vcvt.s32.f32 %v3566
    %3569 = vmin.xlane.f32.xlu0 %v3568
    %v3570 = vpop.xlane.xlu0 %3569
    %vm3571 = vcmp.eq.f32.partialorder %v3568, %v3570
    %v3572 = vsel %vm3571, %v3567, inf
    %3573 = vmin.xlane.f32.xlu0 %v3572
    %v3574 = vpop.xlane.xlu0 %3573
    %v3575 = vcvt.f32.s32 %v3574
    %v3576 = vcvt.f32.s32 %v3570
    %v3577 = vshll.u32 %v3576, 16
    %v3578 = vadd.s32 %v3577, %v3575
    %s3579 = sld [smem:[#allocation2 + $0x6]]
    %p3580 = scmp.ne.s32.totalorder %s3579, 0
    %v3581 = vld [vmem:[%s1] sm:$0xff]
    %s3582 = scalar_select %p3580, 1, 0
    %v3583 = vstv %s3582
    %vm3584 = vcmp.eq.s32.totalorder %v3583, 1
    %v3585 = vsel %vm3584, %v3581, %v3578
    %3586 = vset.pattern.permute.xlu0 6
    %3587 = vperm.xlu0 %3586, %v3585
    %v3588 = vpop.permute.xlu0 %3587
    %vm3589 = vcmp.eq.s32.totalorder %v230, %v3588
    %v3590 = vsel %vm3589, 1, 0
    %v3591 = vcvt.s32.f32 %v3590
    %v3592 = vpack.c.bf16 %v3591, %v3591
    %v3594 = vsel %vm245, %v3592, 0
    %3596 = vmatprep.subr.bf16.mxu0 0
    %3597 = vmatpush1.bf16.msra.mxu0 0
    %3598 = vmatprep.subr.bf16.mxu0 0
    %3599 = vmatpush1.bf16.msra.mxu0 0
    %3600 = vmatprep.subr.bf16.mxu0 0
    %3601 = vmatpush1.bf16.msra.mxu0 0
    %3602 = vmatprep.subr.bf16.mxu0 0
    %3603 = vmatpush1.bf16.msra.mxu0 0
    %3604 = vmatprep.subr.bf16.mxu0 0
    %3605 = vmatpush1.bf16.msra.mxu0 0
    %3606 = vmatprep.subr.bf16.mxu0 0
    %3607 = vmatpush1.bf16.msra.mxu0 0
    %3608 = vmatprep.subr.bf16.mxu0 0
    %3609 = vmatpush1.bf16.msra.mxu0 0
    %3610 = vmatprep.subr.bf16.mxu0 0
    %3611 = vmatpush1.bf16.msra.mxu0 %v1886
    %3612 = vmatprep.subr.bf16.mxu0 0
    %3613 = vmatpush2.bf16.msra.mxu0 0
    %3614 = vmatprep.subr.bf16.mxu0 0
    %3615 = vmatpush2.bf16.msra.mxu0 0
    %3616 = vmatprep.subr.bf16.mxu0 0
    %3617 = vmatpush2.bf16.msra.mxu0 0
    %3618 = vmatprep.subr.bf16.mxu0 0
    %3619 = vmatpush2.bf16.msra.mxu0 0
    %3620 = vmatprep.subr.bf16.mxu0 0
    %3621 = vmatpush2.bf16.msra.mxu0 0
    %3622 = vmatprep.subr.bf16.mxu0 0
    %3623 = vmatpush2.bf16.msra.mxu0 0
    %3624 = vmatprep.subr.bf16.mxu0 0
    %3625 = vmatpush2.bf16.msra.mxu0 0
    %3626 = vmatprep.subr.bf16.mxu0 0
    %3627 = vmatpush2.bf16.msra.mxu0 0
    %3628 = vmatprep.mubr.bf16.mxu0 0
    %3629 = vmatmul.mubr.bf16.gmra.mxu0 %v3594
    %v3630 = vpop.f32.mrf.mxu0
    %v3631 = vadd.f32 0.0, %v3630
    %v3632 = vpop.f32.mrf.mxu0
    %v3633 = vpop.f32.mrf.mxu0
    %v3634 = vpop.f32.mrf.mxu0
    %3635 = vdwg.mxu0
    %3636 = vrot.lane.b32.xlu0 %v3433, 64
    %v3637 = vpop.permute.xlu0 %3636
    %v3639 = vsel %vm289, %v3631, %v3637
    %v3640 = vpack.c.bf16 %v3639, %v3639
    %v3642 = vsel %vm316, %v3640, 0
    %3644 = vmatprep.subr.bf16.mxu0 0
    %3645 = vmatpush1.bf16.msra.mxu0 0
    %3646 = vmatprep.subr.bf16.mxu0 0
    %3647 = vmatpush1.bf16.msra.mxu0 0
    %3648 = vmatprep.subr.bf16.mxu0 0
    %3649 = vmatpush1.bf16.msra.mxu0 0
    %3650 = vmatprep.subr.bf16.mxu0 0
    %3651 = vmatpush1.bf16.msra.mxu0 0
    %3652 = vmatprep.subr.bf16.mxu0 0
    %3653 = vmatpush1.bf16.msra.mxu0 %v1955
    %3654 = vmatprep.subr.bf16.mxu0 0
    %3655 = vmatpush1.bf16.msra.mxu0 %v1954
    %3656 = vmatprep.subr.bf16.mxu0 0
    %3657 = vmatpush1.bf16.msra.mxu0 %v1953
    %3658 = vmatprep.subr.bf16.mxu0 0
    %3659 = vmatpush1.bf16.msra.mxu0 %v1952
    %3660 = vmatprep.subr.bf16.mxu0 0
    %3661 = vmatpush2.bf16.msra.mxu0 0
    %3662 = vmatprep.subr.bf16.mxu0 0
    %3663 = vmatpush2.bf16.msra.mxu0 0
    %3664 = vmatprep.subr.bf16.mxu0 0
    %3665 = vmatpush2.bf16.msra.mxu0 0
    %3666 = vmatprep.subr.bf16.mxu0 0
    %3667 = vmatpush2.bf16.msra.mxu0 0
    %3668 = vmatprep.subr.bf16.mxu0 0
    %3669 = vmatpush2.bf16.msra.mxu0 0
    %3670 = vmatprep.subr.bf16.mxu0 0
    %3671 = vmatpush2.bf16.msra.mxu0 0
    %3672 = vmatprep.subr.bf16.mxu0 0
    %3673 = vmatpush2.bf16.msra.mxu0 0
    %3674 = vmatprep.subr.bf16.mxu0 0
    %3675 = vmatpush2.bf16.msra.mxu0 0
    %3676 = vmatprep.mubr.bf16.mxu0 0
    %3677 = vmatmul.mubr.bf16.gmra.mxu0 %v3642
    %v3678 = vpop.f32.mrf.mxu0
    %v3679 = vadd.f32 %v204, %v3678
    %v3680 = vpop.f32.mrf.mxu0
    %v3681 = vpop.f32.mrf.mxu0
    %v3682 = vpop.f32.mrf.mxu0
    %3683 = vdwg.mxu0
    %v3684 = vxor.u32 %v3679, 2147483648
    %v3685 = vmul.f32 %v3684, 1.442695
    %v3686 = vpow.pop %v3685
    %v3687 = vadd.f32 %v3686, 1.0
    %v3688 = vrcp.pop %v3687
    %v3689 = vmul.f32 1.0, %v3688
    %v3690 = vtanh.pop %v3679
    %v3691 = vmul.f32 %v3689, %v3427
    %3693 = vrot.lane.b32.xlu0 %v3690, 64
    %v3694 = vpop.permute.xlu0 %3693
    %v3696 = vmul.f32 %v3689, %v3694
    %3698 = vrot.lane.b32.xlu0 %v3696, 32
    %v3699 = vpop.permute.xlu0 %3698
    %v3701 = vadd.f32 %v3691, %v3699
    %v3702 = vtanh.pop %v3701
    %3704 = vrot.lane.b32.xlu0 %v3702, 64
    %v3705 = vpop.permute.xlu0 %3704
    %v3707 = vmul.f32 %v3689, %v3705
    %3709 = vrot.lane.b32.xlu0 %v3707, 32
    %v3710 = vpop.permute.xlu0 %3709
    %3713 = vrot.lane.b32.xlu0 %v3510, 64
    %v3714 = vpop.permute.xlu0 %3713
    %v3716 = vsel %vm289, %v3710, %v3714
    %v3717 = vpack.c.bf16 %v3716, %v3716
    %v3719 = vsel %vm316, %v3717, 0
    %3721 = vmatprep.subr.bf16.mxu0 0
    %3722 = vmatpush1.bf16.msra.mxu0 0
    %3723 = vmatprep.subr.bf16.mxu0 0
    %3724 = vmatpush1.bf16.msra.mxu0 0
    %3725 = vmatprep.subr.bf16.mxu0 0
    %3726 = vmatpush1.bf16.msra.mxu0 0
    %3727 = vmatprep.subr.bf16.mxu0 0
    %3728 = vmatpush1.bf16.msra.mxu0 0
    %3729 = vmatprep.subr.bf16.mxu0 0
    %3730 = vmatpush1.bf16.msra.mxu0 %v2056
    %3731 = vmatprep.subr.bf16.mxu0 0
    %3732 = vmatpush1.bf16.msra.mxu0 %v2055
    %3733 = vmatprep.subr.bf16.mxu0 0
    %3734 = vmatpush1.bf16.msra.mxu0 %v2054
    %3735 = vmatprep.subr.bf16.mxu0 0
    %3736 = vmatpush1.bf16.msra.mxu0 %v2053
    %3737 = vmatprep.subr.bf16.mxu0 0
    %3738 = vmatpush2.bf16.msra.mxu0 0
    %3739 = vmatprep.subr.bf16.mxu0 0
    %3740 = vmatpush2.bf16.msra.mxu0 0
    %3741 = vmatprep.subr.bf16.mxu0 0
    %3742 = vmatpush2.bf16.msra.mxu0 0
    %3743 = vmatprep.subr.bf16.mxu0 0
    %3744 = vmatpush2.bf16.msra.mxu0 0
    %3745 = vmatprep.subr.bf16.mxu0 0
    %3746 = vmatpush2.bf16.msra.mxu0 0
    %3747 = vmatprep.subr.bf16.mxu0 0
    %3748 = vmatpush2.bf16.msra.mxu0 0
    %3749 = vmatprep.subr.bf16.mxu0 0
    %3750 = vmatpush2.bf16.msra.mxu0 0
    %3751 = vmatprep.subr.bf16.mxu0 0
    %3752 = vmatpush2.bf16.msra.mxu0 0
    %3753 = vmatprep.mubr.bf16.mxu0 0
    %3754 = vmatmul.mubr.bf16.gmra.mxu0 %v3719
    %v3755 = vpop.f32.mrf.mxu0
    %v3756 = vadd.f32 %v211, %v3755
    %v3757 = vpop.f32.mrf.mxu0
    %v3758 = vpop.f32.mrf.mxu0
    %v3759 = vpop.f32.mrf.mxu0
    %3760 = vdwg.mxu0
    %v3761 = vxor.u32 %v3756, 2147483648
    %v3762 = vmul.f32 %v3761, 1.442695
    %v3763 = vpow.pop %v3762
    %v3764 = vadd.f32 %v3763, 1.0
    %v3765 = vrcp.pop %v3764
    %v3766 = vmul.f32 1.0, %v3765
    %v3767 = vtanh.pop %v3756
    %v3768 = vmul.f32 %v3766, %v3504
    %3770 = vrot.lane.b32.xlu0 %v3767, 64
    %v3771 = vpop.permute.xlu0 %3770
    %v3773 = vmul.f32 %v3766, %v3771
    %3775 = vrot.lane.b32.xlu0 %v3773, 32
    %v3776 = vpop.permute.xlu0 %3775
    %v3778 = vadd.f32 %v3768, %v3776
    %v3779 = vtanh.pop %v3778
    %3781 = vrot.lane.b32.xlu0 %v3779, 64
    %v3782 = vpop.permute.xlu0 %3781
    %v3784 = vmul.f32 %v3766, %v3782
    %v3785 = vpack.c.bf16 %v3784, %v3784
    %3787 = vrot.lane.b32.xlu0 %v3785, 32
    %v3788 = vpop.permute.xlu0 %3787
    %v3790 = vsel %vm289, %v3788, 0
    %3792 = vmatprep.subr.bf16.mxu0 0
    %3793 = vmatpush1.bf16.msra.mxu0 0
    %3794 = vmatprep.subr.bf16.mxu0 0
    %3795 = vmatpush1.bf16.msra.mxu0 0
    %3796 = vmatprep.subr.bf16.mxu0 0
    %3797 = vmatpush1.bf16.msra.mxu0 0
    %3798 = vmatprep.subr.bf16.mxu0 0
    %3799 = vmatpush1.bf16.msra.mxu0 0
    %3800 = vmatprep.subr.bf16.mxu0 0
    %3801 = vmatpush1.bf16.msra.mxu0 0
    %3802 = vmatprep.subr.bf16.mxu0 0
    %3803 = vmatpush1.bf16.msra.mxu0 0
    %3804 = vmatprep.subr.bf16.mxu0 0
    %3805 = vmatpush1.bf16.msra.mxu0 %v2141
    %3806 = vmatprep.subr.bf16.mxu0 0
    %3807 = vmatpush1.bf16.msra.mxu0 %v2140
    %3808 = vmatprep.subr.bf16.mxu0 0
    %3809 = vmatpush2.bf16.msra.mxu0 0
    %3810 = vmatprep.subr.bf16.mxu0 0
    %3811 = vmatpush2.bf16.msra.mxu0 0
    %3812 = vmatprep.subr.bf16.mxu0 0
    %3813 = vmatpush2.bf16.msra.mxu0 0
    %3814 = vmatprep.subr.bf16.mxu0 0
    %3815 = vmatpush2.bf16.msra.mxu0 0
    %3816 = vmatprep.subr.bf16.mxu0 0
    %3817 = vmatpush2.bf16.msra.mxu0 0
    %3818 = vmatprep.subr.bf16.mxu0 0
    %3819 = vmatpush2.bf16.msra.mxu0 0
    %3820 = vmatprep.subr.bf16.mxu0 0
    %3821 = vmatpush2.bf16.msra.mxu0 0
    %3822 = vmatprep.subr.bf16.mxu0 0
    %3823 = vmatpush2.bf16.msra.mxu0 0
    %3824 = vmatprep.mubr.bf16.mxu0 0
    %3825 = vmatmul.mubr.bf16.gmra.mxu0 %v3790
    %v3826 = vpop.f32.mrf.mxu0
    %v3827 = vadd.f32 %v226, %v3826
    %v3828 = vpop.f32.mrf.mxu0
    %v3829 = vpop.f32.mrf.mxu0
    %v3830 = vpop.f32.mrf.mxu0
    %3831 = vdwg.mxu0
    %s3832 = scalar_lea.vmem %s15, 56
    %3833 = vst [vmem:[%s3832] sm:$0xff] %v3827
    // Predicated region
    $region94: #{_forward_jit.1} parent=1 // pred_check
      _
    $region95: #{_forward_jit.1} parent=1 // pred_check_branch
      %3835 = sbr.rel (0) target = $region97
    $region96: #{_forward_jit.1} parent=1 // pred_region
      _
    $region97: #{_forward_jit.1} parent=1 // pred_fallthru
      _
    // Predicated region
    $region98: #{_forward_jit.1} parent=1 // pred_check
      _
    $region99: #{_forward_jit.1} parent=1 // pred_check_branch
      %3837 = sbr.rel (0) target = $region101
    $region100: #{_forward_jit.1} parent=1 // pred_region
      _
    $region101: #{_forward_jit.1} parent=1 // pred_fallthru
      _
    %3838 = vsyncpa [#allocation3], 1
    %3839 = vsyncpa [#allocation7], 1
    %3840 = vsyncpa [#allocation10], 1
    %3841 = vsyncpa [#allocation13], 1
    %3842 = vsyncpa [#allocation4], 1

</llo_original>
